<compile_context>
chip_gen: v6e
topology: v6e:2x2x1
jax: 0.10.0
libtpu: 0.0.40
codegen_flags: <defaults>
</compile_context>

<pallas_src>
import math

import jax
import jax.numpy as jnp
from jax import lax
from jax.experimental import pallas as pl
from jax.experimental.pallas import tpu as pltpu

INPUT_SIZE = 256
OUTPUT_SIZE = 256


def net_seq_kernel(x_ref, state_in_ref,
                   we_ref, be_ref,
                   wrnn_ref, brnn_ref,
                   wd1_ref, bd1_ref, wd2_ref, bd2_ref,
                   y_ref, state_out_ref,
                   z0_scr, h_scr, s_scr):
    Tc, B, _ = x_ref.shape          # this T-chunk
    L, _, H = state_in_ref.shape
    t_blk = pl.program_id(0)

    # ---- carried recurrent state lives in VMEM scratch across the whole grid ----
    @pl.when(t_blk == 0)
    def _():
        s_scr[...] = state_in_ref[...]

    # ---- l_embed + layer-0 x-side projection, batched across the chunk ----
    # One (Tc*B, 256)@(256,H) and one (Tc*B, H)@(H, 2H) MXU matmul; this moves
    # layer-0's x-side work (and its bias) off the latency-bound per-step path.
    x_flat = x_ref[...].reshape(Tc * B, INPUT_SIZE).astype(jnp.bfloat16)
    emb = (jnp.dot(x_flat, we_ref[...], preferred_element_type=jnp.float32)
           + be_ref[...])
    w0 = wrnn_ref[0]                                        # (2H, 2H) bf16
    z0 = (jnp.dot(emb.astype(jnp.bfloat16), w0[:H],
                  preferred_element_type=jnp.float32)
          + brnn_ref[0])                                    # (Tc*B, 2H) f32
    z0_scr[...] = z0.reshape(Tc, B, 2 * H)

    # ---- hoist per-layer weight slices / bias broadcasts out of the time loop ----
    w_s = []          # state-side weights, (H, 2H) bf16, all layers
    w_x = [None]      # input-side weights, layers >= 1 only (layer 0 precomputed)
    b_b = [None]      # pre-broadcast biases, layers >= 1 only
    for l in range(L):
        wl = w0 if l == 0 else wrnn_ref[l]
        w_s.append(wl[H:])
        if l > 0:
            w_x.append(wl[:H])
            b_b.append(jnp.broadcast_to(brnn_ref[l], (B, 2 * H)))

    def step(t, carry):
        # layer 0: x-side pre-activation (incl. bias) already in z0_scr
        s = s_scr[0]
        pre = z0_scr[t] + jnp.dot(s.astype(jnp.bfloat16), w_s[0],
                                  preferred_element_type=jnp.float32)
        g = jax.nn.sigmoid(pre[:, :H])
        c = jnp.tanh(pre[:, H:])
        x = c + g * (s - c)                                 # == g*s + (1-g)*c
        s_scr[0] = x
        for l in range(1, L):                               # static unroll over layers
            s = s_scr[l]
            pre = (jnp.dot(x.astype(jnp.bfloat16), w_x[l],
                           preferred_element_type=jnp.float32)
                   + jnp.dot(s.astype(jnp.bfloat16), w_s[l],
                             preferred_element_type=jnp.float32)
                   + b_b[l])
            g = jax.nn.sigmoid(pre[:, :H])
            c = jnp.tanh(pre[:, H:])
            x = c + g * (s - c)
            s_scr[l] = x
        h_scr[t] = x.astype(jnp.bfloat16)                   # decode feed (bf16)
        return carry

    # Partial unroll keyed on live-temp bytes (pre-activations etc.), not just T,
    # so large (B, H) configs do not blow the 64-vreg file.
    per_step_bytes = max(1, B * 2 * H * 4 * max(1, L))
    unroll = int(max(1, min(Tc, (128 * 1024) // per_step_bytes)))
    lax.fori_loop(0, Tc, step, 0, unroll=unroll)

    # ---- last chunk: write the carried state back ----
    @pl.when(t_blk == pl.num_programs(0) - 1)
    def _():
        state_out_ref[...] = s_scr[...]

    # ---- l_decode (Dense depth-2), batched across the chunk ----
    h_flat = h_scr[...].reshape(Tc * B, H)                  # bf16
    h1 = jnp.tanh(jnp.dot(h_flat, wd1_ref[...],
                          preferred_element_type=jnp.float32) + bd1_ref[...])
    y = (jnp.dot(h1.astype(jnp.bfloat16), wd2_ref[...],
                 preferred_element_type=jnp.float32) + bd2_ref[...])
    y_ref[...] = y.reshape(Tc, B, OUTPUT_SIZE)


def _pick_t_chunk(T, B, H, budget_bytes=4 << 20):
    """Largest divisor of T whose per-chunk activation footprint fits a small budget."""
    per_step = B * (2 * H * 4 + H * 2 + INPUT_SIZE * 4 + OUTPUT_SIZE * 4)
    cap = max(1, budget_bytes // max(1, per_step))
    for d in range(min(T, cap), 0, -1):
        if T % d == 0:
            return d
    return 1


def net_forward_seq(xs, state, params, *, t_chunk=None):
    """Run T forward steps of Net (state carried between steps).

    xs:    (T, B, 256)  (f32 or bf16; bf16 input halves the xs DMA)
    state: (L, B, H)    f32
    Returns (ys (T, B, 256) f32, new_state (L, B, H) f32).
    Best performance when B % 8 == 0 and H % 128 == 0 (lane/sublane dense).
    """
    T, B, _ = xs.shape
    L, _, H = state.shape
    if t_chunk is None:
        t_chunk = _pick_t_chunk(T, B, H)
    assert T % t_chunk == 0, "t_chunk must divide T"
    grid = (T // t_chunk,)

    const3 = lambda t: (0, 0, 0)
    const2 = lambda t: (0, 0)

    in_specs = [
        pl.BlockSpec((t_chunk, B, INPUT_SIZE), lambda t: (t, 0, 0)),  # xs (streamed)
        pl.BlockSpec((L, B, H), const3),                              # state_in (resident)
        pl.BlockSpec((INPUT_SIZE, H), const2),                        # we
        pl.BlockSpec((1, H), const2),                                 # be
        pl.BlockSpec((L, 2 * H, 2 * H), const3),                      # fused gate weights
        pl.BlockSpec((L, 1, 2 * H), const3),                          # fused gate biases
        pl.BlockSpec((H, H), const2),                                 # wd1
        pl.BlockSpec((1, H), const2),                                 # bd1
        pl.BlockSpec((H, OUTPUT_SIZE), const2),                       # wd2
        pl.BlockSpec((1, OUTPUT_SIZE), const2),                       # bd2
    ]
    out_specs = (
        pl.BlockSpec((t_chunk, B, OUTPUT_SIZE), lambda t: (t, 0, 0)),  # y (streamed)
        pl.BlockSpec((L, B, H), const3),                               # state_out (resident)
    )
    out_shape = (jax.ShapeDtypeStruct((T, B, OUTPUT_SIZE), jnp.float32),
                 jax.ShapeDtypeStruct((L, B, H), jnp.float32))

    args = (xs, state,
            params["we"], params["be"],
            params["w_rnn"], params["b_rnn"],
            params["wd1"], params["bd1"], params["wd2"], params["bd2"])

    return pl.pallas_call(
        net_seq_kernel,
        out_shape=out_shape,
        grid_spec=pltpu.PrefetchScalarGridSpec(
            num_scalar_prefetch=0,
            grid=grid,
            in_specs=in_specs,
            out_specs=out_specs,
            scratch_shapes=[
                pltpu.VMEM((t_chunk, B, 2 * H), jnp.float32),   # layer-0 x-side pre-act
                pltpu.VMEM((t_chunk, B, H), jnp.bfloat16),      # decode feed
                pltpu.VMEM((L, B, H), jnp.float32),             # carried recurrent state
            ],
        ),
        input_output_aliases={1: 1},              # state updated in place
        # TODO(synk): on v7x a second 'parallel' grid axis over B-halves (per-core
        #             B >= 16) would use both TensorCores; omitted for portability.
        compiler_params=pltpu.CompilerParams(
            dimension_semantics=("arbitrary",),
            vmem_limit_bytes=32 * 1024 * 1024),
    )(*args)


def net_forward(x0, state, params):
    """Single step, exactly matching Net.forward: x0 (B, 256) -> y (B, 256)."""
    ys, new_state = net_forward_seq(x0[None], state, params, t_chunk=1)
    return ys[0], new_state


def init_params(key, hidden_size, num_layers, weight_dtype=jnp.bfloat16):
    """PyTorch-Linear-style uniform init, packed for the fused-gate kernel."""
    H = hidden_size

    def linear(k, fan_in, fan_out):
        kw, kb = jax.random.split(k)
        bound = 1.0 / math.sqrt(fan_in)
        w = jax.random.uniform(kw, (fan_in, fan_out), jnp.float32, -bound, bound)
        b = jax.random.uniform(kb, (1, fan_out), jnp.float32, -bound, bound)
        return w, b

    keys = jax.random.split(key, 3 + 4 * num_layers)
    we, be = linear(keys[0], INPUT_SIZE, H)
    wd1, bd1 = linear(keys[1], H, H)
    wd2, bd2 = linear(keys[2], H, OUTPUT_SIZE)

    w_rnn, b_rnn = [], []
    for l in range(num_layers):
        k0, k1, k2, k3 = keys[3 + 4 * l: 7 + 4 * l]
        w_gx, b_gx = linear(k0, H, H)
        w_gs, b_gs = linear(k1, H, H)
        w_cx, b_cx = linear(k2, H, H)
        w_cs, b_cs = linear(k3, H, H)
        # rows: [x ; s], cols: [g | c]
        w_x = jnp.concatenate([w_gx, w_cx], axis=1)             # (H, 2H)
        w_s = jnp.concatenate([w_gs, w_cs], axis=1)             # (H, 2H)
        w_rnn.append(jnp.concatenate([w_x, w_s], axis=0))       # (2H, 2H)
        # both the x-side and s-side Linears carry biases -> sum them
        b_rnn.append(jnp.concatenate([b_gx + b_gs, b_cx + b_cs], axis=1))  # (1, 2H)

    return {
        "we": we.astype(weight_dtype), "be": be,
        "w_rnn": jnp.stack(w_rnn).astype(weight_dtype),
        "b_rnn": jnp.stack(b_rnn),
        "wd1": wd1.astype(weight_dtype), "bd1": bd1,
        "wd2": wd2.astype(weight_dtype), "bd2": bd2,
    }


if __name__ == "__main__":
    seq_len = 8
    batch_size = 8        # multiple of 8 sublanes -> unmasked stores
    hidden_size = 128     # multiple of 128 lanes  -> lane-dense layouts
    num_layers = 2

    key = jax.random.PRNGKey(0)
    k_params, k_x = jax.random.split(key)

    params = init_params(k_params, hidden_size, num_layers)
    xs = jax.random.normal(k_x, (seq_len, batch_size, INPUT_SIZE), jnp.float32)
    state0 = jnp.zeros((num_layers, batch_size, hidden_size), jnp.float32)  # reset()

    fwd = jax.jit(net_forward_seq)
    ys, new_state = fwd(xs, state0, params)
    jax.block_until_ready((ys, new_state))
    assert ys.shape == (seq_len, batch_size, OUTPUT_SIZE)
    assert new_state.shape == (num_layers, batch_size, hidden_size)

    # Single-step path (identical math to one Net.forward call).
    y1, st1 = net_forward(xs[0], state0, params)
    jax.block_until_ready((y1, st1))
    assert y1.shape == (batch_size, OUTPUT_SIZE)
    assert st1.shape == (num_layers, batch_size, hidden_size)

    print("KERNEL_OK")
</pallas_src>

<mosaic_0001>
module attributes {stable_mosaic.version = 11 : i64} {
  func.func @net_seq_kernel(%arg0: i32, %arg1: memref<8x8x256xf32, #tpu.memory_space<vmem>>, %arg2: memref<2x8x128xf32, #tpu.memory_space<vmem>>, %arg3: memref<256x128xbf16, #tpu.memory_space<vmem>>, %arg4: memref<1x128xf32, #tpu.memory_space<vmem>>, %arg5: memref<2x256x256xbf16, #tpu.memory_space<vmem>>, %arg6: memref<2x1x256xf32, #tpu.memory_space<vmem>>, %arg7: memref<128x128xbf16, #tpu.memory_space<vmem>>, %arg8: memref<1x128xf32, #tpu.memory_space<vmem>>, %arg9: memref<128x256xbf16, #tpu.memory_space<vmem>>, %arg10: memref<1x256xf32, #tpu.memory_space<vmem>>, %arg11: memref<8x8x256xf32, #tpu.memory_space<vmem>>, %arg12: memref<2x8x128xf32, #tpu.memory_space<vmem>>, %arg13: memref<8x8x256xf32, #tpu.memory_space<vmem>>, %arg14: memref<8x8x128xbf16, #tpu.memory_space<vmem>>, %arg15: memref<2x8x128xf32, #tpu.memory_space<vmem>>) attributes {dimension_semantics = [#tpu.dimension_semantics<arbitrary>], iteration_bounds = array<i64: 1>, scalar_prefetch = 0 : i64, scratch_operands = 3 : i64, tpu.core_type = #tpu.core_type<tc>, window_params = [{transform_indices = @transform_0, window_bounds = array<i64: 8, 8, 256>}, {pipeline_mode = #tpu.pipeline_mode<synchronous>, transform_indices = @transform_1, window_bounds = array<i64: 2, 8, 128>}, {pipeline_mode = #tpu.pipeline_mode<synchronous>, transform_indices = @transform_2, window_bounds = array<i64: 256, 128>}, {pipeline_mode = #tpu.pipeline_mode<synchronous>, transform_indices = @transform_3, window_bounds = array<i64: 1, 128>}, {pipeline_mode = #tpu.pipeline_mode<synchronous>, transform_indices = @transform_4, window_bounds = array<i64: 2, 256, 256>}, {pipeline_mode = #tpu.pipeline_mode<synchronous>, transform_indices = @transform_5, window_bounds = array<i64: 2, 1, 256>}, {pipeline_mode = #tpu.pipeline_mode<synchronous>, transform_indices = @transform_6, window_bounds = array<i64: 128, 128>}, {pipeline_mode = #tpu.pipeline_mode<synchronous>, transform_indices = @transform_7, window_bounds = array<i64: 1, 128>}, {pipeline_mode = #tpu.pipeline_mode<synchronous>, transform_indices = @transform_8, window_bounds = array<i64: 128, 256>}, {pipeline_mode = #tpu.pipeline_mode<synchronous>, transform_indices = @transform_9, window_bounds = array<i64: 1, 256>}, {transform_indices = @transform_10, window_bounds = array<i64: 8, 8, 256>}, {pipeline_mode = #tpu.pipeline_mode<synchronous>, transform_indices = @transform_11, window_bounds = array<i64: 2, 8, 128>}]} {
    %c0_i32 = arith.constant 0 : i32
    %0 = arith.cmpi eq, %arg0, %c0_i32 : i32
    %1 = arith.extui %0 : i1 to i32
    %c0_i32_0 = arith.constant 0 : i32
    %2 = arith.cmpi ne, %1, %c0_i32_0 : i32
    scf.if %2 {
      %c0_209 = arith.constant 0 : index
      %c0_210 = arith.constant 0 : index
      %c0_211 = arith.constant 0 : index
      %442 = vector.load %arg2[%c0_209, %c0_210, %c0_211] : memref<2x8x128xf32, #tpu.memory_space<vmem>>, vector<2x8x128xf32>
      %c0_212 = arith.constant 0 : index
      %c0_213 = arith.constant 0 : index
      %c0_214 = arith.constant 0 : index
      %443 = vector.load %arg15[%c0_212, %c0_213, %c0_214] : memref<2x8x128xf32, #tpu.memory_space<vmem>>, vector<2x8x128xf32>
      tpu.vector_store %arg15[%c0_212, %c0_213, %c0_214], %442 {strides = array<i32>} : memref<2x8x128xf32, #tpu.memory_space<vmem>>, vector<2x8x128xf32>,
    } else {
    }
    %c0 = arith.constant 0 : index
    %c0_1 = arith.constant 0 : index
    %c0_2 = arith.constant 0 : index
    %3 = vector.load %arg1[%c0, %c0_1, %c0_2] : memref<8x8x256xf32, #tpu.memory_space<vmem>>, vector<8x8x256xf32>
    %4 = vector.shape_cast %3 : vector<8x8x256xf32> to vector<64x256xf32>
    %5 = arith.truncf %4 : vector<64x256xf32> to vector<64x256xbf16>
    %c0_3 = arith.constant 0 : index
    %c0_4 = arith.constant 0 : index
    %6 = vector.load %arg3[%c0_3, %c0_4] : memref<256x128xbf16, #tpu.memory_space<vmem>>, vector<256x128xbf16>
    %cst = arith.constant dense<0.000000e+00> : vector<64x128xf32>
    %7 = tpu.matmul %5, %6, %cst {dimension_numbers = #tpu.dot_dimension_numbers<[1], [0], [0], [1], [0, 0, 1, 1], [], []>} : vector<64x256xbf16>, vector<256x128xbf16>, vector<64x128xf32> -> vector<64x128xf32>
    %c0_5 = arith.constant 0 : index
    %c0_6 = arith.constant 0 : index
    %8 = vector.load %arg4[%c0_5, %c0_6] : memref<1x128xf32, #tpu.memory_space<vmem>>, vector<1x128xf32>
    %9 = vector.broadcast %8 : vector<1x128xf32> to vector<64x128xf32>
    %10 = arith.addf %7, %9 : vector<64x128xf32>
    %c0_7 = arith.constant 0 : index
    %c0_8 = arith.constant 0 : index
    %c0_9 = arith.constant 0 : index
    %11 = vector.load %arg5[%c0_7, %c0_8, %c0_9] : memref<2x256x256xbf16, #tpu.memory_space<vmem>>, vector<1x256x256xbf16>
    %12 = vector.shape_cast %11 : vector<1x256x256xbf16> to vector<256x256xbf16>
    %13 = arith.truncf %10 : vector<64x128xf32> to vector<64x128xbf16>
    %14 = vector.extract_strided_slice %12 {offsets = [0, 0], sizes = [128, 256], strides = [1, 1]} : vector<256x256xbf16> to vector<128x256xbf16>
    %cst_10 = arith.constant dense<0.000000e+00> : vector<64x256xf32>
    %15 = tpu.matmul %13, %14, %cst_10 {dimension_numbers = #tpu.dot_dimension_numbers<[1], [0], [0], [1], [0, 0, 1, 1], [], []>} : vector<64x128xbf16>, vector<128x256xbf16>, vector<64x256xf32> -> vector<64x256xf32>
    %c0_11 = arith.constant 0 : index
    %c0_12 = arith.constant 0 : index
    %c0_13 = arith.constant 0 : index
    %16 = vector.load %arg6[%c0_11, %c0_12, %c0_13] : memref<2x1x256xf32, #tpu.memory_space<vmem>>, vector<1x1x256xf32>
    %17 = vector.shape_cast %16 : vector<1x1x256xf32> to vector<1x256xf32>
    %18 = vector.broadcast %17 : vector<1x256xf32> to vector<64x256xf32>
    %19 = arith.addf %15, %18 : vector<64x256xf32>
    %20 = vector.shape_cast %19 : vector<64x256xf32> to vector<8x8x256xf32>
    %c0_14 = arith.constant 0 : index
    %c0_15 = arith.constant 0 : index
    %c0_16 = arith.constant 0 : index
    %21 = vector.load %arg13[%c0_14, %c0_15, %c0_16] : memref<8x8x256xf32, #tpu.memory_space<vmem>>, vector<8x8x256xf32>
    tpu.vector_store %arg13[%c0_14, %c0_15, %c0_16], %20 {strides = array<i32>} : memref<8x8x256xf32, #tpu.memory_space<vmem>>, vector<8x8x256xf32>,
    %22 = vector.extract_strided_slice %12 {offsets = [128, 0], sizes = [128, 256], strides = [1, 1]} : vector<256x256xbf16> to vector<128x256xbf16>
    %c1 = arith.constant 1 : index
    %c0_17 = arith.constant 0 : index
    %c0_18 = arith.constant 0 : index
    %23 = vector.load %arg5[%c1, %c0_17, %c0_18] : memref<2x256x256xbf16, #tpu.memory_space<vmem>>, vector<1x256x256xbf16>
    %24 = vector.shape_cast %23 : vector<1x256x256xbf16> to vector<256x256xbf16>
    %25 = vector.extract_strided_slice %24 {offsets = [128, 0], sizes = [128, 256], strides = [1, 1]} : vector<256x256xbf16> to vector<128x256xbf16>
    %26 = vector.extract_strided_slice %24 {offsets = [0, 0], sizes = [128, 256], strides = [1, 1]} : vector<256x256xbf16> to vector<128x256xbf16>
    %c1_19 = arith.constant 1 : index
    %c0_20 = arith.constant 0 : index
    %c0_21 = arith.constant 0 : index
    %27 = vector.load %arg6[%c1_19, %c0_20, %c0_21] : memref<2x1x256xf32, #tpu.memory_space<vmem>>, vector<1x1x256xf32>
    %28 = vector.shape_cast %27 : vector<1x1x256xf32> to vector<1x256xf32>
    %29 = vector.shape_cast %28 : vector<1x256xf32> to vector<1x256xf32>
    %30 = vector.broadcast %29 : vector<1x256xf32> to vector<8x256xf32>
    %c0_i32_22 = arith.constant 0 : i32
    %c0_23 = arith.constant 0 : index
    %c0_24 = arith.constant 0 : index
    %c0_25 = arith.constant 0 : index
    %31 = vector.load %arg15[%c0_23, %c0_24, %c0_25] : memref<2x8x128xf32, #tpu.memory_space<vmem>>, vector<1x8x128xf32>
    %32 = vector.shape_cast %31 : vector<1x8x128xf32> to vector<8x128xf32>
    %33 = arith.index_cast %c0_i32_22 : i32 to index
    %c0_26 = arith.constant 0 : index
    %c0_27 = arith.constant 0 : index
    %34 = vector.load %arg13[%33, %c0_26, %c0_27] : memref<8x8x256xf32, #tpu.memory_space<vmem>>, vector<1x8x256xf32>
    %35 = vector.shape_cast %34 : vector<1x8x256xf32> to vector<8x256xf32>
    %36 = arith.truncf %32 : vector<8x128xf32> to vector<8x128xbf16>
    %cst_28 = arith.constant dense<0.000000e+00> : vector<8x256xf32>
    %37 = tpu.matmul %36, %22, %cst_28 {dimension_numbers = #tpu.dot_dimension_numbers<[1], [0], [0], [1], [0, 0, 1, 1], [], []>} : vector<8x128xbf16>, vector<128x256xbf16>, vector<8x256xf32> -> vector<8x256xf32>
    %38 = arith.addf %35, %37 : vector<8x256xf32>
    %39 = vector.extract_strided_slice %38 {offsets = [0, 0], sizes = [8, 128], strides = [1, 1]} : vector<8x256xf32> to vector<8x128xf32>
    %40 = arith.negf %39 : vector<8x128xf32>
    %41 = math.exp %40 : vector<8x128xf32>
    %cst_29 = arith.constant 1.000000e+00 : f32
    %42 = vector.broadcast %cst_29 : f32 to vector<8x128xf32>
    %43 = arith.addf %42, %41 : vector<8x128xf32>
    %44 = arith.divf %42, %43 : vector<8x128xf32>
    %45 = vector.extract_strided_slice %38 {offsets = [0, 128], sizes = [8, 128], strides = [1, 1]} : vector<8x256xf32> to vector<8x128xf32>
    %46 = math.tanh %45 : vector<8x128xf32>
    %47 = arith.subf %32, %46 : vector<8x128xf32>
    %48 = arith.mulf %44, %47 : vector<8x128xf32>
    %49 = arith.addf %46, %48 : vector<8x128xf32>
    %c0_30 = arith.constant 0 : index
    %c0_31 = arith.constant 0 : index
    %c0_32 = arith.constant 0 : index
    %50 = vector.load %arg15[%c0_30, %c0_31, %c0_32] : memref<2x8x128xf32, #tpu.memory_space<vmem>>, vector<1x8x128xf32>
    %51 = vector.shape_cast %50 : vector<1x8x128xf32> to vector<8x128xf32>
    %52 = vector.shape_cast %49 : vector<8x128xf32> to vector<1x8x128xf32>
    tpu.vector_store %arg15[%c0_30, %c0_31, %c0_32], %52 {strides = array<i32>} : memref<2x8x128xf32, #tpu.memory_space<vmem>>, vector<1x8x128xf32>,
    %c1_33 = arith.constant 1 : index
    %c0_34 = arith.constant 0 : index
    %c0_35 = arith.constant 0 : index
    %53 = vector.load %arg15[%c1_33, %c0_34, %c0_35] : memref<2x8x128xf32, #tpu.memory_space<vmem>>, vector<1x8x128xf32>
    %54 = vector.shape_cast %53 : vector<1x8x128xf32> to vector<8x128xf32>
    %55 = arith.truncf %49 : vector<8x128xf32> to vector<8x128xbf16>
    %cst_36 = arith.constant dense<0.000000e+00> : vector<8x256xf32>
    %56 = tpu.matmul %55, %26, %cst_36 {dimension_numbers = #tpu.dot_dimension_numbers<[1], [0], [0], [1], [0, 0, 1, 1], [], []>} : vector<8x128xbf16>, vector<128x256xbf16>, vector<8x256xf32> -> vector<8x256xf32>
    %57 = arith.truncf %54 : vector<8x128xf32> to vector<8x128xbf16>
    %cst_37 = arith.constant dense<0.000000e+00> : vector<8x256xf32>
    %58 = tpu.matmul %57, %25, %cst_37 {dimension_numbers = #tpu.dot_dimension_numbers<[1], [0], [0], [1], [0, 0, 1, 1], [], []>} : vector<8x128xbf16>, vector<128x256xbf16>, vector<8x256xf32> -> vector<8x256xf32>
    %59 = arith.addf %56, %58 : vector<8x256xf32>
    %60 = arith.addf %59, %30 : vector<8x256xf32>
    %61 = vector.extract_strided_slice %60 {offsets = [0, 0], sizes = [8, 128], strides = [1, 1]} : vector<8x256xf32> to vector<8x128xf32>
    %62 = arith.negf %61 : vector<8x128xf32>
    %63 = math.exp %62 : vector<8x128xf32>
    %cst_38 = arith.constant 1.000000e+00 : f32
    %64 = vector.broadcast %cst_38 : f32 to vector<8x128xf32>
    %65 = arith.addf %64, %63 : vector<8x128xf32>
    %66 = arith.divf %64, %65 : vector<8x128xf32>
    %67 = vector.extract_strided_slice %60 {offsets = [0, 128], sizes = [8, 128], strides = [1, 1]} : vector<8x256xf32> to vector<8x128xf32>
    %68 = math.tanh %67 : vector<8x128xf32>
    %69 = arith.subf %54, %68 : vector<8x128xf32>
    %70 = arith.mulf %66, %69 : vector<8x128xf32>
    %71 = arith.addf %68, %70 : vector<8x128xf32>
    %c1_39 = arith.constant 1 : index
    %c0_40 = arith.constant 0 : index
    %c0_41 = arith.constant 0 : index
    %72 = vector.load %arg15[%c1_39, %c0_40, %c0_41] : memref<2x8x128xf32, #tpu.memory_space<vmem>>, vector<1x8x128xf32>
    %73 = vector.shape_cast %72 : vector<1x8x128xf32> to vector<8x128xf32>
    %74 = vector.shape_cast %71 : vector<8x128xf32> to vector<1x8x128xf32>
    tpu.vector_store %arg15[%c1_39, %c0_40, %c0_41], %74 {strides = array<i32>} : memref<2x8x128xf32, #tpu.memory_space<vmem>>, vector<1x8x128xf32>,
    %75 = arith.truncf %71 : vector<8x128xf32> to vector<8x128xbf16>
    %76 = arith.index_cast %c0_i32_22 : i32 to index
    %c0_42 = arith.constant 0 : index
    %c0_43 = arith.constant 0 : index
    %77 = vector.load %arg14[%76, %c0_42, %c0_43] : memref<8x8x128xbf16, #tpu.memory_space<vmem>>, vector<1x8x128xbf16>
    %78 = vector.shape_cast %77 : vector<1x8x128xbf16> to vector<8x128xbf16>
    %79 = vector.shape_cast %75 : vector<8x128xbf16> to vector<1x8x128xbf16>
    tpu.vector_store %arg14[%76, %c0_42, %c0_43], %79 {strides = array<i32>} : memref<8x8x128xbf16, #tpu.memory_space<vmem>>, vector<1x8x128xbf16>,
    %c1_i32 = arith.constant 1 : i32
    %c0_44 = arith.constant 0 : index
    %c0_45 = arith.constant 0 : index
    %c0_46 = arith.constant 0 : index
    %80 = vector.load %arg15[%c0_44, %c0_45, %c0_46] : memref<2x8x128xf32, #tpu.memory_space<vmem>>, vector<1x8x128xf32>
    %81 = vector.shape_cast %80 : vector<1x8x128xf32> to vector<8x128xf32>
    %82 = arith.index_cast %c1_i32 : i32 to index
    %c0_47 = arith.constant 0 : index
    %c0_48 = arith.constant 0 : index
    %83 = vector.load %arg13[%82, %c0_47, %c0_48] : memref<8x8x256xf32, #tpu.memory_space<vmem>>, vector<1x8x256xf32>
    %84 = vector.shape_cast %83 : vector<1x8x256xf32> to vector<8x256xf32>
    %85 = arith.truncf %81 : vector<8x128xf32> to vector<8x128xbf16>
    %cst_49 = arith.constant dense<0.000000e+00> : vector<8x256xf32>
    %86 = tpu.matmul %85, %22, %cst_49 {dimension_numbers = #tpu.dot_dimension_numbers<[1], [0], [0], [1], [0, 0, 1, 1], [], []>} : vector<8x128xbf16>, vector<128x256xbf16>, vector<8x256xf32> -> vector<8x256xf32>
    %87 = arith.addf %84, %86 : vector<8x256xf32>
    %88 = vector.extract_strided_slice %87 {offsets = [0, 0], sizes = [8, 128], strides = [1, 1]} : vector<8x256xf32> to vector<8x128xf32>
    %89 = arith.negf %88 : vector<8x128xf32>
    %90 = math.exp %89 : vector<8x128xf32>
    %cst_50 = arith.constant 1.000000e+00 : f32
    %91 = vector.broadcast %cst_50 : f32 to vector<8x128xf32>
    %92 = arith.addf %91, %90 : vector<8x128xf32>
    %93 = arith.divf %91, %92 : vector<8x128xf32>
    %94 = vector.extract_strided_slice %87 {offsets = [0, 128], sizes = [8, 128], strides = [1, 1]} : vector<8x256xf32> to vector<8x128xf32>
    %95 = math.tanh %94 : vector<8x128xf32>
    %96 = arith.subf %81, %95 : vector<8x128xf32>
    %97 = arith.mulf %93, %96 : vector<8x128xf32>
    %98 = arith.addf %95, %97 : vector<8x128xf32>
    %c0_51 = arith.constant 0 : index
    %c0_52 = arith.constant 0 : index
    %c0_53 = arith.constant 0 : index
    %99 = vector.load %arg15[%c0_51, %c0_52, %c0_53] : memref<2x8x128xf32, #tpu.memory_space<vmem>>, vector<1x8x128xf32>
    %100 = vector.shape_cast %99 : vector<1x8x128xf32> to vector<8x128xf32>
    %101 = vector.shape_cast %98 : vector<8x128xf32> to vector<1x8x128xf32>
    tpu.vector_store %arg15[%c0_51, %c0_52, %c0_53], %101 {strides = array<i32>} : memref<2x8x128xf32, #tpu.memory_space<vmem>>, vector<1x8x128xf32>,
    %c1_54 = arith.constant 1 : index
    %c0_55 = arith.constant 0 : index
    %c0_56 = arith.constant 0 : index
    %102 = vector.load %arg15[%c1_54, %c0_55, %c0_56] : memref<2x8x128xf32, #tpu.memory_space<vmem>>, vector<1x8x128xf32>
    %103 = vector.shape_cast %102 : vector<1x8x128xf32> to vector<8x128xf32>
    %104 = arith.truncf %98 : vector<8x128xf32> to vector<8x128xbf16>
    %cst_57 = arith.constant dense<0.000000e+00> : vector<8x256xf32>
    %105 = tpu.matmul %104, %26, %cst_57 {dimension_numbers = #tpu.dot_dimension_numbers<[1], [0], [0], [1], [0, 0, 1, 1], [], []>} : vector<8x128xbf16>, vector<128x256xbf16>, vector<8x256xf32> -> vector<8x256xf32>
    %106 = arith.truncf %103 : vector<8x128xf32> to vector<8x128xbf16>
    %cst_58 = arith.constant dense<0.000000e+00> : vector<8x256xf32>
    %107 = tpu.matmul %106, %25, %cst_58 {dimension_numbers = #tpu.dot_dimension_numbers<[1], [0], [0], [1], [0, 0, 1, 1], [], []>} : vector<8x128xbf16>, vector<128x256xbf16>, vector<8x256xf32> -> vector<8x256xf32>
    %108 = arith.addf %105, %107 : vector<8x256xf32>
    %109 = arith.addf %108, %30 : vector<8x256xf32>
    %110 = vector.extract_strided_slice %109 {offsets = [0, 0], sizes = [8, 128], strides = [1, 1]} : vector<8x256xf32> to vector<8x128xf32>
    %111 = arith.negf %110 : vector<8x128xf32>
    %112 = math.exp %111 : vector<8x128xf32>
    %cst_59 = arith.constant 1.000000e+00 : f32
    %113 = vector.broadcast %cst_59 : f32 to vector<8x128xf32>
    %114 = arith.addf %113, %112 : vector<8x128xf32>
    %115 = arith.divf %113, %114 : vector<8x128xf32>
    %116 = vector.extract_strided_slice %109 {offsets = [0, 128], sizes = [8, 128], strides = [1, 1]} : vector<8x256xf32> to vector<8x128xf32>
    %117 = math.tanh %116 : vector<8x128xf32>
    %118 = arith.subf %103, %117 : vector<8x128xf32>
    %119 = arith.mulf %115, %118 : vector<8x128xf32>
    %120 = arith.addf %117, %119 : vector<8x128xf32>
    %c1_60 = arith.constant 1 : index
    %c0_61 = arith.constant 0 : index
    %c0_62 = arith.constant 0 : index
    %121 = vector.load %arg15[%c1_60, %c0_61, %c0_62] : memref<2x8x128xf32, #tpu.memory_space<vmem>>, vector<1x8x128xf32>
    %122 = vector.shape_cast %121 : vector<1x8x128xf32> to vector<8x128xf32>
    %123 = vector.shape_cast %120 : vector<8x128xf32> to vector<1x8x128xf32>
    tpu.vector_store %arg15[%c1_60, %c0_61, %c0_62], %123 {strides = array<i32>} : memref<2x8x128xf32, #tpu.memory_space<vmem>>, vector<1x8x128xf32>,
    %124 = arith.truncf %120 : vector<8x128xf32> to vector<8x128xbf16>
    %125 = arith.index_cast %c1_i32 : i32 to index
    %c0_63 = arith.constant 0 : index
    %c0_64 = arith.constant 0 : index
    %126 = vector.load %arg14[%125, %c0_63, %c0_64] : memref<8x8x128xbf16, #tpu.memory_space<vmem>>, vector<1x8x128xbf16>
    %127 = vector.shape_cast %126 : vector<1x8x128xbf16> to vector<8x128xbf16>
    %128 = vector.shape_cast %124 : vector<8x128xbf16> to vector<1x8x128xbf16>
    tpu.vector_store %arg14[%125, %c0_63, %c0_64], %128 {strides = array<i32>} : memref<8x8x128xbf16, #tpu.memory_space<vmem>>, vector<1x8x128xbf16>,
    %c2_i32 = arith.constant 2 : i32
    %c0_65 = arith.constant 0 : index
    %c0_66 = arith.constant 0 : index
    %c0_67 = arith.constant 0 : index
    %129 = vector.load %arg15[%c0_65, %c0_66, %c0_67] : memref<2x8x128xf32, #tpu.memory_space<vmem>>, vector<1x8x128xf32>
    %130 = vector.shape_cast %129 : vector<1x8x128xf32> to vector<8x128xf32>
    %131 = arith.index_cast %c2_i32 : i32 to index
    %c0_68 = arith.constant 0 : index
    %c0_69 = arith.constant 0 : index
    %132 = vector.load %arg13[%131, %c0_68, %c0_69] : memref<8x8x256xf32, #tpu.memory_space<vmem>>, vector<1x8x256xf32>
    %133 = vector.shape_cast %132 : vector<1x8x256xf32> to vector<8x256xf32>
    %134 = arith.truncf %130 : vector<8x128xf32> to vector<8x128xbf16>
    %cst_70 = arith.constant dense<0.000000e+00> : vector<8x256xf32>
    %135 = tpu.matmul %134, %22, %cst_70 {dimension_numbers = #tpu.dot_dimension_numbers<[1], [0], [0], [1], [0, 0, 1, 1], [], []>} : vector<8x128xbf16>, vector<128x256xbf16>, vector<8x256xf32> -> vector<8x256xf32>
    %136 = arith.addf %133, %135 : vector<8x256xf32>
    %137 = vector.extract_strided_slice %136 {offsets = [0, 0], sizes = [8, 128], strides = [1, 1]} : vector<8x256xf32> to vector<8x128xf32>
    %138 = arith.negf %137 : vector<8x128xf32>
    %139 = math.exp %138 : vector<8x128xf32>
    %cst_71 = arith.constant 1.000000e+00 : f32
    %140 = vector.broadcast %cst_71 : f32 to vector<8x128xf32>
    %141 = arith.addf %140, %139 : vector<8x128xf32>
    %142 = arith.divf %140, %141 : vector<8x128xf32>
    %143 = vector.extract_strided_slice %136 {offsets = [0, 128], sizes = [8, 128], strides = [1, 1]} : vector<8x256xf32> to vector<8x128xf32>
    %144 = math.tanh %143 : vector<8x128xf32>
    %145 = arith.subf %130, %144 : vector<8x128xf32>
    %146 = arith.mulf %142, %145 : vector<8x128xf32>
    %147 = arith.addf %144, %146 : vector<8x128xf32>
    %c0_72 = arith.constant 0 : index
    %c0_73 = arith.constant 0 : index
    %c0_74 = arith.constant 0 : index
    %148 = vector.load %arg15[%c0_72, %c0_73, %c0_74] : memref<2x8x128xf32, #tpu.memory_space<vmem>>, vector<1x8x128xf32>
    %149 = vector.shape_cast %148 : vector<1x8x128xf32> to vector<8x128xf32>
    %150 = vector.shape_cast %147 : vector<8x128xf32> to vector<1x8x128xf32>
    tpu.vector_store %arg15[%c0_72, %c0_73, %c0_74], %150 {strides = array<i32>} : memref<2x8x128xf32, #tpu.memory_space<vmem>>, vector<1x8x128xf32>,
    %c1_75 = arith.constant 1 : index
    %c0_76 = arith.constant 0 : index
    %c0_77 = arith.constant 0 : index
    %151 = vector.load %arg15[%c1_75, %c0_76, %c0_77] : memref<2x8x128xf32, #tpu.memory_space<vmem>>, vector<1x8x128xf32>
    %152 = vector.shape_cast %151 : vector<1x8x128xf32> to vector<8x128xf32>
    %153 = arith.truncf %147 : vector<8x128xf32> to vector<8x128xbf16>
    %cst_78 = arith.constant dense<0.000000e+00> : vector<8x256xf32>
    %154 = tpu.matmul %153, %26, %cst_78 {dimension_numbers = #tpu.dot_dimension_numbers<[1], [0], [0], [1], [0, 0, 1, 1], [], []>} : vector<8x128xbf16>, vector<128x256xbf16>, vector<8x256xf32> -> vector<8x256xf32>
    %155 = arith.truncf %152 : vector<8x128xf32> to vector<8x128xbf16>
    %cst_79 = arith.constant dense<0.000000e+00> : vector<8x256xf32>
    %156 = tpu.matmul %155, %25, %cst_79 {dimension_numbers = #tpu.dot_dimension_numbers<[1], [0], [0], [1], [0, 0, 1, 1], [], []>} : vector<8x128xbf16>, vector<128x256xbf16>, vector<8x256xf32> -> vector<8x256xf32>
    %157 = arith.addf %154, %156 : vector<8x256xf32>
    %158 = arith.addf %157, %30 : vector<8x256xf32>
    %159 = vector.extract_strided_slice %158 {offsets = [0, 0], sizes = [8, 128], strides = [1, 1]} : vector<8x256xf32> to vector<8x128xf32>
    %160 = arith.negf %159 : vector<8x128xf32>
    %161 = math.exp %160 : vector<8x128xf32>
    %cst_80 = arith.constant 1.000000e+00 : f32
    %162 = vector.broadcast %cst_80 : f32 to vector<8x128xf32>
    %163 = arith.addf %162, %161 : vector<8x128xf32>
    %164 = arith.divf %162, %163 : vector<8x128xf32>
    %165 = vector.extract_strided_slice %158 {offsets = [0, 128], sizes = [8, 128], strides = [1, 1]} : vector<8x256xf32> to vector<8x128xf32>
    %166 = math.tanh %165 : vector<8x128xf32>
    %167 = arith.subf %152, %166 : vector<8x128xf32>
    %168 = arith.mulf %164, %167 : vector<8x128xf32>
    %169 = arith.addf %166, %168 : vector<8x128xf32>
    %c1_81 = arith.constant 1 : index
    %c0_82 = arith.constant 0 : index
    %c0_83 = arith.constant 0 : index
    %170 = vector.load %arg15[%c1_81, %c0_82, %c0_83] : memref<2x8x128xf32, #tpu.memory_space<vmem>>, vector<1x8x128xf32>
    %171 = vector.shape_cast %170 : vector<1x8x128xf32> to vector<8x128xf32>
    %172 = vector.shape_cast %169 : vector<8x128xf32> to vector<1x8x128xf32>
    tpu.vector_store %arg15[%c1_81, %c0_82, %c0_83], %172 {strides = array<i32>} : memref<2x8x128xf32, #tpu.memory_space<vmem>>, vector<1x8x128xf32>,
    %173 = arith.truncf %169 : vector<8x128xf32> to vector<8x128xbf16>
    %174 = arith.index_cast %c2_i32 : i32 to index
    %c0_84 = arith.constant 0 : index
    %c0_85 = arith.constant 0 : index
    %175 = vector.load %arg14[%174, %c0_84, %c0_85] : memref<8x8x128xbf16, #tpu.memory_space<vmem>>, vector<1x8x128xbf16>
    %176 = vector.shape_cast %175 : vector<1x8x128xbf16> to vector<8x128xbf16>
    %177 = vector.shape_cast %173 : vector<8x128xbf16> to vector<1x8x128xbf16>
    tpu.vector_store %arg14[%174, %c0_84, %c0_85], %177 {strides = array<i32>} : memref<8x8x128xbf16, #tpu.memory_space<vmem>>, vector<1x8x128xbf16>,
    %c3_i32 = arith.constant 3 : i32
    %c0_86 = arith.constant 0 : index
    %c0_87 = arith.constant 0 : index
    %c0_88 = arith.constant 0 : index
    %178 = vector.load %arg15[%c0_86, %c0_87, %c0_88] : memref<2x8x128xf32, #tpu.memory_space<vmem>>, vector<1x8x128xf32>
    %179 = vector.shape_cast %178 : vector<1x8x128xf32> to vector<8x128xf32>
    %180 = arith.index_cast %c3_i32 : i32 to index
    %c0_89 = arith.constant 0 : index
    %c0_90 = arith.constant 0 : index
    %181 = vector.load %arg13[%180, %c0_89, %c0_90] : memref<8x8x256xf32, #tpu.memory_space<vmem>>, vector<1x8x256xf32>
    %182 = vector.shape_cast %181 : vector<1x8x256xf32> to vector<8x256xf32>
    %183 = arith.truncf %179 : vector<8x128xf32> to vector<8x128xbf16>
    %cst_91 = arith.constant dense<0.000000e+00> : vector<8x256xf32>
    %184 = tpu.matmul %183, %22, %cst_91 {dimension_numbers = #tpu.dot_dimension_numbers<[1], [0], [0], [1], [0, 0, 1, 1], [], []>} : vector<8x128xbf16>, vector<128x256xbf16>, vector<8x256xf32> -> vector<8x256xf32>
    %185 = arith.addf %182, %184 : vector<8x256xf32>
    %186 = vector.extract_strided_slice %185 {offsets = [0, 0], sizes = [8, 128], strides = [1, 1]} : vector<8x256xf32> to vector<8x128xf32>
    %187 = arith.negf %186 : vector<8x128xf32>
    %188 = math.exp %187 : vector<8x128xf32>
    %cst_92 = arith.constant 1.000000e+00 : f32
    %189 = vector.broadcast %cst_92 : f32 to vector<8x128xf32>
    %190 = arith.addf %189, %188 : vector<8x128xf32>
    %191 = arith.divf %189, %190 : vector<8x128xf32>
    %192 = vector.extract_strided_slice %185 {offsets = [0, 128], sizes = [8, 128], strides = [1, 1]} : vector<8x256xf32> to vector<8x128xf32>
    %193 = math.tanh %192 : vector<8x128xf32>
    %194 = arith.subf %179, %193 : vector<8x128xf32>
    %195 = arith.mulf %191, %194 : vector<8x128xf32>
    %196 = arith.addf %193, %195 : vector<8x128xf32>
    %c0_93 = arith.constant 0 : index
    %c0_94 = arith.constant 0 : index
    %c0_95 = arith.constant 0 : index
    %197 = vector.load %arg15[%c0_93, %c0_94, %c0_95] : memref<2x8x128xf32, #tpu.memory_space<vmem>>, vector<1x8x128xf32>
    %198 = vector.shape_cast %197 : vector<1x8x128xf32> to vector<8x128xf32>
    %199 = vector.shape_cast %196 : vector<8x128xf32> to vector<1x8x128xf32>
    tpu.vector_store %arg15[%c0_93, %c0_94, %c0_95], %199 {strides = array<i32>} : memref<2x8x128xf32, #tpu.memory_space<vmem>>, vector<1x8x128xf32>,
    %c1_96 = arith.constant 1 : index
    %c0_97 = arith.constant 0 : index
    %c0_98 = arith.constant 0 : index
    %200 = vector.load %arg15[%c1_96, %c0_97, %c0_98] : memref<2x8x128xf32, #tpu.memory_space<vmem>>, vector<1x8x128xf32>
    %201 = vector.shape_cast %200 : vector<1x8x128xf32> to vector<8x128xf32>
    %202 = arith.truncf %196 : vector<8x128xf32> to vector<8x128xbf16>
    %cst_99 = arith.constant dense<0.000000e+00> : vector<8x256xf32>
    %203 = tpu.matmul %202, %26, %cst_99 {dimension_numbers = #tpu.dot_dimension_numbers<[1], [0], [0], [1], [0, 0, 1, 1], [], []>} : vector<8x128xbf16>, vector<128x256xbf16>, vector<8x256xf32> -> vector<8x256xf32>
    %204 = arith.truncf %201 : vector<8x128xf32> to vector<8x128xbf16>
    %cst_100 = arith.constant dense<0.000000e+00> : vector<8x256xf32>
    %205 = tpu.matmul %204, %25, %cst_100 {dimension_numbers = #tpu.dot_dimension_numbers<[1], [0], [0], [1], [0, 0, 1, 1], [], []>} : vector<8x128xbf16>, vector<128x256xbf16>, vector<8x256xf32> -> vector<8x256xf32>
    %206 = arith.addf %203, %205 : vector<8x256xf32>
    %207 = arith.addf %206, %30 : vector<8x256xf32>
    %208 = vector.extract_strided_slice %207 {offsets = [0, 0], sizes = [8, 128], strides = [1, 1]} : vector<8x256xf32> to vector<8x128xf32>
    %209 = arith.negf %208 : vector<8x128xf32>
    %210 = math.exp %209 : vector<8x128xf32>
    %cst_101 = arith.constant 1.000000e+00 : f32
    %211 = vector.broadcast %cst_101 : f32 to vector<8x128xf32>
    %212 = arith.addf %211, %210 : vector<8x128xf32>
    %213 = arith.divf %211, %212 : vector<8x128xf32>
    %214 = vector.extract_strided_slice %207 {offsets = [0, 128], sizes = [8, 128], strides = [1, 1]} : vector<8x256xf32> to vector<8x128xf32>
    %215 = math.tanh %214 : vector<8x128xf32>
    %216 = arith.subf %201, %215 : vector<8x128xf32>
    %217 = arith.mulf %213, %216 : vector<8x128xf32>
    %218 = arith.addf %215, %217 : vector<8x128xf32>
    %c1_102 = arith.constant 1 : index
    %c0_103 = arith.constant 0 : index
    %c0_104 = arith.constant 0 : index
    %219 = vector.load %arg15[%c1_102, %c0_103, %c0_104] : memref<2x8x128xf32, #tpu.memory_space<vmem>>, vector<1x8x128xf32>
    %220 = vector.shape_cast %219 : vector<1x8x128xf32> to vector<8x128xf32>
    %221 = vector.shape_cast %218 : vector<8x128xf32> to vector<1x8x128xf32>
    tpu.vector_store %arg15[%c1_102, %c0_103, %c0_104], %221 {strides = array<i32>} : memref<2x8x128xf32, #tpu.memory_space<vmem>>, vector<1x8x128xf32>,
    %222 = arith.truncf %218 : vector<8x128xf32> to vector<8x128xbf16>
    %223 = arith.index_cast %c3_i32 : i32 to index
    %c0_105 = arith.constant 0 : index
    %c0_106 = arith.constant 0 : index
    %224 = vector.load %arg14[%223, %c0_105, %c0_106] : memref<8x8x128xbf16, #tpu.memory_space<vmem>>, vector<1x8x128xbf16>
    %225 = vector.shape_cast %224 : vector<1x8x128xbf16> to vector<8x128xbf16>
    %226 = vector.shape_cast %222 : vector<8x128xbf16> to vector<1x8x128xbf16>
    tpu.vector_store %arg14[%223, %c0_105, %c0_106], %226 {strides = array<i32>} : memref<8x8x128xbf16, #tpu.memory_space<vmem>>, vector<1x8x128xbf16>,
    %c4_i32 = arith.constant 4 : i32
    %c0_107 = arith.constant 0 : index
    %c0_108 = arith.constant 0 : index
    %c0_109 = arith.constant 0 : index
    %227 = vector.load %arg15[%c0_107, %c0_108, %c0_109] : memref<2x8x128xf32, #tpu.memory_space<vmem>>, vector<1x8x128xf32>
    %228 = vector.shape_cast %227 : vector<1x8x128xf32> to vector<8x128xf32>
    %229 = arith.index_cast %c4_i32 : i32 to index
    %c0_110 = arith.constant 0 : index
    %c0_111 = arith.constant 0 : index
    %230 = vector.load %arg13[%229, %c0_110, %c0_111] : memref<8x8x256xf32, #tpu.memory_space<vmem>>, vector<1x8x256xf32>
    %231 = vector.shape_cast %230 : vector<1x8x256xf32> to vector<8x256xf32>
    %232 = arith.truncf %228 : vector<8x128xf32> to vector<8x128xbf16>
    %cst_112 = arith.constant dense<0.000000e+00> : vector<8x256xf32>
    %233 = tpu.matmul %232, %22, %cst_112 {dimension_numbers = #tpu.dot_dimension_numbers<[1], [0], [0], [1], [0, 0, 1, 1], [], []>} : vector<8x128xbf16>, vector<128x256xbf16>, vector<8x256xf32> -> vector<8x256xf32>
    %234 = arith.addf %231, %233 : vector<8x256xf32>
    %235 = vector.extract_strided_slice %234 {offsets = [0, 0], sizes = [8, 128], strides = [1, 1]} : vector<8x256xf32> to vector<8x128xf32>
    %236 = arith.negf %235 : vector<8x128xf32>
    %237 = math.exp %236 : vector<8x128xf32>
    %cst_113 = arith.constant 1.000000e+00 : f32
    %238 = vector.broadcast %cst_113 : f32 to vector<8x128xf32>
    %239 = arith.addf %238, %237 : vector<8x128xf32>
    %240 = arith.divf %238, %239 : vector<8x128xf32>
    %241 = vector.extract_strided_slice %234 {offsets = [0, 128], sizes = [8, 128], strides = [1, 1]} : vector<8x256xf32> to vector<8x128xf32>
    %242 = math.tanh %241 : vector<8x128xf32>
    %243 = arith.subf %228, %242 : vector<8x128xf32>
    %244 = arith.mulf %240, %243 : vector<8x128xf32>
    %245 = arith.addf %242, %244 : vector<8x128xf32>
    %c0_114 = arith.constant 0 : index
    %c0_115 = arith.constant 0 : index
    %c0_116 = arith.constant 0 : index
    %246 = vector.load %arg15[%c0_114, %c0_115, %c0_116] : memref<2x8x128xf32, #tpu.memory_space<vmem>>, vector<1x8x128xf32>
    %247 = vector.shape_cast %246 : vector<1x8x128xf32> to vector<8x128xf32>
    %248 = vector.shape_cast %245 : vector<8x128xf32> to vector<1x8x128xf32>
    tpu.vector_store %arg15[%c0_114, %c0_115, %c0_116], %248 {strides = array<i32>} : memref<2x8x128xf32, #tpu.memory_space<vmem>>, vector<1x8x128xf32>,
    %c1_117 = arith.constant 1 : index
    %c0_118 = arith.constant 0 : index
    %c0_119 = arith.constant 0 : index
    %249 = vector.load %arg15[%c1_117, %c0_118, %c0_119] : memref<2x8x128xf32, #tpu.memory_space<vmem>>, vector<1x8x128xf32>
    %250 = vector.shape_cast %249 : vector<1x8x128xf32> to vector<8x128xf32>
    %251 = arith.truncf %245 : vector<8x128xf32> to vector<8x128xbf16>
    %cst_120 = arith.constant dense<0.000000e+00> : vector<8x256xf32>
    %252 = tpu.matmul %251, %26, %cst_120 {dimension_numbers = #tpu.dot_dimension_numbers<[1], [0], [0], [1], [0, 0, 1, 1], [], []>} : vector<8x128xbf16>, vector<128x256xbf16>, vector<8x256xf32> -> vector<8x256xf32>
    %253 = arith.truncf %250 : vector<8x128xf32> to vector<8x128xbf16>
    %cst_121 = arith.constant dense<0.000000e+00> : vector<8x256xf32>
    %254 = tpu.matmul %253, %25, %cst_121 {dimension_numbers = #tpu.dot_dimension_numbers<[1], [0], [0], [1], [0, 0, 1, 1], [], []>} : vector<8x128xbf16>, vector<128x256xbf16>, vector<8x256xf32> -> vector<8x256xf32>
    %255 = arith.addf %252, %254 : vector<8x256xf32>
    %256 = arith.addf %255, %30 : vector<8x256xf32>
    %257 = vector.extract_strided_slice %256 {offsets = [0, 0], sizes = [8, 128], strides = [1, 1]} : vector<8x256xf32> to vector<8x128xf32>
    %258 = arith.negf %257 : vector<8x128xf32>
    %259 = math.exp %258 : vector<8x128xf32>
    %cst_122 = arith.constant 1.000000e+00 : f32
    %260 = vector.broadcast %cst_122 : f32 to vector<8x128xf32>
    %261 = arith.addf %260, %259 : vector<8x128xf32>
    %262 = arith.divf %260, %261 : vector<8x128xf32>
    %263 = vector.extract_strided_slice %256 {offsets = [0, 128], sizes = [8, 128], strides = [1, 1]} : vector<8x256xf32> to vector<8x128xf32>
    %264 = math.tanh %263 : vector<8x128xf32>
    %265 = arith.subf %250, %264 : vector<8x128xf32>
    %266 = arith.mulf %262, %265 : vector<8x128xf32>
    %267 = arith.addf %264, %266 : vector<8x128xf32>
    %c1_123 = arith.constant 1 : index
    %c0_124 = arith.constant 0 : index
    %c0_125 = arith.constant 0 : index
    %268 = vector.load %arg15[%c1_123, %c0_124, %c0_125] : memref<2x8x128xf32, #tpu.memory_space<vmem>>, vector<1x8x128xf32>
    %269 = vector.shape_cast %268 : vector<1x8x128xf32> to vector<8x128xf32>
    %270 = vector.shape_cast %267 : vector<8x128xf32> to vector<1x8x128xf32>
    tpu.vector_store %arg15[%c1_123, %c0_124, %c0_125], %270 {strides = array<i32>} : memref<2x8x128xf32, #tpu.memory_space<vmem>>, vector<1x8x128xf32>,
    %271 = arith.truncf %267 : vector<8x128xf32> to vector<8x128xbf16>
    %272 = arith.index_cast %c4_i32 : i32 to index
    %c0_126 = arith.constant 0 : index
    %c0_127 = arith.constant 0 : index
    %273 = vector.load %arg14[%272, %c0_126, %c0_127] : memref<8x8x128xbf16, #tpu.memory_space<vmem>>, vector<1x8x128xbf16>
    %274 = vector.shape_cast %273 : vector<1x8x128xbf16> to vector<8x128xbf16>
    %275 = vector.shape_cast %271 : vector<8x128xbf16> to vector<1x8x128xbf16>
    tpu.vector_store %arg14[%272, %c0_126, %c0_127], %275 {strides = array<i32>} : memref<8x8x128xbf16, #tpu.memory_space<vmem>>, vector<1x8x128xbf16>,
    %c5_i32 = arith.constant 5 : i32
    %c0_128 = arith.constant 0 : index
    %c0_129 = arith.constant 0 : index
    %c0_130 = arith.constant 0 : index
    %276 = vector.load %arg15[%c0_128, %c0_129, %c0_130] : memref<2x8x128xf32, #tpu.memory_space<vmem>>, vector<1x8x128xf32>
    %277 = vector.shape_cast %276 : vector<1x8x128xf32> to vector<8x128xf32>
    %278 = arith.index_cast %c5_i32 : i32 to index
    %c0_131 = arith.constant 0 : index
    %c0_132 = arith.constant 0 : index
    %279 = vector.load %arg13[%278, %c0_131, %c0_132] : memref<8x8x256xf32, #tpu.memory_space<vmem>>, vector<1x8x256xf32>
    %280 = vector.shape_cast %279 : vector<1x8x256xf32> to vector<8x256xf32>
    %281 = arith.truncf %277 : vector<8x128xf32> to vector<8x128xbf16>
    %cst_133 = arith.constant dense<0.000000e+00> : vector<8x256xf32>
    %282 = tpu.matmul %281, %22, %cst_133 {dimension_numbers = #tpu.dot_dimension_numbers<[1], [0], [0], [1], [0, 0, 1, 1], [], []>} : vector<8x128xbf16>, vector<128x256xbf16>, vector<8x256xf32> -> vector<8x256xf32>
    %283 = arith.addf %280, %282 : vector<8x256xf32>
    %284 = vector.extract_strided_slice %283 {offsets = [0, 0], sizes = [8, 128], strides = [1, 1]} : vector<8x256xf32> to vector<8x128xf32>
    %285 = arith.negf %284 : vector<8x128xf32>
    %286 = math.exp %285 : vector<8x128xf32>
    %cst_134 = arith.constant 1.000000e+00 : f32
    %287 = vector.broadcast %cst_134 : f32 to vector<8x128xf32>
    %288 = arith.addf %287, %286 : vector<8x128xf32>
    %289 = arith.divf %287, %288 : vector<8x128xf32>
    %290 = vector.extract_strided_slice %283 {offsets = [0, 128], sizes = [8, 128], strides = [1, 1]} : vector<8x256xf32> to vector<8x128xf32>
    %291 = math.tanh %290 : vector<8x128xf32>
    %292 = arith.subf %277, %291 : vector<8x128xf32>
    %293 = arith.mulf %289, %292 : vector<8x128xf32>
    %294 = arith.addf %291, %293 : vector<8x128xf32>
    %c0_135 = arith.constant 0 : index
    %c0_136 = arith.constant 0 : index
    %c0_137 = arith.constant 0 : index
    %295 = vector.load %arg15[%c0_135, %c0_136, %c0_137] : memref<2x8x128xf32, #tpu.memory_space<vmem>>, vector<1x8x128xf32>
    %296 = vector.shape_cast %295 : vector<1x8x128xf32> to vector<8x128xf32>
    %297 = vector.shape_cast %294 : vector<8x128xf32> to vector<1x8x128xf32>
    tpu.vector_store %arg15[%c0_135, %c0_136, %c0_137], %297 {strides = array<i32>} : memref<2x8x128xf32, #tpu.memory_space<vmem>>, vector<1x8x128xf32>,
    %c1_138 = arith.constant 1 : index
    %c0_139 = arith.constant 0 : index
    %c0_140 = arith.constant 0 : index
    %298 = vector.load %arg15[%c1_138, %c0_139, %c0_140] : memref<2x8x128xf32, #tpu.memory_space<vmem>>, vector<1x8x128xf32>
    %299 = vector.shape_cast %298 : vector<1x8x128xf32> to vector<8x128xf32>
    %300 = arith.truncf %294 : vector<8x128xf32> to vector<8x128xbf16>
    %cst_141 = arith.constant dense<0.000000e+00> : vector<8x256xf32>
    %301 = tpu.matmul %300, %26, %cst_141 {dimension_numbers = #tpu.dot_dimension_numbers<[1], [0], [0], [1], [0, 0, 1, 1], [], []>} : vector<8x128xbf16>, vector<128x256xbf16>, vector<8x256xf32> -> vector<8x256xf32>
    %302 = arith.truncf %299 : vector<8x128xf32> to vector<8x128xbf16>
    %cst_142 = arith.constant dense<0.000000e+00> : vector<8x256xf32>
    %303 = tpu.matmul %302, %25, %cst_142 {dimension_numbers = #tpu.dot_dimension_numbers<[1], [0], [0], [1], [0, 0, 1, 1], [], []>} : vector<8x128xbf16>, vector<128x256xbf16>, vector<8x256xf32> -> vector<8x256xf32>
    %304 = arith.addf %301, %303 : vector<8x256xf32>
    %305 = arith.addf %304, %30 : vector<8x256xf32>
    %306 = vector.extract_strided_slice %305 {offsets = [0, 0], sizes = [8, 128], strides = [1, 1]} : vector<8x256xf32> to vector<8x128xf32>
    %307 = arith.negf %306 : vector<8x128xf32>
    %308 = math.exp %307 : vector<8x128xf32>
    %cst_143 = arith.constant 1.000000e+00 : f32
    %309 = vector.broadcast %cst_143 : f32 to vector<8x128xf32>
    %310 = arith.addf %309, %308 : vector<8x128xf32>
    %311 = arith.divf %309, %310 : vector<8x128xf32>
    %312 = vector.extract_strided_slice %305 {offsets = [0, 128], sizes = [8, 128], strides = [1, 1]} : vector<8x256xf32> to vector<8x128xf32>
    %313 = math.tanh %312 : vector<8x128xf32>
    %314 = arith.subf %299, %313 : vector<8x128xf32>
    %315 = arith.mulf %311, %314 : vector<8x128xf32>
    %316 = arith.addf %313, %315 : vector<8x128xf32>
    %c1_144 = arith.constant 1 : index
    %c0_145 = arith.constant 0 : index
    %c0_146 = arith.constant 0 : index
    %317 = vector.load %arg15[%c1_144, %c0_145, %c0_146] : memref<2x8x128xf32, #tpu.memory_space<vmem>>, vector<1x8x128xf32>
    %318 = vector.shape_cast %317 : vector<1x8x128xf32> to vector<8x128xf32>
    %319 = vector.shape_cast %316 : vector<8x128xf32> to vector<1x8x128xf32>
    tpu.vector_store %arg15[%c1_144, %c0_145, %c0_146], %319 {strides = array<i32>} : memref<2x8x128xf32, #tpu.memory_space<vmem>>, vector<1x8x128xf32>,
    %320 = arith.truncf %316 : vector<8x128xf32> to vector<8x128xbf16>
    %321 = arith.index_cast %c5_i32 : i32 to index
    %c0_147 = arith.constant 0 : index
    %c0_148 = arith.constant 0 : index
    %322 = vector.load %arg14[%321, %c0_147, %c0_148] : memref<8x8x128xbf16, #tpu.memory_space<vmem>>, vector<1x8x128xbf16>
    %323 = vector.shape_cast %322 : vector<1x8x128xbf16> to vector<8x128xbf16>
    %324 = vector.shape_cast %320 : vector<8x128xbf16> to vector<1x8x128xbf16>
    tpu.vector_store %arg14[%321, %c0_147, %c0_148], %324 {strides = array<i32>} : memref<8x8x128xbf16, #tpu.memory_space<vmem>>, vector<1x8x128xbf16>,
    %c6_i32 = arith.constant 6 : i32
    %c0_149 = arith.constant 0 : index
    %c0_150 = arith.constant 0 : index
    %c0_151 = arith.constant 0 : index
    %325 = vector.load %arg15[%c0_149, %c0_150, %c0_151] : memref<2x8x128xf32, #tpu.memory_space<vmem>>, vector<1x8x128xf32>
    %326 = vector.shape_cast %325 : vector<1x8x128xf32> to vector<8x128xf32>
    %327 = arith.index_cast %c6_i32 : i32 to index
    %c0_152 = arith.constant 0 : index
    %c0_153 = arith.constant 0 : index
    %328 = vector.load %arg13[%327, %c0_152, %c0_153] : memref<8x8x256xf32, #tpu.memory_space<vmem>>, vector<1x8x256xf32>
    %329 = vector.shape_cast %328 : vector<1x8x256xf32> to vector<8x256xf32>
    %330 = arith.truncf %326 : vector<8x128xf32> to vector<8x128xbf16>
    %cst_154 = arith.constant dense<0.000000e+00> : vector<8x256xf32>
    %331 = tpu.matmul %330, %22, %cst_154 {dimension_numbers = #tpu.dot_dimension_numbers<[1], [0], [0], [1], [0, 0, 1, 1], [], []>} : vector<8x128xbf16>, vector<128x256xbf16>, vector<8x256xf32> -> vector<8x256xf32>
    %332 = arith.addf %329, %331 : vector<8x256xf32>
    %333 = vector.extract_strided_slice %332 {offsets = [0, 0], sizes = [8, 128], strides = [1, 1]} : vector<8x256xf32> to vector<8x128xf32>
    %334 = arith.negf %333 : vector<8x128xf32>
    %335 = math.exp %334 : vector<8x128xf32>
    %cst_155 = arith.constant 1.000000e+00 : f32
    %336 = vector.broadcast %cst_155 : f32 to vector<8x128xf32>
    %337 = arith.addf %336, %335 : vector<8x128xf32>
    %338 = arith.divf %336, %337 : vector<8x128xf32>
    %339 = vector.extract_strided_slice %332 {offsets = [0, 128], sizes = [8, 128], strides = [1, 1]} : vector<8x256xf32> to vector<8x128xf32>
    %340 = math.tanh %339 : vector<8x128xf32>
    %341 = arith.subf %326, %340 : vector<8x128xf32>
    %342 = arith.mulf %338, %341 : vector<8x128xf32>
    %343 = arith.addf %340, %342 : vector<8x128xf32>
    %c0_156 = arith.constant 0 : index
    %c0_157 = arith.constant 0 : index
    %c0_158 = arith.constant 0 : index
    %344 = vector.load %arg15[%c0_156, %c0_157, %c0_158] : memref<2x8x128xf32, #tpu.memory_space<vmem>>, vector<1x8x128xf32>
    %345 = vector.shape_cast %344 : vector<1x8x128xf32> to vector<8x128xf32>
    %346 = vector.shape_cast %343 : vector<8x128xf32> to vector<1x8x128xf32>
    tpu.vector_store %arg15[%c0_156, %c0_157, %c0_158], %346 {strides = array<i32>} : memref<2x8x128xf32, #tpu.memory_space<vmem>>, vector<1x8x128xf32>,
    %c1_159 = arith.constant 1 : index
    %c0_160 = arith.constant 0 : index
    %c0_161 = arith.constant 0 : index
    %347 = vector.load %arg15[%c1_159, %c0_160, %c0_161] : memref<2x8x128xf32, #tpu.memory_space<vmem>>, vector<1x8x128xf32>
    %348 = vector.shape_cast %347 : vector<1x8x128xf32> to vector<8x128xf32>
    %349 = arith.truncf %343 : vector<8x128xf32> to vector<8x128xbf16>
    %cst_162 = arith.constant dense<0.000000e+00> : vector<8x256xf32>
    %350 = tpu.matmul %349, %26, %cst_162 {dimension_numbers = #tpu.dot_dimension_numbers<[1], [0], [0], [1], [0, 0, 1, 1], [], []>} : vector<8x128xbf16>, vector<128x256xbf16>, vector<8x256xf32> -> vector<8x256xf32>
    %351 = arith.truncf %348 : vector<8x128xf32> to vector<8x128xbf16>
    %cst_163 = arith.constant dense<0.000000e+00> : vector<8x256xf32>
    %352 = tpu.matmul %351, %25, %cst_163 {dimension_numbers = #tpu.dot_dimension_numbers<[1], [0], [0], [1], [0, 0, 1, 1], [], []>} : vector<8x128xbf16>, vector<128x256xbf16>, vector<8x256xf32> -> vector<8x256xf32>
    %353 = arith.addf %350, %352 : vector<8x256xf32>
    %354 = arith.addf %353, %30 : vector<8x256xf32>
    %355 = vector.extract_strided_slice %354 {offsets = [0, 0], sizes = [8, 128], strides = [1, 1]} : vector<8x256xf32> to vector<8x128xf32>
    %356 = arith.negf %355 : vector<8x128xf32>
    %357 = math.exp %356 : vector<8x128xf32>
    %cst_164 = arith.constant 1.000000e+00 : f32
    %358 = vector.broadcast %cst_164 : f32 to vector<8x128xf32>
    %359 = arith.addf %358, %357 : vector<8x128xf32>
    %360 = arith.divf %358, %359 : vector<8x128xf32>
    %361 = vector.extract_strided_slice %354 {offsets = [0, 128], sizes = [8, 128], strides = [1, 1]} : vector<8x256xf32> to vector<8x128xf32>
    %362 = math.tanh %361 : vector<8x128xf32>
    %363 = arith.subf %348, %362 : vector<8x128xf32>
    %364 = arith.mulf %360, %363 : vector<8x128xf32>
    %365 = arith.addf %362, %364 : vector<8x128xf32>
    %c1_165 = arith.constant 1 : index
    %c0_166 = arith.constant 0 : index
    %c0_167 = arith.constant 0 : index
    %366 = vector.load %arg15[%c1_165, %c0_166, %c0_167] : memref<2x8x128xf32, #tpu.memory_space<vmem>>, vector<1x8x128xf32>
    %367 = vector.shape_cast %366 : vector<1x8x128xf32> to vector<8x128xf32>
    %368 = vector.shape_cast %365 : vector<8x128xf32> to vector<1x8x128xf32>
    tpu.vector_store %arg15[%c1_165, %c0_166, %c0_167], %368 {strides = array<i32>} : memref<2x8x128xf32, #tpu.memory_space<vmem>>, vector<1x8x128xf32>,
    %369 = arith.truncf %365 : vector<8x128xf32> to vector<8x128xbf16>
    %370 = arith.index_cast %c6_i32 : i32 to index
    %c0_168 = arith.constant 0 : index
    %c0_169 = arith.constant 0 : index
    %371 = vector.load %arg14[%370, %c0_168, %c0_169] : memref<8x8x128xbf16, #tpu.memory_space<vmem>>, vector<1x8x128xbf16>
    %372 = vector.shape_cast %371 : vector<1x8x128xbf16> to vector<8x128xbf16>
    %373 = vector.shape_cast %369 : vector<8x128xbf16> to vector<1x8x128xbf16>
    tpu.vector_store %arg14[%370, %c0_168, %c0_169], %373 {strides = array<i32>} : memref<8x8x128xbf16, #tpu.memory_space<vmem>>, vector<1x8x128xbf16>,
    %c7_i32 = arith.constant 7 : i32
    %c0_170 = arith.constant 0 : index
    %c0_171 = arith.constant 0 : index
    %c0_172 = arith.constant 0 : index
    %374 = vector.load %arg15[%c0_170, %c0_171, %c0_172] : memref<2x8x128xf32, #tpu.memory_space<vmem>>, vector<1x8x128xf32>
    %375 = vector.shape_cast %374 : vector<1x8x128xf32> to vector<8x128xf32>
    %376 = arith.index_cast %c7_i32 : i32 to index
    %c0_173 = arith.constant 0 : index
    %c0_174 = arith.constant 0 : index
    %377 = vector.load %arg13[%376, %c0_173, %c0_174] : memref<8x8x256xf32, #tpu.memory_space<vmem>>, vector<1x8x256xf32>
    %378 = vector.shape_cast %377 : vector<1x8x256xf32> to vector<8x256xf32>
    %379 = arith.truncf %375 : vector<8x128xf32> to vector<8x128xbf16>
    %cst_175 = arith.constant dense<0.000000e+00> : vector<8x256xf32>
    %380 = tpu.matmul %379, %22, %cst_175 {dimension_numbers = #tpu.dot_dimension_numbers<[1], [0], [0], [1], [0, 0, 1, 1], [], []>} : vector<8x128xbf16>, vector<128x256xbf16>, vector<8x256xf32> -> vector<8x256xf32>
    %381 = arith.addf %378, %380 : vector<8x256xf32>
    %382 = vector.extract_strided_slice %381 {offsets = [0, 0], sizes = [8, 128], strides = [1, 1]} : vector<8x256xf32> to vector<8x128xf32>
    %383 = arith.negf %382 : vector<8x128xf32>
    %384 = math.exp %383 : vector<8x128xf32>
    %cst_176 = arith.constant 1.000000e+00 : f32
    %385 = vector.broadcast %cst_176 : f32 to vector<8x128xf32>
    %386 = arith.addf %385, %384 : vector<8x128xf32>
    %387 = arith.divf %385, %386 : vector<8x128xf32>
    %388 = vector.extract_strided_slice %381 {offsets = [0, 128], sizes = [8, 128], strides = [1, 1]} : vector<8x256xf32> to vector<8x128xf32>
    %389 = math.tanh %388 : vector<8x128xf32>
    %390 = arith.subf %375, %389 : vector<8x128xf32>
    %391 = arith.mulf %387, %390 : vector<8x128xf32>
    %392 = arith.addf %389, %391 : vector<8x128xf32>
    %c0_177 = arith.constant 0 : index
    %c0_178 = arith.constant 0 : index
    %c0_179 = arith.constant 0 : index
    %393 = vector.load %arg15[%c0_177, %c0_178, %c0_179] : memref<2x8x128xf32, #tpu.memory_space<vmem>>, vector<1x8x128xf32>
    %394 = vector.shape_cast %393 : vector<1x8x128xf32> to vector<8x128xf32>
    %395 = vector.shape_cast %392 : vector<8x128xf32> to vector<1x8x128xf32>
    tpu.vector_store %arg15[%c0_177, %c0_178, %c0_179], %395 {strides = array<i32>} : memref<2x8x128xf32, #tpu.memory_space<vmem>>, vector<1x8x128xf32>,
    %c1_180 = arith.constant 1 : index
    %c0_181 = arith.constant 0 : index
    %c0_182 = arith.constant 0 : index
    %396 = vector.load %arg15[%c1_180, %c0_181, %c0_182] : memref<2x8x128xf32, #tpu.memory_space<vmem>>, vector<1x8x128xf32>
    %397 = vector.shape_cast %396 : vector<1x8x128xf32> to vector<8x128xf32>
    %398 = arith.truncf %392 : vector<8x128xf32> to vector<8x128xbf16>
    %cst_183 = arith.constant dense<0.000000e+00> : vector<8x256xf32>
    %399 = tpu.matmul %398, %26, %cst_183 {dimension_numbers = #tpu.dot_dimension_numbers<[1], [0], [0], [1], [0, 0, 1, 1], [], []>} : vector<8x128xbf16>, vector<128x256xbf16>, vector<8x256xf32> -> vector<8x256xf32>
    %400 = arith.truncf %397 : vector<8x128xf32> to vector<8x128xbf16>
    %cst_184 = arith.constant dense<0.000000e+00> : vector<8x256xf32>
    %401 = tpu.matmul %400, %25, %cst_184 {dimension_numbers = #tpu.dot_dimension_numbers<[1], [0], [0], [1], [0, 0, 1, 1], [], []>} : vector<8x128xbf16>, vector<128x256xbf16>, vector<8x256xf32> -> vector<8x256xf32>
    %402 = arith.addf %399, %401 : vector<8x256xf32>
    %403 = arith.addf %402, %30 : vector<8x256xf32>
    %404 = vector.extract_strided_slice %403 {offsets = [0, 0], sizes = [8, 128], strides = [1, 1]} : vector<8x256xf32> to vector<8x128xf32>
    %405 = arith.negf %404 : vector<8x128xf32>
    %406 = math.exp %405 : vector<8x128xf32>
    %cst_185 = arith.constant 1.000000e+00 : f32
    %407 = vector.broadcast %cst_185 : f32 to vector<8x128xf32>
    %408 = arith.addf %407, %406 : vector<8x128xf32>
    %409 = arith.divf %407, %408 : vector<8x128xf32>
    %410 = vector.extract_strided_slice %403 {offsets = [0, 128], sizes = [8, 128], strides = [1, 1]} : vector<8x256xf32> to vector<8x128xf32>
    %411 = math.tanh %410 : vector<8x128xf32>
    %412 = arith.subf %397, %411 : vector<8x128xf32>
    %413 = arith.mulf %409, %412 : vector<8x128xf32>
    %414 = arith.addf %411, %413 : vector<8x128xf32>
    %c1_186 = arith.constant 1 : index
    %c0_187 = arith.constant 0 : index
    %c0_188 = arith.constant 0 : index
    %415 = vector.load %arg15[%c1_186, %c0_187, %c0_188] : memref<2x8x128xf32, #tpu.memory_space<vmem>>, vector<1x8x128xf32>
    %416 = vector.shape_cast %415 : vector<1x8x128xf32> to vector<8x128xf32>
    %417 = vector.shape_cast %414 : vector<8x128xf32> to vector<1x8x128xf32>
    tpu.vector_store %arg15[%c1_186, %c0_187, %c0_188], %417 {strides = array<i32>} : memref<2x8x128xf32, #tpu.memory_space<vmem>>, vector<1x8x128xf32>,
    %418 = arith.truncf %414 : vector<8x128xf32> to vector<8x128xbf16>
    %419 = arith.index_cast %c7_i32 : i32 to index
    %c0_189 = arith.constant 0 : index
    %c0_190 = arith.constant 0 : index
    %420 = vector.load %arg14[%419, %c0_189, %c0_190] : memref<8x8x128xbf16, #tpu.memory_space<vmem>>, vector<1x8x128xbf16>
    %421 = vector.shape_cast %420 : vector<1x8x128xbf16> to vector<8x128xbf16>
    %422 = vector.shape_cast %418 : vector<8x128xbf16> to vector<1x8x128xbf16>
    tpu.vector_store %arg14[%419, %c0_189, %c0_190], %422 {strides = array<i32>} : memref<8x8x128xbf16, #tpu.memory_space<vmem>>, vector<1x8x128xbf16>,
    %c8_i32 = arith.constant 8 : i32
    %c0_i32_191 = arith.constant 0 : i32
    %423 = arith.cmpi eq, %arg0, %c0_i32_191 : i32
    %424 = arith.extui %423 : i1 to i32
    %c0_i32_192 = arith.constant 0 : i32
    %425 = arith.cmpi ne, %424, %c0_i32_192 : i32
    scf.if %425 {
      %c0_209 = arith.constant 0 : index
      %c0_210 = arith.constant 0 : index
      %c0_211 = arith.constant 0 : index
      %442 = vector.load %arg15[%c0_209, %c0_210, %c0_211] : memref<2x8x128xf32, #tpu.memory_space<vmem>>, vector<2x8x128xf32>
      %c0_212 = arith.constant 0 : index
      %c0_213 = arith.constant 0 : index
      %c0_214 = arith.constant 0 : index
      %443 = vector.load %arg12[%c0_212, %c0_213, %c0_214] : memref<2x8x128xf32, #tpu.memory_space<vmem>>, vector<2x8x128xf32>
      tpu.vector_store %arg12[%c0_212, %c0_213, %c0_214], %442 {strides = array<i32>} : memref<2x8x128xf32, #tpu.memory_space<vmem>>, vector<2x8x128xf32>,
    } else {
    }
    %c0_193 = arith.constant 0 : index
    %c0_194 = arith.constant 0 : index
    %c0_195 = arith.constant 0 : index
    %426 = vector.load %arg14[%c0_193, %c0_194, %c0_195] : memref<8x8x128xbf16, #tpu.memory_space<vmem>>, vector<8x8x128xbf16>
    %427 = vector.shape_cast %426 : vector<8x8x128xbf16> to vector<64x128xbf16>
    %c0_196 = arith.constant 0 : index
    %c0_197 = arith.constant 0 : index
    %428 = vector.load %arg7[%c0_196, %c0_197] : memref<128x128xbf16, #tpu.memory_space<vmem>>, vector<128x128xbf16>
    %cst_198 = arith.constant dense<0.000000e+00> : vector<64x128xf32>
    %429 = tpu.matmul %427, %428, %cst_198 {dimension_numbers = #tpu.dot_dimension_numbers<[1], [0], [0], [1], [0, 0, 1, 1], [], []>} : vector<64x128xbf16>, vector<128x128xbf16>, vector<64x128xf32> -> vector<64x128xf32>
    %c0_199 = arith.constant 0 : index
    %c0_200 = arith.constant 0 : index
    %430 = vector.load %arg8[%c0_199, %c0_200] : memref<1x128xf32, #tpu.memory_space<vmem>>, vector<1x128xf32>
    %431 = vector.broadcast %430 : vector<1x128xf32> to vector<64x128xf32>
    %432 = arith.addf %429, %431 : vector<64x128xf32>
    %433 = math.tanh %432 : vector<64x128xf32>
    %434 = arith.truncf %433 : vector<64x128xf32> to vector<64x128xbf16>
    %c0_201 = arith.constant 0 : index
    %c0_202 = arith.constant 0 : index
    %435 = vector.load %arg9[%c0_201, %c0_202] : memref<128x256xbf16, #tpu.memory_space<vmem>>, vector<128x256xbf16>
    %cst_203 = arith.constant dense<0.000000e+00> : vector<64x256xf32>
    %436 = tpu.matmul %434, %435, %cst_203 {dimension_numbers = #tpu.dot_dimension_numbers<[1], [0], [0], [1], [0, 0, 1, 1], [], []>} : vector<64x128xbf16>, vector<128x256xbf16>, vector<64x256xf32> -> vector<64x256xf32>
    %c0_204 = arith.constant 0 : index
    %c0_205 = arith.constant 0 : index
    %437 = vector.load %arg10[%c0_204, %c0_205] : memref<1x256xf32, #tpu.memory_space<vmem>>, vector<1x256xf32>
    %438 = vector.broadcast %437 : vector<1x256xf32> to vector<64x256xf32>
    %439 = arith.addf %436, %438 : vector<64x256xf32>
    %440 = vector.shape_cast %439 : vector<64x256xf32> to vector<8x8x256xf32>
    %c0_206 = arith.constant 0 : index
    %c0_207 = arith.constant 0 : index
    %c0_208 = arith.constant 0 : index
    %441 = vector.load %arg11[%c0_206, %c0_207, %c0_208] : memref<8x8x256xf32, #tpu.memory_space<vmem>>, vector<8x8x256xf32>
    tpu.vector_store %arg11[%c0_206, %c0_207, %c0_208], %440 {strides = array<i32>} : memref<8x8x256xf32, #tpu.memory_space<vmem>>, vector<8x8x256xf32>,
    return
  }
  func.func @transform_0(%arg0: i32) -> (i32, i32, i32) {
    %c0_i32 = arith.constant 0 : i32
    %c0_i32_0 = arith.constant 0 : i32
    %c0_i32_1 = arith.constant 0 : i32
    return %arg0, %c0_i32, %c0_i32_0 : i32, i32, i32
  }
  func.func @transform_1(%arg0: i32) -> (i32, i32, i32) {
    %c0_i32 = arith.constant 0 : i32
    %c0_i32_0 = arith.constant 0 : i32
    %c0_i32_1 = arith.constant 0 : i32
    %c0_i32_2 = arith.constant 0 : i32
    return %c0_i32, %c0_i32_0, %c0_i32_1 : i32, i32, i32
  }
  func.func @transform_2(%arg0: i32) -> (i32, i32) {
    %c0_i32 = arith.constant 0 : i32
    %c0_i32_0 = arith.constant 0 : i32
    %c0_i32_1 = arith.constant 0 : i32
    return %c0_i32, %c0_i32_0 : i32, i32
  }
  func.func @transform_3(%arg0: i32) -> (i32, i32) {
    %c0_i32 = arith.constant 0 : i32
    %c0_i32_0 = arith.constant 0 : i32
    %c0_i32_1 = arith.constant 0 : i32
    return %c0_i32, %c0_i32_0 : i32, i32
  }
  func.func @transform_4(%arg0: i32) -> (i32, i32, i32) {
    %c0_i32 = arith.constant 0 : i32
    %c0_i32_0 = arith.constant 0 : i32
    %c0_i32_1 = arith.constant 0 : i32
    %c0_i32_2 = arith.constant 0 : i32
    return %c0_i32, %c0_i32_0, %c0_i32_1 : i32, i32, i32
  }
  func.func @transform_5(%arg0: i32) -> (i32, i32, i32) {
    %c0_i32 = arith.constant 0 : i32
    %c0_i32_0 = arith.constant 0 : i32
    %c0_i32_1 = arith.constant 0 : i32
    %c0_i32_2 = arith.constant 0 : i32
    return %c0_i32, %c0_i32_0, %c0_i32_1 : i32, i32, i32
  }
  func.func @transform_6(%arg0: i32) -> (i32, i32) {
    %c0_i32 = arith.constant 0 : i32
    %c0_i32_0 = arith.constant 0 : i32
    %c0_i32_1 = arith.constant 0 : i32
    return %c0_i32, %c0_i32_0 : i32, i32
  }
  func.func @transform_7(%arg0: i32) -> (i32, i32) {
    %c0_i32 = arith.constant 0 : i32
    %c0_i32_0 = arith.constant 0 : i32
    %c0_i32_1 = arith.constant 0 : i32
    return %c0_i32, %c0_i32_0 : i32, i32
  }
  func.func @transform_8(%arg0: i32) -> (i32, i32) {
    %c0_i32 = arith.constant 0 : i32
    %c0_i32_0 = arith.constant 0 : i32
    %c0_i32_1 = arith.constant 0 : i32
    return %c0_i32, %c0_i32_0 : i32, i32
  }
  func.func @transform_9(%arg0: i32) -> (i32, i32) {
    %c0_i32 = arith.constant 0 : i32
    %c0_i32_0 = arith.constant 0 : i32
    %c0_i32_1 = arith.constant 0 : i32
    return %c0_i32, %c0_i32_0 : i32, i32
  }
  func.func @transform_10(%arg0: i32) -> (i32, i32, i32) {
    %c0_i32 = arith.constant 0 : i32
    %c0_i32_0 = arith.constant 0 : i32
    %c0_i32_1 = arith.constant 0 : i32
    return %arg0, %c0_i32, %c0_i32_0 : i32, i32, i32
  }
  func.func @transform_11(%arg0: i32) -> (i32, i32, i32) {
    %c0_i32 = arith.constant 0 : i32
    %c0_i32_0 = arith.constant 0 : i32
    %c0_i32_1 = arith.constant 0 : i32
    %c0_i32_2 = arith.constant 0 : i32
    return %c0_i32, %c0_i32_0, %c0_i32_1 : i32, i32, i32
  }
}

</mosaic_0001>

<llo_original>
// kernel: net_forward_seq.1
$region0: #{net_forward_seq.1}
  #allocation0 [shape = 'u32[]', space=smem, size = 0x4, offset = 0x4, fixed_abs, tag = 'smem constant byte address 0x4 - core index']
  #allocation1 [shape = 'u32[144,128]{1,0:T(1,128)}', space=vmem, size = 0x12000, scoped, tag = 'internal scratch']
  #allocation2 [shape = 'f32[8,8,256]{2,1,0:T(8,128)}', space=vmem, size = 0x10000, scoped, tag = 'scratch operand']
  #allocation3 [shape = 'bf16[8,8,128]{2,1,0:T(8,128)(2,1)}', space=vmem, size = 0x4000, scoped, tag = 'scratch operand']
  #allocation4 [shape = 'f32[2,8,128]{2,1,0:T(8,128)}', space=vmem, size = 0x2000, scoped, tag = 'scratch operand']
  %s0 = inlined_call_operand.hbm [shape: f32[8,8,256], index: 0, kind: input, shape index: {}]
  %s1 = inlined_call_operand.hbm [shape: f32[2,8,128], index: 1, kind: input, shape index: {}, may-alias: {1,11}]
  %s2 = inlined_call_operand.hbm [shape: bf16[256,128], index: 2, kind: input, shape index: {}]
  %s3 = inlined_call_operand.vmem [shape: f32[1,128], index: 3, kind: input, shape index: {}]
  %s4 = inlined_call_operand.hbm [shape: bf16[2,256,256], index: 4, kind: input, shape index: {}]
  %s5 = inlined_call_operand.vmem [shape: f32[2,1,256], index: 5, kind: input, shape index: {}]
  %s6 = inlined_call_operand.hbm [shape: bf16[128,128], index: 6, kind: input, shape index: {}]
  %s7 = inlined_call_operand.vmem [shape: f32[1,128], index: 7, kind: input, shape index: {}]
  %s8 = inlined_call_operand.hbm [shape: bf16[128,256], index: 8, kind: input, shape index: {}]
  %s9 = inlined_call_operand.vmem [shape: f32[1,256], index: 9, kind: input, shape index: {}]
  %s10 = inlined_call_operand.hbm [shape: f32[8,8,256], index: 10, kind: output, shape index: {0}]
  %s11 = inlined_call_operand.hbm [shape: f32[2,8,128], index: 11, kind: output, shape index: {1}, may-alias: {1,11}]
  %12 = xla_tuple %s10, %s11
  %s13 = sld [smem:[#allocation0]]
  $region90: #{net_forward_seq.1} parent=0
    _
  %s15 = ssub.s32 1, %s13
  %s16 = scalar_select 0, %s15, %s13
  $region1: #{net_forward_seq.1} parent=0
    #allocation5 [shape = 'u8[65536]{0}', space=vmem, size = 0x10000, scoped, tag = 'input window, operand 0, single buffered']
    #allocation6 [shape = 's32[1]{0}', space=sflag, size = 0x4, scoped, tag = 'scoped memory for net_forward_seq.1']
    #allocation7 [shape = 's32[1]{0}', space=sflag, size = 0x4, scoped, tag = 'scoped memory for net_forward_seq.1']
    #allocation8 [shape = 'u8[8192]{0}', space=vmem, size = 0x2000, scoped, tag = 'input window, operand 1, single buffered']
    #allocation9 [shape = 's32[1]{0}', space=sflag, size = 0x4, scoped, tag = 'scoped memory for net_forward_seq.1']
    #allocation10 [shape = 'u8[65536]{0}', space=vmem, size = 0x10000, scoped, tag = 'input window, operand 2, single buffered']
    #allocation11 [shape = 'u8[262144]{0}', space=vmem, size = 0x40000, scoped, tag = 'input window, operand 4, single buffered']
    #allocation12 [shape = 's32[1]{0}', space=sflag, size = 0x4, scoped, tag = 'scoped memory for net_forward_seq.1']
    #allocation13 [shape = 'u8[32768]{0}', space=vmem, size = 0x8000, scoped, tag = 'input window, operand 6, single buffered']
    #allocation14 [shape = 'u8[65536]{0}', space=vmem, size = 0x10000, scoped, tag = 'input window, operand 8, single buffered']
    #allocation15 [shape = 's32[1]{0}', space=sflag, size = 0x4, scoped, tag = 'scoped memory for net_forward_seq.1']
    #allocation16 [shape = 'u8[65536]{0}', space=vmem, size = 0x10000, scoped, tag = 'output window, operand 0, single buffered']
    #allocation17 [shape = 'u8[8192]{0}', space=vmem, size = 0x2000, scoped, tag = 'output window, operand 1, single buffered']
    #allocation18 [shape = 's32[1]{0}', space=sflag, size = 0x4, scoped, tag = 'scoped memory for net_forward_seq.1']
    %17 = vsyncpa [#allocation6], 0
    %18 = vsyncpa [#allocation9], 0
    %19 = vsyncpa [#allocation12], 0
    %20 = vsyncpa [#allocation15], 0
    %21 = vsyncpa [#allocation7], 0
    %22 = vsyncpa [#allocation18], 0
    // Predicated region
    $region2: #{net_forward_seq.1} parent=1 // pred_check
      _
    $region3: #{net_forward_seq.1} parent=1 // pred_check_branch
      %24 = sbr.rel (0) target = $region5
    $region4: #{net_forward_seq.1} parent=1 // pred_region
      %s26 = ssub.s32 2048, 2048
      %27 = vsyncadd [#allocation6], %s26
      %s28 = sshll.u32 [#allocation5], 4
      %s29 = int_to_ptr.vmem [resolvable:$true] %s28
      %34 = dma.hbm_to_vmem [thread:$0]  %s0, 2048, %s29, [#allocation6], 256, 256, 16
    $region5: #{net_forward_seq.1} parent=1 // pred_fallthru
      _
    // Predicated region
    $region6: #{net_forward_seq.1} parent=1 // pred_check
      _
    $region7: #{net_forward_seq.1} parent=1 // pred_check_branch
      %36 = sbr.rel (0) target = $region9
    $region8: #{net_forward_seq.1} parent=1 // pred_region
      %s38 = ssub.s32 256, 256
      %39 = vsyncadd [#allocation9], %s38
      %s40 = sshll.u32 [#allocation8], 4
      %s41 = int_to_ptr.vmem [resolvable:$true] %s40
      %46 = dma.hbm_to_vmem [thread:$0]  %s1, 256, %s41, [#allocation9], 128, 128, 8
    $region9: #{net_forward_seq.1} parent=1 // pred_fallthru
      _
    // Predicated region
    $region10: #{net_forward_seq.1} parent=1 // pred_check
      _
    $region11: #{net_forward_seq.1} parent=1 // pred_check_branch
      %48 = sbr.rel (0) target = $region13
    $region12: #{net_forward_seq.1} parent=1 // pred_region
      %s50 = ssub.s32 2048, 2048
      %51 = vsyncadd [#allocation9], %s50
      %s52 = sshll.u32 [#allocation10], 4
      %s53 = int_to_ptr.vmem [resolvable:$true] %s52
      %58 = dma.hbm_to_vmem [thread:$0]  %s2, 2048, %s53, [#allocation9], 64, 64, 4
    $region13: #{net_forward_seq.1} parent=1 // pred_fallthru
      _
    // Predicated region
    $region14: #{net_forward_seq.1} parent=1 // pred_check
      _
    $region15: #{net_forward_seq.1} parent=1 // pred_check_branch
      %60 = sbr.rel (0) target = $region17
    $region16: #{net_forward_seq.1} parent=1 // pred_region
      _
    $region17: #{net_forward_seq.1} parent=1 // pred_fallthru
      _
    // Predicated region
    $region18: #{net_forward_seq.1} parent=1 // pred_check
      _
    $region19: #{net_forward_seq.1} parent=1 // pred_check_branch
      %62 = sbr.rel (0) target = $region21
    $region20: #{net_forward_seq.1} parent=1 // pred_region
      %s64 = ssub.s32 8192, 8192
      %65 = vsyncadd [#allocation12], %s64
      %s66 = sshll.u32 [#allocation11], 4
      %s67 = int_to_ptr.vmem [resolvable:$true] %s66
      %72 = dma.hbm_to_vmem [thread:$0]  %s4, 8192, %s67, [#allocation12], 128, 128, 8
    $region21: #{net_forward_seq.1} parent=1 // pred_fallthru
      _
    // Predicated region
    $region22: #{net_forward_seq.1} parent=1 // pred_check
      _
    $region23: #{net_forward_seq.1} parent=1 // pred_check_branch
      %74 = sbr.rel (0) target = $region25
    $region24: #{net_forward_seq.1} parent=1 // pred_region
      _
    $region25: #{net_forward_seq.1} parent=1 // pred_fallthru
      _
    // Predicated region
    $region26: #{net_forward_seq.1} parent=1 // pred_check
      _
    $region27: #{net_forward_seq.1} parent=1 // pred_check_branch
      %76 = sbr.rel (0) target = $region29
    $region28: #{net_forward_seq.1} parent=1 // pred_region
      %s78 = ssub.s32 1024, 1024
      %79 = vsyncadd [#allocation12], %s78
      %s80 = sshll.u32 [#allocation13], 4
      %s81 = int_to_ptr.vmem [resolvable:$true] %s80
      %86 = dma.hbm_to_vmem [thread:$0]  %s6, 1024, %s81, [#allocation12], 64, 64, 4
    $region29: #{net_forward_seq.1} parent=1 // pred_fallthru
      _
    // Predicated region
    $region30: #{net_forward_seq.1} parent=1 // pred_check
      _
    $region31: #{net_forward_seq.1} parent=1 // pred_check_branch
      %88 = sbr.rel (0) target = $region33
    $region32: #{net_forward_seq.1} parent=1 // pred_region
      _
    $region33: #{net_forward_seq.1} parent=1 // pred_fallthru
      _
    // Predicated region
    $region34: #{net_forward_seq.1} parent=1 // pred_check
      _
    $region35: #{net_forward_seq.1} parent=1 // pred_check_branch
      %90 = sbr.rel (0) target = $region37
    $region36: #{net_forward_seq.1} parent=1 // pred_region
      %s92 = ssub.s32 2048, 2048
      %93 = vsyncadd [#allocation15], %s92
      %s94 = sshll.u32 [#allocation14], 4
      %s95 = int_to_ptr.vmem [resolvable:$true] %s94
      %100 = dma.hbm_to_vmem [thread:$0]  %s8, 2048, %s95, [#allocation15], 128, 128, 8
    $region37: #{net_forward_seq.1} parent=1 // pred_fallthru
      _
    // Predicated region
    $region38: #{net_forward_seq.1} parent=1 // pred_check
      _
    $region39: #{net_forward_seq.1} parent=1 // pred_check_branch
      %102 = sbr.rel (0) target = $region41
    $region40: #{net_forward_seq.1} parent=1 // pred_region
      _
    $region41: #{net_forward_seq.1} parent=1 // pred_fallthru
      _
    // Predicated region
    $region42: #{net_forward_seq.1} parent=1 // pred_check
      _
    $region43: #{net_forward_seq.1} parent=1 // pred_check_branch
      %104 = sbr.rel (0) target = $region45
    $region44: #{net_forward_seq.1} parent=1 // pred_region
      %105 = dma.done [#allocation6], 2048
    $region45: #{net_forward_seq.1} parent=1 // pred_fallthru
      _
    // Predicated region
    $region46: #{net_forward_seq.1} parent=1 // pred_check
      _
    $region47: #{net_forward_seq.1} parent=1 // pred_check_branch
      %107 = sbr.rel (0) target = $region49
    $region48: #{net_forward_seq.1} parent=1 // pred_region
      %108 = dma.done [#allocation9], 256
    $region49: #{net_forward_seq.1} parent=1 // pred_fallthru
      _
    // Predicated region
    $region50: #{net_forward_seq.1} parent=1 // pred_check
      _
    $region51: #{net_forward_seq.1} parent=1 // pred_check_branch
      %110 = sbr.rel (0) target = $region53
    $region52: #{net_forward_seq.1} parent=1 // pred_region
      %111 = dma.done [#allocation9], 2048
    $region53: #{net_forward_seq.1} parent=1 // pred_fallthru
      _
    // Predicated region
    $region54: #{net_forward_seq.1} parent=1 // pred_check
      _
    $region55: #{net_forward_seq.1} parent=1 // pred_check_branch
      %113 = sbr.rel (0) target = $region57
    $region56: #{net_forward_seq.1} parent=1 // pred_region
      %114 = dma.done [#allocation12], 8192
    $region57: #{net_forward_seq.1} parent=1 // pred_fallthru
      _
    // Predicated region
    $region58: #{net_forward_seq.1} parent=1 // pred_check
      _
    $region59: #{net_forward_seq.1} parent=1 // pred_check_branch
      %116 = sbr.rel (0) target = $region61
    $region60: #{net_forward_seq.1} parent=1 // pred_region
      %117 = dma.done [#allocation12], 1024
    $region61: #{net_forward_seq.1} parent=1 // pred_fallthru
      _
    // Predicated region
    $region62: #{net_forward_seq.1} parent=1 // pred_check
      _
    $region63: #{net_forward_seq.1} parent=1 // pred_check_branch
      %119 = sbr.rel (0) target = $region65
    $region64: #{net_forward_seq.1} parent=1 // pred_region
      %120 = dma.done [#allocation15], 2048
    $region65: #{net_forward_seq.1} parent=1 // pred_fallthru
      _
    %p122 = scmp.eq.s32.totalorder 0, 0
    // Predicated region
    $region66: #{net_forward_seq.1} parent=1 // pred_check
      %p123 = pneg %p122
    $region67: #{net_forward_seq.1} parent=1 // pred_check_branch
      %125 = sbr.rel (%p123) target = $region69
    $region68: #{net_forward_seq.1} parent=1 // pred_region
      %v126 = vld [vmem:[#allocation8] sm:$0xff]
      %v127 = vld [vmem:[#allocation8 + $0x8] sm:$0xff]
      %128 = vst [vmem:[#allocation4] sm:$0xff] %v126
      %129 = vst [vmem:[#allocation4 + $0x8] sm:$0xff] %v127
    $region69: #{net_forward_seq.1} parent=1 // pred_fallthru
      _
    %v130 = vld [vmem:[#allocation5] sm:$0xff]
    %v131 = vld [vmem:[#allocation5 + $0x8] sm:$0xff]
    %v132 = vld [vmem:[#allocation5 + $0x10] sm:$0xff]
    %v133 = vld [vmem:[#allocation5 + $0x18] sm:$0xff]
    %v134 = vld [vmem:[#allocation5 + $0x20] sm:$0xff]
    %v135 = vld [vmem:[#allocation5 + $0x28] sm:$0xff]
    %v136 = vld [vmem:[#allocation5 + $0x30] sm:$0xff]
    %v137 = vld [vmem:[#allocation5 + $0x38] sm:$0xff]
    %v138 = vld [vmem:[#allocation5 + $0x40] sm:$0xff]
    %v139 = vld [vmem:[#allocation5 + $0x48] sm:$0xff]
    %v140 = vld [vmem:[#allocation5 + $0x50] sm:$0xff]
    %v141 = vld [vmem:[#allocation5 + $0x58] sm:$0xff]
    %v142 = vld [vmem:[#allocation5 + $0x60] sm:$0xff]
    %v143 = vld [vmem:[#allocation5 + $0x68] sm:$0xff]
    %v144 = vld [vmem:[#allocation5 + $0x70] sm:$0xff]
    %v145 = vld [vmem:[#allocation5 + $0x78] sm:$0xff]
    %v146 = vpack.c.bf16 %v132, %v130
    %v147 = vpack.c.bf16 %v133, %v131
    %v148 = vpack.c.bf16 %v136, %v134
    %v149 = vpack.c.bf16 %v137, %v135
    %v150 = vpack.c.bf16 %v140, %v138
    %v151 = vpack.c.bf16 %v141, %v139
    %v152 = vpack.c.bf16 %v144, %v142
    %v153 = vpack.c.bf16 %v145, %v143
    %v154 = vld [vmem:[#allocation10] sm:$0xf]
    %v155 = vld [vmem:[#allocation10 + $0x4] sm:$0xf]
    %v156 = vld [vmem:[#allocation10 + $0x8] sm:$0xf]
    %v157 = vld [vmem:[#allocation10 + $0xc] sm:$0xf]
    %v158 = vld [vmem:[#allocation10 + $0x10] sm:$0xf]
    %v159 = vld [vmem:[#allocation10 + $0x14] sm:$0xf]
    %v160 = vld [vmem:[#allocation10 + $0x18] sm:$0xf]
    %v161 = vld [vmem:[#allocation10 + $0x1c] sm:$0xf]
    %v162 = vld [vmem:[#allocation10 + $0x20] sm:$0xf]
    %v163 = vld [vmem:[#allocation10 + $0x24] sm:$0xf]
    %v164 = vld [vmem:[#allocation10 + $0x28] sm:$0xf]
    %v165 = vld [vmem:[#allocation10 + $0x2c] sm:$0xf]
    %v166 = vld [vmem:[#allocation10 + $0x30] sm:$0xf]
    %v167 = vld [vmem:[#allocation10 + $0x34] sm:$0xf]
    %v168 = vld [vmem:[#allocation10 + $0x38] sm:$0xf]
    %v169 = vld [vmem:[#allocation10 + $0x3c] sm:$0xf]
    %v170 = vld [vmem:[#allocation10 + $0x40] sm:$0xf]
    %v171 = vld [vmem:[#allocation10 + $0x44] sm:$0xf]
    %v172 = vld [vmem:[#allocation10 + $0x48] sm:$0xf]
    %v173 = vld [vmem:[#allocation10 + $0x4c] sm:$0xf]
    %v174 = vld [vmem:[#allocation10 + $0x50] sm:$0xf]
    %v175 = vld [vmem:[#allocation10 + $0x54] sm:$0xf]
    %v176 = vld [vmem:[#allocation10 + $0x58] sm:$0xf]
    %v177 = vld [vmem:[#allocation10 + $0x5c] sm:$0xf]
    %v178 = vld [vmem:[#allocation10 + $0x60] sm:$0xf]
    %v179 = vld [vmem:[#allocation10 + $0x64] sm:$0xf]
    %v180 = vld [vmem:[#allocation10 + $0x68] sm:$0xf]
    %v181 = vld [vmem:[#allocation10 + $0x6c] sm:$0xf]
    %v182 = vld [vmem:[#allocation10 + $0x70] sm:$0xf]
    %v183 = vld [vmem:[#allocation10 + $0x74] sm:$0xf]
    %v184 = vld [vmem:[#allocation10 + $0x78] sm:$0xf]
    %v185 = vld [vmem:[#allocation10 + $0x7c] sm:$0xf]
    %v186 = vld [vmem:[%s3] sm:$0x1]
    %v188 = vlaneseq
    %v189 = vshrl.u32 %v188, 7
    %v190 = vsub.s32 0, %v189
    %v191 = vrot.slane %v186, %v190
    %v225 = vunpack.c.l.b16 %v154
    %v226 = vunpack.c.l.b16 %v155
    %v227 = vunpack.c.l.b16 %v156
    %v228 = vunpack.c.l.b16 %v157
    %v229 = vunpack.c.l.b16 %v158
    %v230 = vunpack.c.l.b16 %v159
    %v231 = vunpack.c.l.b16 %v160
    %v232 = vunpack.c.l.b16 %v161
    %v233 = vunpack.c.l.b16 %v162
    %v234 = vunpack.c.l.b16 %v163
    %v235 = vunpack.c.l.b16 %v164
    %v236 = vunpack.c.l.b16 %v165
    %v237 = vunpack.c.l.b16 %v166
    %v238 = vunpack.c.l.b16 %v167
    %v239 = vunpack.c.l.b16 %v168
    %v240 = vunpack.c.l.b16 %v169
    %v241 = vunpack.c.l.b16 %v170
    %v242 = vunpack.c.l.b16 %v171
    %v243 = vunpack.c.l.b16 %v172
    %v244 = vunpack.c.l.b16 %v173
    %v245 = vunpack.c.l.b16 %v174
    %v246 = vunpack.c.l.b16 %v175
    %v247 = vunpack.c.l.b16 %v176
    %v248 = vunpack.c.l.b16 %v177
    %v249 = vunpack.c.l.b16 %v178
    %v250 = vunpack.c.l.b16 %v179
    %v251 = vunpack.c.l.b16 %v180
    %v252 = vunpack.c.l.b16 %v181
    %v253 = vunpack.c.l.b16 %v182
    %v254 = vunpack.c.l.b16 %v183
    %v255 = vunpack.c.l.b16 %v184
    %v256 = vunpack.c.l.b16 %v185
    %v257 = vpack.c.b16 %v226, %v225
    %v258 = vpack.c.b16 %v228, %v227
    %v259 = vpack.c.b16 %v230, %v229
    %v260 = vpack.c.b16 %v232, %v231
    %v261 = vpack.c.b16 %v234, %v233
    %v262 = vpack.c.b16 %v236, %v235
    %v263 = vpack.c.b16 %v238, %v237
    %v264 = vpack.c.b16 %v240, %v239
    %v265 = vpack.c.b16 %v242, %v241
    %v266 = vpack.c.b16 %v244, %v243
    %v267 = vpack.c.b16 %v246, %v245
    %v268 = vpack.c.b16 %v248, %v247
    %v269 = vpack.c.b16 %v250, %v249
    %v270 = vpack.c.b16 %v252, %v251
    %v271 = vpack.c.b16 %v254, %v253
    %v272 = vpack.c.b16 %v256, %v255
    %289 = vmatprep.subr.bf16.mxu0 0
    %290 = vmatpush1.bf16.msra.mxu0 %v264
    %291 = vmatprep.subr.bf16.mxu0 0
    %292 = vmatpush1.bf16.msra.mxu0 %v263
    %293 = vmatprep.subr.bf16.mxu0 0
    %294 = vmatpush1.bf16.msra.mxu0 %v262
    %295 = vmatprep.subr.bf16.mxu0 0
    %296 = vmatpush1.bf16.msra.mxu0 %v261
    %297 = vmatprep.subr.bf16.mxu0 0
    %298 = vmatpush1.bf16.msra.mxu0 %v260
    %299 = vmatprep.subr.bf16.mxu0 0
    %300 = vmatpush1.bf16.msra.mxu0 %v259
    %301 = vmatprep.subr.bf16.mxu0 0
    %302 = vmatpush1.bf16.msra.mxu0 %v258
    %303 = vmatprep.subr.bf16.mxu0 0
    %304 = vmatpush1.bf16.msra.mxu0 %v257
    %305 = vmatprep.subr.bf16.mxu0 0
    %306 = vmatpush2.bf16.msra.mxu0 %v272
    %307 = vmatprep.subr.bf16.mxu0 0
    %308 = vmatpush2.bf16.msra.mxu0 %v271
    %309 = vmatprep.subr.bf16.mxu0 0
    %310 = vmatpush2.bf16.msra.mxu0 %v270
    %311 = vmatprep.subr.bf16.mxu0 0
    %312 = vmatpush2.bf16.msra.mxu0 %v269
    %313 = vmatprep.subr.bf16.mxu0 0
    %314 = vmatpush2.bf16.msra.mxu0 %v268
    %315 = vmatprep.subr.bf16.mxu0 0
    %316 = vmatpush2.bf16.msra.mxu0 %v267
    %317 = vmatprep.subr.bf16.mxu0 0
    %318 = vmatpush2.bf16.msra.mxu0 %v266
    %319 = vmatprep.subr.bf16.mxu0 0
    %320 = vmatpush2.bf16.msra.mxu0 %v265
    %321 = vmatprep.mubr.bf16.mxu0 %v147
    %322 = vmatmul.mubr.bf16.gmra.mxu0 %v146
    %v323 = vpop.f32.mrf.mxu0
    %v324 = vadd.f32 %v191, %v323
    %v325 = vpop.f32.mrf.mxu0
    %v326 = vpop.f32.mrf.mxu0
    %v327 = vadd.f32 %v191, %v326
    %v328 = vpop.f32.mrf.mxu0
    %329 = vmatprep.mubr.bf16.mxu0 %v149
    %330 = vmatmul.mubr.bf16.gmra.mxu0 %v148
    %v331 = vpop.f32.mrf.mxu0
    %v332 = vadd.f32 %v191, %v331
    %v333 = vpop.f32.mrf.mxu0
    %v334 = vpop.f32.mrf.mxu0
    %v335 = vadd.f32 %v191, %v334
    %v336 = vpop.f32.mrf.mxu0
    %337 = vmatprep.mubr.bf16.mxu0 %v151
    %338 = vmatmul.mubr.bf16.gmra.mxu0 %v150
    %v339 = vpop.f32.mrf.mxu0
    %v340 = vadd.f32 %v191, %v339
    %v341 = vpop.f32.mrf.mxu0
    %v342 = vpop.f32.mrf.mxu0
    %v343 = vadd.f32 %v191, %v342
    %v344 = vpop.f32.mrf.mxu0
    %345 = vmatprep.mubr.bf16.mxu0 %v153
    %346 = vmatmul.mubr.bf16.gmra.mxu0 %v152
    %v347 = vpop.f32.mrf.mxu0
    %v348 = vadd.f32 %v191, %v347
    %v349 = vpop.f32.mrf.mxu0
    %v350 = vpop.f32.mrf.mxu0
    %v351 = vadd.f32 %v191, %v350
    %v352 = vpop.f32.mrf.mxu0
    %353 = vdwg.mxu0
    %v354 = vld [vmem:[#allocation11] sm:$0xff]
    %v355 = vld [vmem:[#allocation11 + $0x8] sm:$0xff]
    %v356 = vld [vmem:[#allocation11 + $0x10] sm:$0xff]
    %v357 = vld [vmem:[#allocation11 + $0x18] sm:$0xff]
    %v358 = vld [vmem:[#allocation11 + $0x20] sm:$0xff]
    %v359 = vld [vmem:[#allocation11 + $0x28] sm:$0xff]
    %v360 = vld [vmem:[#allocation11 + $0x30] sm:$0xff]
    %v361 = vld [vmem:[#allocation11 + $0x38] sm:$0xff]
    %v362 = vld [vmem:[#allocation11 + $0x40] sm:$0xff]
    %v363 = vld [vmem:[#allocation11 + $0x48] sm:$0xff]
    %v364 = vld [vmem:[#allocation11 + $0x50] sm:$0xff]
    %v365 = vld [vmem:[#allocation11 + $0x58] sm:$0xff]
    %v366 = vld [vmem:[#allocation11 + $0x60] sm:$0xff]
    %v367 = vld [vmem:[#allocation11 + $0x68] sm:$0xff]
    %v368 = vld [vmem:[#allocation11 + $0x70] sm:$0xff]
    %v369 = vld [vmem:[#allocation11 + $0x78] sm:$0xff]
    %v370 = vld [vmem:[#allocation11 + $0x80] sm:$0xff]
    %v371 = vld [vmem:[#allocation11 + $0x88] sm:$0xff]
    %v372 = vld [vmem:[#allocation11 + $0x90] sm:$0xff]
    %v373 = vld [vmem:[#allocation11 + $0x98] sm:$0xff]
    %v374 = vld [vmem:[#allocation11 + $0xa0] sm:$0xff]
    %v375 = vld [vmem:[#allocation11 + $0xa8] sm:$0xff]
    %v376 = vld [vmem:[#allocation11 + $0xb0] sm:$0xff]
    %v377 = vld [vmem:[#allocation11 + $0xb8] sm:$0xff]
    %v378 = vld [vmem:[#allocation11 + $0xc0] sm:$0xff]
    %v379 = vld [vmem:[#allocation11 + $0xc8] sm:$0xff]
    %v380 = vld [vmem:[#allocation11 + $0xd0] sm:$0xff]
    %v381 = vld [vmem:[#allocation11 + $0xd8] sm:$0xff]
    %v382 = vld [vmem:[#allocation11 + $0xe0] sm:$0xff]
    %v383 = vld [vmem:[#allocation11 + $0xe8] sm:$0xff]
    %v384 = vld [vmem:[#allocation11 + $0xf0] sm:$0xff]
    %v385 = vld [vmem:[#allocation11 + $0xf8] sm:$0xff]
    %v386 = vpack.c.bf16 %v327, %v324
    %v387 = vpack.c.bf16 %v335, %v332
    %v388 = vpack.c.bf16 %v343, %v340
    %v389 = vpack.c.bf16 %v351, %v348
    %v390 = vld [vmem:[%s5] sm:$0x3]
    %v392 = vlaneseq
    %v393 = vshrl.u32 %v392, 7
    %v394 = vsub.s32 0, %v393
    %v395 = vrot.slane %v390, %v394
    %v396 = vlaneseq
    %v397 = vshrl.u32 %v396, 7
    %v398 = vsub.s32 1, %v397
    %v399 = vrot.slane %v390, %v398
    %v418 = vunpack.c.l.b16 %v354
    %v419 = vunpack.c.h.b16 %v354
    %v420 = vunpack.c.l.b16 %v355
    %v421 = vunpack.c.h.b16 %v355
    %v422 = vunpack.c.l.b16 %v356
    %v423 = vunpack.c.h.b16 %v356
    %v424 = vunpack.c.l.b16 %v357
    %v425 = vunpack.c.h.b16 %v357
    %v426 = vunpack.c.l.b16 %v358
    %v427 = vunpack.c.h.b16 %v358
    %v428 = vunpack.c.l.b16 %v359
    %v429 = vunpack.c.h.b16 %v359
    %v430 = vunpack.c.l.b16 %v360
    %v431 = vunpack.c.h.b16 %v360
    %v432 = vunpack.c.l.b16 %v361
    %v433 = vunpack.c.h.b16 %v361
    %v434 = vunpack.c.l.b16 %v362
    %v435 = vunpack.c.h.b16 %v362
    %v436 = vunpack.c.l.b16 %v363
    %v437 = vunpack.c.h.b16 %v363
    %v438 = vunpack.c.l.b16 %v364
    %v439 = vunpack.c.h.b16 %v364
    %v440 = vunpack.c.l.b16 %v365
    %v441 = vunpack.c.h.b16 %v365
    %v442 = vunpack.c.l.b16 %v366
    %v443 = vunpack.c.h.b16 %v366
    %v444 = vunpack.c.l.b16 %v367
    %v445 = vunpack.c.h.b16 %v367
    %v446 = vunpack.c.l.b16 %v368
    %v447 = vunpack.c.h.b16 %v368
    %v448 = vunpack.c.l.b16 %v369
    %v449 = vunpack.c.h.b16 %v369
    %v450 = vpack.c.b16 %v420, %v418
    %v451 = vpack.c.b16 %v421, %v419
    %v452 = vpack.c.b16 %v424, %v422
    %v453 = vpack.c.b16 %v425, %v423
    %v454 = vpack.c.b16 %v428, %v426
    %v455 = vpack.c.b16 %v429, %v427
    %v456 = vpack.c.b16 %v432, %v430
    %v457 = vpack.c.b16 %v433, %v431
    %v458 = vpack.c.b16 %v436, %v434
    %v459 = vpack.c.b16 %v437, %v435
    %v460 = vpack.c.b16 %v440, %v438
    %v461 = vpack.c.b16 %v441, %v439
    %v462 = vpack.c.b16 %v444, %v442
    %v463 = vpack.c.b16 %v445, %v443
    %v464 = vpack.c.b16 %v448, %v446
    %v465 = vpack.c.b16 %v449, %v447
    %482 = vmatprep.subr.bf16.mxu0 %v465
    %483 = vmatpush1.bf16.msra.mxu0 %v464
    %484 = vmatprep.subr.bf16.mxu0 %v463
    %485 = vmatpush1.bf16.msra.mxu0 %v462
    %486 = vmatprep.subr.bf16.mxu0 %v461
    %487 = vmatpush1.bf16.msra.mxu0 %v460
    %488 = vmatprep.subr.bf16.mxu0 %v459
    %489 = vmatpush1.bf16.msra.mxu0 %v458
    %490 = vmatprep.subr.bf16.mxu0 %v457
    %491 = vmatpush1.bf16.msra.mxu0 %v456
    %492 = vmatprep.subr.bf16.mxu0 %v455
    %493 = vmatpush1.bf16.msra.mxu0 %v454
    %494 = vmatprep.subr.bf16.mxu0 %v453
    %495 = vmatpush1.bf16.msra.mxu0 %v452
    %496 = vmatprep.subr.bf16.mxu0 %v451
    %497 = vmatpush1.bf16.msra.mxu0 %v450
    %498 = vmatprep.subr.bf16.mxu0 0
    %499 = vmatpush2.bf16.msra.mxu0 0
    %500 = vmatprep.subr.bf16.mxu0 0
    %501 = vmatpush2.bf16.msra.mxu0 0
    %502 = vmatprep.subr.bf16.mxu0 0
    %503 = vmatpush2.bf16.msra.mxu0 0
    %504 = vmatprep.subr.bf16.mxu0 0
    %505 = vmatpush2.bf16.msra.mxu0 0
    %506 = vmatprep.subr.bf16.mxu0 0
    %507 = vmatpush2.bf16.msra.mxu0 0
    %508 = vmatprep.subr.bf16.mxu0 0
    %509 = vmatpush2.bf16.msra.mxu0 0
    %510 = vmatprep.subr.bf16.mxu0 0
    %511 = vmatpush2.bf16.msra.mxu0 0
    %512 = vmatprep.subr.bf16.mxu0 0
    %513 = vmatpush2.bf16.msra.mxu0 0
    %514 = vmatprep.mubr.bf16.mxu0 0
    %515 = vmatmul.mubr.bf16.gmra.mxu0 %v386
    %v516 = vpop.f32.mrf.mxu0
    %v517 = vadd.f32 %v395, %v516
    %v518 = vpop.f32.mrf.mxu0
    %v519 = vadd.f32 %v399, %v518
    %v520 = vpop.f32.mrf.mxu0
    %v521 = vadd.f32 %v395, %v520
    %v522 = vpop.f32.mrf.mxu0
    %v523 = vadd.f32 %v399, %v522
    %524 = vmatprep.mubr.bf16.mxu0 0
    %525 = vmatmul.mubr.bf16.gmra.mxu0 %v387
    %v526 = vpop.f32.mrf.mxu0
    %v527 = vadd.f32 %v395, %v526
    %v528 = vpop.f32.mrf.mxu0
    %v529 = vadd.f32 %v399, %v528
    %v530 = vpop.f32.mrf.mxu0
    %v531 = vadd.f32 %v395, %v530
    %v532 = vpop.f32.mrf.mxu0
    %v533 = vadd.f32 %v399, %v532
    %534 = vmatprep.mubr.bf16.mxu0 0
    %535 = vmatmul.mubr.bf16.gmra.mxu0 %v388
    %v536 = vpop.f32.mrf.mxu0
    %v537 = vadd.f32 %v395, %v536
    %v538 = vpop.f32.mrf.mxu0
    %v539 = vadd.f32 %v399, %v538
    %v540 = vpop.f32.mrf.mxu0
    %v541 = vadd.f32 %v395, %v540
    %v542 = vpop.f32.mrf.mxu0
    %v543 = vadd.f32 %v399, %v542
    %544 = vmatprep.mubr.bf16.mxu0 0
    %545 = vmatmul.mubr.bf16.gmra.mxu0 %v389
    %v546 = vpop.f32.mrf.mxu0
    %v547 = vadd.f32 %v395, %v546
    %v548 = vpop.f32.mrf.mxu0
    %v549 = vadd.f32 %v399, %v548
    %v550 = vpop.f32.mrf.mxu0
    %v551 = vadd.f32 %v395, %v550
    %v552 = vpop.f32.mrf.mxu0
    %v553 = vadd.f32 %v399, %v552
    %554 = vdwg.mxu0
    %555 = vst [vmem:[#allocation2] sm:$0xff] %v517
    %556 = vst [vmem:[#allocation2 + $0x8] sm:$0xff] %v519
    %557 = vst [vmem:[#allocation2 + $0x10] sm:$0xff] %v521
    %558 = vst [vmem:[#allocation2 + $0x18] sm:$0xff] %v523
    %559 = vst [vmem:[#allocation2 + $0x20] sm:$0xff] %v527
    %560 = vst [vmem:[#allocation2 + $0x28] sm:$0xff] %v529
    %561 = vst [vmem:[#allocation2 + $0x30] sm:$0xff] %v531
    %562 = vst [vmem:[#allocation2 + $0x38] sm:$0xff] %v533
    %563 = vst [vmem:[#allocation2 + $0x40] sm:$0xff] %v537
    %564 = vst [vmem:[#allocation2 + $0x48] sm:$0xff] %v539
    %565 = vst [vmem:[#allocation2 + $0x50] sm:$0xff] %v541
    %566 = vst [vmem:[#allocation2 + $0x58] sm:$0xff] %v543
    %567 = vst [vmem:[#allocation2 + $0x60] sm:$0xff] %v547
    %568 = vst [vmem:[#allocation2 + $0x68] sm:$0xff] %v549
    %569 = vst [vmem:[#allocation2 + $0x70] sm:$0xff] %v551
    %570 = vst [vmem:[#allocation2 + $0x78] sm:$0xff] %v553
    %s571 = scalar_lea.vmem [#allocation11], 256
    %v572 = vld [vmem:[%s571] sm:$0xff]
    %v573 = vld [vmem:[%s571 + $0x8] sm:$0xff]
    %v574 = vld [vmem:[%s571 + $0x10] sm:$0xff]
    %v575 = vld [vmem:[%s571 + $0x18] sm:$0xff]
    %v576 = vld [vmem:[%s571 + $0x20] sm:$0xff]
    %v577 = vld [vmem:[%s571 + $0x28] sm:$0xff]
    %v578 = vld [vmem:[%s571 + $0x30] sm:$0xff]
    %v579 = vld [vmem:[%s571 + $0x38] sm:$0xff]
    %v580 = vld [vmem:[%s571 + $0x40] sm:$0xff]
    %v581 = vld [vmem:[%s571 + $0x48] sm:$0xff]
    %v582 = vld [vmem:[%s571 + $0x50] sm:$0xff]
    %v583 = vld [vmem:[%s571 + $0x58] sm:$0xff]
    %v584 = vld [vmem:[%s571 + $0x60] sm:$0xff]
    %v585 = vld [vmem:[%s571 + $0x68] sm:$0xff]
    %v586 = vld [vmem:[%s571 + $0x70] sm:$0xff]
    %v587 = vld [vmem:[%s571 + $0x78] sm:$0xff]
    %v588 = vld [vmem:[%s571 + $0x80] sm:$0xff]
    %v589 = vld [vmem:[%s571 + $0x88] sm:$0xff]
    %v590 = vld [vmem:[%s571 + $0x90] sm:$0xff]
    %v591 = vld [vmem:[%s571 + $0x98] sm:$0xff]
    %v592 = vld [vmem:[%s571 + $0xa0] sm:$0xff]
    %v593 = vld [vmem:[%s571 + $0xa8] sm:$0xff]
    %v594 = vld [vmem:[%s571 + $0xb0] sm:$0xff]
    %v595 = vld [vmem:[%s571 + $0xb8] sm:$0xff]
    %v596 = vld [vmem:[%s571 + $0xc0] sm:$0xff]
    %v597 = vld [vmem:[%s571 + $0xc8] sm:$0xff]
    %v598 = vld [vmem:[%s571 + $0xd0] sm:$0xff]
    %v599 = vld [vmem:[%s571 + $0xd8] sm:$0xff]
    %v600 = vld [vmem:[%s571 + $0xe0] sm:$0xff]
    %v601 = vld [vmem:[%s571 + $0xe8] sm:$0xff]
    %v602 = vld [vmem:[%s571 + $0xf0] sm:$0xff]
    %v603 = vld [vmem:[%s571 + $0xf8] sm:$0xff]
    %s604 = scalar_lea.vmem %s5, 2
    %v605 = vld [vmem:[%s604] sm:$0x3]
    %v607 = vlaneseq
    %v608 = vshrl.u32 %v607, 7
    %v609 = vsub.s32 0, %v608
    %v610 = vrot.slane %v605, %v609
    %v611 = vlaneseq
    %v612 = vshrl.u32 %v611, 7
    %v613 = vsub.s32 1, %v612
    %v614 = vrot.slane %v605, %v613
    %v617 = vld [vmem:[#allocation4] sm:$0xff]
    %v618 = vld [vmem:[#allocation2] sm:$0xff]
    %v619 = vld [vmem:[#allocation2 + $0x8] sm:$0xff]
    %v620 = vpack.c.bf16 %v617, %v617
    %v637 = vunpack.c.l.b16 %v370
    %v638 = vunpack.c.h.b16 %v370
    %v639 = vunpack.c.l.b16 %v371
    %v640 = vunpack.c.h.b16 %v371
    %v641 = vunpack.c.l.b16 %v372
    %v642 = vunpack.c.h.b16 %v372
    %v643 = vunpack.c.l.b16 %v373
    %v644 = vunpack.c.h.b16 %v373
    %v645 = vunpack.c.l.b16 %v374
    %v646 = vunpack.c.h.b16 %v374
    %v647 = vunpack.c.l.b16 %v375
    %v648 = vunpack.c.h.b16 %v375
    %v649 = vunpack.c.l.b16 %v376
    %v650 = vunpack.c.h.b16 %v376
    %v651 = vunpack.c.l.b16 %v377
    %v652 = vunpack.c.h.b16 %v377
    %v653 = vunpack.c.l.b16 %v378
    %v654 = vunpack.c.h.b16 %v378
    %v655 = vunpack.c.l.b16 %v379
    %v656 = vunpack.c.h.b16 %v379
    %v657 = vunpack.c.l.b16 %v380
    %v658 = vunpack.c.h.b16 %v380
    %v659 = vunpack.c.l.b16 %v381
    %v660 = vunpack.c.h.b16 %v381
    %v661 = vunpack.c.l.b16 %v382
    %v662 = vunpack.c.h.b16 %v382
    %v663 = vunpack.c.l.b16 %v383
    %v664 = vunpack.c.h.b16 %v383
    %v665 = vunpack.c.l.b16 %v384
    %v666 = vunpack.c.h.b16 %v384
    %v667 = vunpack.c.l.b16 %v385
    %v668 = vunpack.c.h.b16 %v385
    %v669 = vpack.c.b16 %v639, %v637
    %v670 = vpack.c.b16 %v640, %v638
    %v671 = vpack.c.b16 %v643, %v641
    %v672 = vpack.c.b16 %v644, %v642
    %v673 = vpack.c.b16 %v647, %v645
    %v674 = vpack.c.b16 %v648, %v646
    %v675 = vpack.c.b16 %v651, %v649
    %v676 = vpack.c.b16 %v652, %v650
    %v677 = vpack.c.b16 %v655, %v653
    %v678 = vpack.c.b16 %v656, %v654
    %v679 = vpack.c.b16 %v659, %v657
    %v680 = vpack.c.b16 %v660, %v658
    %v681 = vpack.c.b16 %v663, %v661
    %v682 = vpack.c.b16 %v664, %v662
    %v683 = vpack.c.b16 %v667, %v665
    %v684 = vpack.c.b16 %v668, %v666
    %701 = vmatprep.subr.bf16.mxu0 %v684
    %702 = vmatpush1.bf16.msra.mxu0 %v683
    %703 = vmatprep.subr.bf16.mxu0 %v682
    %704 = vmatpush1.bf16.msra.mxu0 %v681
    %705 = vmatprep.subr.bf16.mxu0 %v680
    %706 = vmatpush1.bf16.msra.mxu0 %v679
    %707 = vmatprep.subr.bf16.mxu0 %v678
    %708 = vmatpush1.bf16.msra.mxu0 %v677
    %709 = vmatprep.subr.bf16.mxu0 %v676
    %710 = vmatpush1.bf16.msra.mxu0 %v675
    %711 = vmatprep.subr.bf16.mxu0 %v674
    %712 = vmatpush1.bf16.msra.mxu0 %v673
    %713 = vmatprep.subr.bf16.mxu0 %v672
    %714 = vmatpush1.bf16.msra.mxu0 %v671
    %715 = vmatprep.subr.bf16.mxu0 %v670
    %716 = vmatpush1.bf16.msra.mxu0 %v669
    %717 = vmatprep.subr.bf16.mxu0 0
    %718 = vmatpush2.bf16.msra.mxu0 0
    %719 = vmatprep.subr.bf16.mxu0 0
    %720 = vmatpush2.bf16.msra.mxu0 0
    %721 = vmatprep.subr.bf16.mxu0 0
    %722 = vmatpush2.bf16.msra.mxu0 0
    %723 = vmatprep.subr.bf16.mxu0 0
    %724 = vmatpush2.bf16.msra.mxu0 0
    %725 = vmatprep.subr.bf16.mxu0 0
    %726 = vmatpush2.bf16.msra.mxu0 0
    %727 = vmatprep.subr.bf16.mxu0 0
    %728 = vmatpush2.bf16.msra.mxu0 0
    %729 = vmatprep.subr.bf16.mxu0 0
    %730 = vmatpush2.bf16.msra.mxu0 0
    %731 = vmatprep.subr.bf16.mxu0 0
    %732 = vmatpush2.bf16.msra.mxu0 0
    %733 = vmatprep.mubr.bf16.mxu0 0
    %734 = vmatmul.mubr.bf16.gmra.mxu0 %v620
    %v735 = vpop.f32.mrf.mxu0
    %v736 = vadd.f32 0.0, %v735
    %v737 = vpop.f32.mrf.mxu0
    %v738 = vadd.f32 0.0, %v737
    %v739 = vpop.f32.mrf.mxu0
    %v740 = vpop.f32.mrf.mxu0
    %741 = vdwg.mxu0
    %v742 = vadd.f32 %v618, %v736
    %v743 = vadd.f32 %v619, %v738
    %v744 = vxor.u32 %v742, 2147483648
    %v745 = vmul.f32 %v744, 1.442695
    %v746 = vpow.pop %v745
    %v747 = vadd.f32 %v746, 1.0
    %v748 = vrcp.pop %v747
    %v749 = vmul.f32 1.0, %v748
    %v750 = vtanh.pop %v743
    %v751 = vsub.f32 %v617, %v750
    %v752 = vmul.f32 %v749, %v751
    %v753 = vadd.f32 %v750, %v752
    %754 = vst [vmem:[#allocation4] sm:$0xff] %v753
    %s755 = scalar_lea.vmem [#allocation4], 8
    %v756 = vld [vmem:[%s755] sm:$0xff]
    %v757 = vpack.c.bf16 %v753, %v753
    %v758 = vpack.c.bf16 %v756, %v756
    %v775 = vunpack.c.l.b16 %v588
    %v776 = vunpack.c.h.b16 %v588
    %v777 = vunpack.c.l.b16 %v589
    %v778 = vunpack.c.h.b16 %v589
    %v779 = vunpack.c.l.b16 %v590
    %v780 = vunpack.c.h.b16 %v590
    %v781 = vunpack.c.l.b16 %v591
    %v782 = vunpack.c.h.b16 %v591
    %v783 = vunpack.c.l.b16 %v592
    %v784 = vunpack.c.h.b16 %v592
    %v785 = vunpack.c.l.b16 %v593
    %v786 = vunpack.c.h.b16 %v593
    %v787 = vunpack.c.l.b16 %v594
    %v788 = vunpack.c.h.b16 %v594
    %v789 = vunpack.c.l.b16 %v595
    %v790 = vunpack.c.h.b16 %v595
    %v791 = vunpack.c.l.b16 %v596
    %v792 = vunpack.c.h.b16 %v596
    %v793 = vunpack.c.l.b16 %v597
    %v794 = vunpack.c.h.b16 %v597
    %v795 = vunpack.c.l.b16 %v598
    %v796 = vunpack.c.h.b16 %v598
    %v797 = vunpack.c.l.b16 %v599
    %v798 = vunpack.c.h.b16 %v599
    %v799 = vunpack.c.l.b16 %v600
    %v800 = vunpack.c.h.b16 %v600
    %v801 = vunpack.c.l.b16 %v601
    %v802 = vunpack.c.h.b16 %v601
    %v803 = vunpack.c.l.b16 %v602
    %v804 = vunpack.c.h.b16 %v602
    %v805 = vunpack.c.l.b16 %v603
    %v806 = vunpack.c.h.b16 %v603
    %v807 = vpack.c.b16 %v777, %v775
    %v808 = vpack.c.b16 %v778, %v776
    %v809 = vpack.c.b16 %v781, %v779
    %v810 = vpack.c.b16 %v782, %v780
    %v811 = vpack.c.b16 %v785, %v783
    %v812 = vpack.c.b16 %v786, %v784
    %v813 = vpack.c.b16 %v789, %v787
    %v814 = vpack.c.b16 %v790, %v788
    %v815 = vpack.c.b16 %v793, %v791
    %v816 = vpack.c.b16 %v794, %v792
    %v817 = vpack.c.b16 %v797, %v795
    %v818 = vpack.c.b16 %v798, %v796
    %v819 = vpack.c.b16 %v801, %v799
    %v820 = vpack.c.b16 %v802, %v800
    %v821 = vpack.c.b16 %v805, %v803
    %v822 = vpack.c.b16 %v806, %v804
    %839 = vmatprep.subr.bf16.mxu0 %v822
    %840 = vmatpush1.bf16.msra.mxu0 %v821
    %841 = vmatprep.subr.bf16.mxu0 %v820
    %842 = vmatpush1.bf16.msra.mxu0 %v819
    %843 = vmatprep.subr.bf16.mxu0 %v818
    %844 = vmatpush1.bf16.msra.mxu0 %v817
    %845 = vmatprep.subr.bf16.mxu0 %v816
    %846 = vmatpush1.bf16.msra.mxu0 %v815
    %847 = vmatprep.subr.bf16.mxu0 %v814
    %848 = vmatpush1.bf16.msra.mxu0 %v813
    %849 = vmatprep.subr.bf16.mxu0 %v812
    %850 = vmatpush1.bf16.msra.mxu0 %v811
    %851 = vmatprep.subr.bf16.mxu0 %v810
    %852 = vmatpush1.bf16.msra.mxu0 %v809
    %853 = vmatprep.subr.bf16.mxu0 %v808
    %854 = vmatpush1.bf16.msra.mxu0 %v807
    %855 = vmatprep.subr.bf16.mxu0 0
    %856 = vmatpush2.bf16.msra.mxu0 0
    %857 = vmatprep.subr.bf16.mxu0 0
    %858 = vmatpush2.bf16.msra.mxu0 0
    %859 = vmatprep.subr.bf16.mxu0 0
    %860 = vmatpush2.bf16.msra.mxu0 0
    %861 = vmatprep.subr.bf16.mxu0 0
    %862 = vmatpush2.bf16.msra.mxu0 0
    %863 = vmatprep.subr.bf16.mxu0 0
    %864 = vmatpush2.bf16.msra.mxu0 0
    %865 = vmatprep.subr.bf16.mxu0 0
    %866 = vmatpush2.bf16.msra.mxu0 0
    %867 = vmatprep.subr.bf16.mxu0 0
    %868 = vmatpush2.bf16.msra.mxu0 0
    %869 = vmatprep.subr.bf16.mxu0 0
    %870 = vmatpush2.bf16.msra.mxu0 0
    %871 = vmatprep.mubr.bf16.mxu0 0
    %872 = vmatmul.mubr.bf16.gmra.mxu0 %v758
    %v873 = vpop.f32.mrf.mxu0
    %v874 = vadd.f32 0.0, %v873
    %v875 = vpop.f32.mrf.mxu0
    %v876 = vadd.f32 0.0, %v875
    %v877 = vpop.f32.mrf.mxu0
    %v878 = vpop.f32.mrf.mxu0
    %879 = vdwg.mxu0
    %v896 = vunpack.c.l.b16 %v572
    %v897 = vunpack.c.h.b16 %v572
    %v898 = vunpack.c.l.b16 %v573
    %v899 = vunpack.c.h.b16 %v573
    %v900 = vunpack.c.l.b16 %v574
    %v901 = vunpack.c.h.b16 %v574
    %v902 = vunpack.c.l.b16 %v575
    %v903 = vunpack.c.h.b16 %v575
    %v904 = vunpack.c.l.b16 %v576
    %v905 = vunpack.c.h.b16 %v576
    %v906 = vunpack.c.l.b16 %v577
    %v907 = vunpack.c.h.b16 %v577
    %v908 = vunpack.c.l.b16 %v578
    %v909 = vunpack.c.h.b16 %v578
    %v910 = vunpack.c.l.b16 %v579
    %v911 = vunpack.c.h.b16 %v579
    %v912 = vunpack.c.l.b16 %v580
    %v913 = vunpack.c.h.b16 %v580
    %v914 = vunpack.c.l.b16 %v581
    %v915 = vunpack.c.h.b16 %v581
    %v916 = vunpack.c.l.b16 %v582
    %v917 = vunpack.c.h.b16 %v582
    %v918 = vunpack.c.l.b16 %v583
    %v919 = vunpack.c.h.b16 %v583
    %v920 = vunpack.c.l.b16 %v584
    %v921 = vunpack.c.h.b16 %v584
    %v922 = vunpack.c.l.b16 %v585
    %v923 = vunpack.c.h.b16 %v585
    %v924 = vunpack.c.l.b16 %v586
    %v925 = vunpack.c.h.b16 %v586
    %v926 = vunpack.c.l.b16 %v587
    %v927 = vunpack.c.h.b16 %v587
    %v928 = vpack.c.b16 %v898, %v896
    %v929 = vpack.c.b16 %v899, %v897
    %v930 = vpack.c.b16 %v902, %v900
    %v931 = vpack.c.b16 %v903, %v901
    %v932 = vpack.c.b16 %v906, %v904
    %v933 = vpack.c.b16 %v907, %v905
    %v934 = vpack.c.b16 %v910, %v908
    %v935 = vpack.c.b16 %v911, %v909
    %v936 = vpack.c.b16 %v914, %v912
    %v937 = vpack.c.b16 %v915, %v913
    %v938 = vpack.c.b16 %v918, %v916
    %v939 = vpack.c.b16 %v919, %v917
    %v940 = vpack.c.b16 %v922, %v920
    %v941 = vpack.c.b16 %v923, %v921
    %v942 = vpack.c.b16 %v926, %v924
    %v943 = vpack.c.b16 %v927, %v925
    %960 = vmatprep.subr.bf16.mxu0 %v943
    %961 = vmatpush1.bf16.msra.mxu0 %v942
    %962 = vmatprep.subr.bf16.mxu0 %v941
    %963 = vmatpush1.bf16.msra.mxu0 %v940
    %964 = vmatprep.subr.bf16.mxu0 %v939
    %965 = vmatpush1.bf16.msra.mxu0 %v938
    %966 = vmatprep.subr.bf16.mxu0 %v937
    %967 = vmatpush1.bf16.msra.mxu0 %v936
    %968 = vmatprep.subr.bf16.mxu0 %v935
    %969 = vmatpush1.bf16.msra.mxu0 %v934
    %970 = vmatprep.subr.bf16.mxu0 %v933
    %971 = vmatpush1.bf16.msra.mxu0 %v932
    %972 = vmatprep.subr.bf16.mxu0 %v931
    %973 = vmatpush1.bf16.msra.mxu0 %v930
    %974 = vmatprep.subr.bf16.mxu0 %v929
    %975 = vmatpush1.bf16.msra.mxu0 %v928
    %976 = vmatprep.subr.bf16.mxu0 0
    %977 = vmatpush2.bf16.msra.mxu0 0
    %978 = vmatprep.subr.bf16.mxu0 0
    %979 = vmatpush2.bf16.msra.mxu0 0
    %980 = vmatprep.subr.bf16.mxu0 0
    %981 = vmatpush2.bf16.msra.mxu0 0
    %982 = vmatprep.subr.bf16.mxu0 0
    %983 = vmatpush2.bf16.msra.mxu0 0
    %984 = vmatprep.subr.bf16.mxu0 0
    %985 = vmatpush2.bf16.msra.mxu0 0
    %986 = vmatprep.subr.bf16.mxu0 0
    %987 = vmatpush2.bf16.msra.mxu0 0
    %988 = vmatprep.subr.bf16.mxu0 0
    %989 = vmatpush2.bf16.msra.mxu0 0
    %990 = vmatprep.subr.bf16.mxu0 0
    %991 = vmatpush2.bf16.msra.mxu0 0
    %992 = vmatprep.mubr.bf16.mxu0 0
    %993 = vmatmul.mubr.bf16.gmra.mxu0 %v757
    %v994 = vpop.f32.mrf.mxu0
    %v995 = vadd.f32 %v874, %v994
    %v996 = vpop.f32.mrf.mxu0
    %v997 = vadd.f32 %v876, %v996
    %v998 = vpop.f32.mrf.mxu0
    %v999 = vpop.f32.mrf.mxu0
    %1000 = vdwg.mxu0
    %v1001 = vadd.f32 %v995, %v610
    %v1002 = vadd.f32 %v997, %v614
    %v1003 = vxor.u32 %v1001, 2147483648
    %v1004 = vmul.f32 %v1003, 1.442695
    %v1005 = vpow.pop %v1004
    %v1006 = vadd.f32 %v1005, 1.0
    %v1007 = vrcp.pop %v1006
    %v1008 = vmul.f32 1.0, %v1007
    %v1009 = vtanh.pop %v1002
    %v1010 = vsub.f32 %v756, %v1009
    %v1011 = vmul.f32 %v1008, %v1010
    %v1012 = vadd.f32 %v1009, %v1011
    %1013 = vst [vmem:[%s755] sm:$0xff] %v1012
    %v1014 = vpack.c.bf16 %v1012, %v1012
    %1015 = vst [vmem:[#allocation3] sm:$0xf] %v1014
    %v1016 = vld [vmem:[#allocation4] sm:$0xff]
    %s1017 = scalar_lea.vmem [#allocation2], 16
    %v1018 = vld [vmem:[%s1017] sm:$0xff]
    %v1019 = vld [vmem:[%s1017 + $0x8] sm:$0xff]
    %v1020 = vpack.c.bf16 %v1016, %v1016
    %1021 = vmatprep.subr.bf16.mxu0 %v684
    %1022 = vmatpush1.bf16.msra.mxu0 %v683
    %1023 = vmatprep.subr.bf16.mxu0 %v682
    %1024 = vmatpush1.bf16.msra.mxu0 %v681
    %1025 = vmatprep.subr.bf16.mxu0 %v680
    %1026 = vmatpush1.bf16.msra.mxu0 %v679
    %1027 = vmatprep.subr.bf16.mxu0 %v678
    %1028 = vmatpush1.bf16.msra.mxu0 %v677
    %1029 = vmatprep.subr.bf16.mxu0 %v676
    %1030 = vmatpush1.bf16.msra.mxu0 %v675
    %1031 = vmatprep.subr.bf16.mxu0 %v674
    %1032 = vmatpush1.bf16.msra.mxu0 %v673
    %1033 = vmatprep.subr.bf16.mxu0 %v672
    %1034 = vmatpush1.bf16.msra.mxu0 %v671
    %1035 = vmatprep.subr.bf16.mxu0 %v670
    %1036 = vmatpush1.bf16.msra.mxu0 %v669
    %1037 = vmatprep.subr.bf16.mxu0 0
    %1038 = vmatpush2.bf16.msra.mxu0 0
    %1039 = vmatprep.subr.bf16.mxu0 0
    %1040 = vmatpush2.bf16.msra.mxu0 0
    %1041 = vmatprep.subr.bf16.mxu0 0
    %1042 = vmatpush2.bf16.msra.mxu0 0
    %1043 = vmatprep.subr.bf16.mxu0 0
    %1044 = vmatpush2.bf16.msra.mxu0 0
    %1045 = vmatprep.subr.bf16.mxu0 0
    %1046 = vmatpush2.bf16.msra.mxu0 0
    %1047 = vmatprep.subr.bf16.mxu0 0
    %1048 = vmatpush2.bf16.msra.mxu0 0
    %1049 = vmatprep.subr.bf16.mxu0 0
    %1050 = vmatpush2.bf16.msra.mxu0 0
    %1051 = vmatprep.subr.bf16.mxu0 0
    %1052 = vmatpush2.bf16.msra.mxu0 0
    %1053 = vmatprep.mubr.bf16.mxu0 0
    %1054 = vmatmul.mubr.bf16.gmra.mxu0 %v1020
    %v1055 = vpop.f32.mrf.mxu0
    %v1056 = vadd.f32 0.0, %v1055
    %v1057 = vpop.f32.mrf.mxu0
    %v1058 = vadd.f32 0.0, %v1057
    %v1059 = vpop.f32.mrf.mxu0
    %v1060 = vpop.f32.mrf.mxu0
    %1061 = vdwg.mxu0
    %v1062 = vadd.f32 %v1018, %v1056
    %v1063 = vadd.f32 %v1019, %v1058
    %v1064 = vxor.u32 %v1062, 2147483648
    %v1065 = vmul.f32 %v1064, 1.442695
    %v1066 = vpow.pop %v1065
    %v1067 = vadd.f32 %v1066, 1.0
    %v1068 = vrcp.pop %v1067
    %v1069 = vmul.f32 1.0, %v1068
    %v1070 = vtanh.pop %v1063
    %v1071 = vsub.f32 %v1016, %v1070
    %v1072 = vmul.f32 %v1069, %v1071
    %v1073 = vadd.f32 %v1070, %v1072
    %1074 = vst [vmem:[#allocation4] sm:$0xff] %v1073
    %v1075 = vld [vmem:[%s755] sm:$0xff]
    %v1076 = vpack.c.bf16 %v1073, %v1073
    %v1077 = vpack.c.bf16 %v1075, %v1075
    %1078 = vmatprep.subr.bf16.mxu0 %v822
    %1079 = vmatpush1.bf16.msra.mxu0 %v821
    %1080 = vmatprep.subr.bf16.mxu0 %v820
    %1081 = vmatpush1.bf16.msra.mxu0 %v819
    %1082 = vmatprep.subr.bf16.mxu0 %v818
    %1083 = vmatpush1.bf16.msra.mxu0 %v817
    %1084 = vmatprep.subr.bf16.mxu0 %v816
    %1085 = vmatpush1.bf16.msra.mxu0 %v815
    %1086 = vmatprep.subr.bf16.mxu0 %v814
    %1087 = vmatpush1.bf16.msra.mxu0 %v813
    %1088 = vmatprep.subr.bf16.mxu0 %v812
    %1089 = vmatpush1.bf16.msra.mxu0 %v811
    %1090 = vmatprep.subr.bf16.mxu0 %v810
    %1091 = vmatpush1.bf16.msra.mxu0 %v809
    %1092 = vmatprep.subr.bf16.mxu0 %v808
    %1093 = vmatpush1.bf16.msra.mxu0 %v807
    %1094 = vmatprep.subr.bf16.mxu0 0
    %1095 = vmatpush2.bf16.msra.mxu0 0
    %1096 = vmatprep.subr.bf16.mxu0 0
    %1097 = vmatpush2.bf16.msra.mxu0 0
    %1098 = vmatprep.subr.bf16.mxu0 0
    %1099 = vmatpush2.bf16.msra.mxu0 0
    %1100 = vmatprep.subr.bf16.mxu0 0
    %1101 = vmatpush2.bf16.msra.mxu0 0
    %1102 = vmatprep.subr.bf16.mxu0 0
    %1103 = vmatpush2.bf16.msra.mxu0 0
    %1104 = vmatprep.subr.bf16.mxu0 0
    %1105 = vmatpush2.bf16.msra.mxu0 0
    %1106 = vmatprep.subr.bf16.mxu0 0
    %1107 = vmatpush2.bf16.msra.mxu0 0
    %1108 = vmatprep.subr.bf16.mxu0 0
    %1109 = vmatpush2.bf16.msra.mxu0 0
    %1110 = vmatprep.mubr.bf16.mxu0 0
    %1111 = vmatmul.mubr.bf16.gmra.mxu0 %v1077
    %v1112 = vpop.f32.mrf.mxu0
    %v1113 = vadd.f32 0.0, %v1112
    %v1114 = vpop.f32.mrf.mxu0
    %v1115 = vadd.f32 0.0, %v1114
    %v1116 = vpop.f32.mrf.mxu0
    %v1117 = vpop.f32.mrf.mxu0
    %1118 = vdwg.mxu0
    %1119 = vmatprep.subr.bf16.mxu0 %v943
    %1120 = vmatpush1.bf16.msra.mxu0 %v942
    %1121 = vmatprep.subr.bf16.mxu0 %v941
    %1122 = vmatpush1.bf16.msra.mxu0 %v940
    %1123 = vmatprep.subr.bf16.mxu0 %v939
    %1124 = vmatpush1.bf16.msra.mxu0 %v938
    %1125 = vmatprep.subr.bf16.mxu0 %v937
    %1126 = vmatpush1.bf16.msra.mxu0 %v936
    %1127 = vmatprep.subr.bf16.mxu0 %v935
    %1128 = vmatpush1.bf16.msra.mxu0 %v934
    %1129 = vmatprep.subr.bf16.mxu0 %v933
    %1130 = vmatpush1.bf16.msra.mxu0 %v932
    %1131 = vmatprep.subr.bf16.mxu0 %v931
    %1132 = vmatpush1.bf16.msra.mxu0 %v930
    %1133 = vmatprep.subr.bf16.mxu0 %v929
    %1134 = vmatpush1.bf16.msra.mxu0 %v928
    %1135 = vmatprep.subr.bf16.mxu0 0
    %1136 = vmatpush2.bf16.msra.mxu0 0
    %1137 = vmatprep.subr.bf16.mxu0 0
    %1138 = vmatpush2.bf16.msra.mxu0 0
    %1139 = vmatprep.subr.bf16.mxu0 0
    %1140 = vmatpush2.bf16.msra.mxu0 0
    %1141 = vmatprep.subr.bf16.mxu0 0
    %1142 = vmatpush2.bf16.msra.mxu0 0
    %1143 = vmatprep.subr.bf16.mxu0 0
    %1144 = vmatpush2.bf16.msra.mxu0 0
    %1145 = vmatprep.subr.bf16.mxu0 0
    %1146 = vmatpush2.bf16.msra.mxu0 0
    %1147 = vmatprep.subr.bf16.mxu0 0
    %1148 = vmatpush2.bf16.msra.mxu0 0
    %1149 = vmatprep.subr.bf16.mxu0 0
    %1150 = vmatpush2.bf16.msra.mxu0 0
    %1151 = vmatprep.mubr.bf16.mxu0 0
    %1152 = vmatmul.mubr.bf16.gmra.mxu0 %v1076
    %v1153 = vpop.f32.mrf.mxu0
    %v1154 = vadd.f32 %v1113, %v1153
    %v1155 = vpop.f32.mrf.mxu0
    %v1156 = vadd.f32 %v1115, %v1155
    %v1157 = vpop.f32.mrf.mxu0
    %v1158 = vpop.f32.mrf.mxu0
    %1159 = vdwg.mxu0
    %v1160 = vadd.f32 %v1154, %v610
    %v1161 = vadd.f32 %v1156, %v614
    %v1162 = vxor.u32 %v1160, 2147483648
    %v1163 = vmul.f32 %v1162, 1.442695
    %v1164 = vpow.pop %v1163
    %v1165 = vadd.f32 %v1164, 1.0
    %v1166 = vrcp.pop %v1165
    %v1167 = vmul.f32 1.0, %v1166
    %v1168 = vtanh.pop %v1161
    %v1169 = vsub.f32 %v1075, %v1168
    %v1170 = vmul.f32 %v1167, %v1169
    %v1171 = vadd.f32 %v1168, %v1170
    %1172 = vst [vmem:[%s755] sm:$0xff] %v1171
    %v1173 = vpack.c.bf16 %v1171, %v1171
    %s1174 = scalar_lea.vmem [#allocation3], 4
    %1175 = vst [vmem:[%s1174] sm:$0xf] %v1173
    %v1176 = vld [vmem:[#allocation4] sm:$0xff]
    %s1177 = scalar_lea.vmem [#allocation2], 32
    %v1178 = vld [vmem:[%s1177] sm:$0xff]
    %v1179 = vld [vmem:[%s1177 + $0x8] sm:$0xff]
    %v1180 = vpack.c.bf16 %v1176, %v1176
    %1181 = vmatprep.subr.bf16.mxu0 %v684
    %1182 = vmatpush1.bf16.msra.mxu0 %v683
    %1183 = vmatprep.subr.bf16.mxu0 %v682
    %1184 = vmatpush1.bf16.msra.mxu0 %v681
    %1185 = vmatprep.subr.bf16.mxu0 %v680
    %1186 = vmatpush1.bf16.msra.mxu0 %v679
    %1187 = vmatprep.subr.bf16.mxu0 %v678
    %1188 = vmatpush1.bf16.msra.mxu0 %v677
    %1189 = vmatprep.subr.bf16.mxu0 %v676
    %1190 = vmatpush1.bf16.msra.mxu0 %v675
    %1191 = vmatprep.subr.bf16.mxu0 %v674
    %1192 = vmatpush1.bf16.msra.mxu0 %v673
    %1193 = vmatprep.subr.bf16.mxu0 %v672
    %1194 = vmatpush1.bf16.msra.mxu0 %v671
    %1195 = vmatprep.subr.bf16.mxu0 %v670
    %1196 = vmatpush1.bf16.msra.mxu0 %v669
    %1197 = vmatprep.subr.bf16.mxu0 0
    %1198 = vmatpush2.bf16.msra.mxu0 0
    %1199 = vmatprep.subr.bf16.mxu0 0
    %1200 = vmatpush2.bf16.msra.mxu0 0
    %1201 = vmatprep.subr.bf16.mxu0 0
    %1202 = vmatpush2.bf16.msra.mxu0 0
    %1203 = vmatprep.subr.bf16.mxu0 0
    %1204 = vmatpush2.bf16.msra.mxu0 0
    %1205 = vmatprep.subr.bf16.mxu0 0
    %1206 = vmatpush2.bf16.msra.mxu0 0
    %1207 = vmatprep.subr.bf16.mxu0 0
    %1208 = vmatpush2.bf16.msra.mxu0 0
    %1209 = vmatprep.subr.bf16.mxu0 0
    %1210 = vmatpush2.bf16.msra.mxu0 0
    %1211 = vmatprep.subr.bf16.mxu0 0
    %1212 = vmatpush2.bf16.msra.mxu0 0
    %1213 = vmatprep.mubr.bf16.mxu0 0
    %1214 = vmatmul.mubr.bf16.gmra.mxu0 %v1180
    %v1215 = vpop.f32.mrf.mxu0
    %v1216 = vadd.f32 0.0, %v1215
    %v1217 = vpop.f32.mrf.mxu0
    %v1218 = vadd.f32 0.0, %v1217
    %v1219 = vpop.f32.mrf.mxu0
    %v1220 = vpop.f32.mrf.mxu0
    %1221 = vdwg.mxu0
    %v1222 = vadd.f32 %v1178, %v1216
    %v1223 = vadd.f32 %v1179, %v1218
    %v1224 = vxor.u32 %v1222, 2147483648
    %v1225 = vmul.f32 %v1224, 1.442695
    %v1226 = vpow.pop %v1225
    %v1227 = vadd.f32 %v1226, 1.0
    %v1228 = vrcp.pop %v1227
    %v1229 = vmul.f32 1.0, %v1228
    %v1230 = vtanh.pop %v1223
    %v1231 = vsub.f32 %v1176, %v1230
    %v1232 = vmul.f32 %v1229, %v1231
    %v1233 = vadd.f32 %v1230, %v1232
    %1234 = vst [vmem:[#allocation4] sm:$0xff] %v1233
    %v1235 = vld [vmem:[%s755] sm:$0xff]
    %v1236 = vpack.c.bf16 %v1233, %v1233
    %v1237 = vpack.c.bf16 %v1235, %v1235
    %1238 = vmatprep.subr.bf16.mxu0 %v822
    %1239 = vmatpush1.bf16.msra.mxu0 %v821
    %1240 = vmatprep.subr.bf16.mxu0 %v820
    %1241 = vmatpush1.bf16.msra.mxu0 %v819
    %1242 = vmatprep.subr.bf16.mxu0 %v818
    %1243 = vmatpush1.bf16.msra.mxu0 %v817
    %1244 = vmatprep.subr.bf16.mxu0 %v816
    %1245 = vmatpush1.bf16.msra.mxu0 %v815
    %1246 = vmatprep.subr.bf16.mxu0 %v814
    %1247 = vmatpush1.bf16.msra.mxu0 %v813
    %1248 = vmatprep.subr.bf16.mxu0 %v812
    %1249 = vmatpush1.bf16.msra.mxu0 %v811
    %1250 = vmatprep.subr.bf16.mxu0 %v810
    %1251 = vmatpush1.bf16.msra.mxu0 %v809
    %1252 = vmatprep.subr.bf16.mxu0 %v808
    %1253 = vmatpush1.bf16.msra.mxu0 %v807
    %1254 = vmatprep.subr.bf16.mxu0 0
    %1255 = vmatpush2.bf16.msra.mxu0 0
    %1256 = vmatprep.subr.bf16.mxu0 0
    %1257 = vmatpush2.bf16.msra.mxu0 0
    %1258 = vmatprep.subr.bf16.mxu0 0
    %1259 = vmatpush2.bf16.msra.mxu0 0
    %1260 = vmatprep.subr.bf16.mxu0 0
    %1261 = vmatpush2.bf16.msra.mxu0 0
    %1262 = vmatprep.subr.bf16.mxu0 0
    %1263 = vmatpush2.bf16.msra.mxu0 0
    %1264 = vmatprep.subr.bf16.mxu0 0
    %1265 = vmatpush2.bf16.msra.mxu0 0
    %1266 = vmatprep.subr.bf16.mxu0 0
    %1267 = vmatpush2.bf16.msra.mxu0 0
    %1268 = vmatprep.subr.bf16.mxu0 0
    %1269 = vmatpush2.bf16.msra.mxu0 0
    %1270 = vmatprep.mubr.bf16.mxu0 0
    %1271 = vmatmul.mubr.bf16.gmra.mxu0 %v1237
    %v1272 = vpop.f32.mrf.mxu0
    %v1273 = vadd.f32 0.0, %v1272
    %v1274 = vpop.f32.mrf.mxu0
    %v1275 = vadd.f32 0.0, %v1274
    %v1276 = vpop.f32.mrf.mxu0
    %v1277 = vpop.f32.mrf.mxu0
    %1278 = vdwg.mxu0
    %1279 = vmatprep.subr.bf16.mxu0 %v943
    %1280 = vmatpush1.bf16.msra.mxu0 %v942
    %1281 = vmatprep.subr.bf16.mxu0 %v941
    %1282 = vmatpush1.bf16.msra.mxu0 %v940
    %1283 = vmatprep.subr.bf16.mxu0 %v939
    %1284 = vmatpush1.bf16.msra.mxu0 %v938
    %1285 = vmatprep.subr.bf16.mxu0 %v937
    %1286 = vmatpush1.bf16.msra.mxu0 %v936
    %1287 = vmatprep.subr.bf16.mxu0 %v935
    %1288 = vmatpush1.bf16.msra.mxu0 %v934
    %1289 = vmatprep.subr.bf16.mxu0 %v933
    %1290 = vmatpush1.bf16.msra.mxu0 %v932
    %1291 = vmatprep.subr.bf16.mxu0 %v931
    %1292 = vmatpush1.bf16.msra.mxu0 %v930
    %1293 = vmatprep.subr.bf16.mxu0 %v929
    %1294 = vmatpush1.bf16.msra.mxu0 %v928
    %1295 = vmatprep.subr.bf16.mxu0 0
    %1296 = vmatpush2.bf16.msra.mxu0 0
    %1297 = vmatprep.subr.bf16.mxu0 0
    %1298 = vmatpush2.bf16.msra.mxu0 0
    %1299 = vmatprep.subr.bf16.mxu0 0
    %1300 = vmatpush2.bf16.msra.mxu0 0
    %1301 = vmatprep.subr.bf16.mxu0 0
    %1302 = vmatpush2.bf16.msra.mxu0 0
    %1303 = vmatprep.subr.bf16.mxu0 0
    %1304 = vmatpush2.bf16.msra.mxu0 0
    %1305 = vmatprep.subr.bf16.mxu0 0
    %1306 = vmatpush2.bf16.msra.mxu0 0
    %1307 = vmatprep.subr.bf16.mxu0 0
    %1308 = vmatpush2.bf16.msra.mxu0 0
    %1309 = vmatprep.subr.bf16.mxu0 0
    %1310 = vmatpush2.bf16.msra.mxu0 0
    %1311 = vmatprep.mubr.bf16.mxu0 0
    %1312 = vmatmul.mubr.bf16.gmra.mxu0 %v1236
    %v1313 = vpop.f32.mrf.mxu0
    %v1314 = vadd.f32 %v1273, %v1313
    %v1315 = vpop.f32.mrf.mxu0
    %v1316 = vadd.f32 %v1275, %v1315
    %v1317 = vpop.f32.mrf.mxu0
    %v1318 = vpop.f32.mrf.mxu0
    %1319 = vdwg.mxu0
    %v1320 = vadd.f32 %v1314, %v610
    %v1321 = vadd.f32 %v1316, %v614
    %v1322 = vxor.u32 %v1320, 2147483648
    %v1323 = vmul.f32 %v1322, 1.442695
    %v1324 = vpow.pop %v1323
    %v1325 = vadd.f32 %v1324, 1.0
    %v1326 = vrcp.pop %v1325
    %v1327 = vmul.f32 1.0, %v1326
    %v1328 = vtanh.pop %v1321
    %v1329 = vsub.f32 %v1235, %v1328
    %v1330 = vmul.f32 %v1327, %v1329
    %v1331 = vadd.f32 %v1328, %v1330
    %1332 = vst [vmem:[%s755] sm:$0xff] %v1331
    %v1333 = vpack.c.bf16 %v1331, %v1331
    %s1334 = scalar_lea.vmem [#allocation3], 8
    %1335 = vst [vmem:[%s1334] sm:$0xf] %v1333
    %v1336 = vld [vmem:[#allocation4] sm:$0xff]
    %s1337 = scalar_lea.vmem [#allocation2], 48
    %v1338 = vld [vmem:[%s1337] sm:$0xff]
    %v1339 = vld [vmem:[%s1337 + $0x8] sm:$0xff]
    %v1340 = vpack.c.bf16 %v1336, %v1336
    %1341 = vmatprep.subr.bf16.mxu0 %v684
    %1342 = vmatpush1.bf16.msra.mxu0 %v683
    %1343 = vmatprep.subr.bf16.mxu0 %v682
    %1344 = vmatpush1.bf16.msra.mxu0 %v681
    %1345 = vmatprep.subr.bf16.mxu0 %v680
    %1346 = vmatpush1.bf16.msra.mxu0 %v679
    %1347 = vmatprep.subr.bf16.mxu0 %v678
    %1348 = vmatpush1.bf16.msra.mxu0 %v677
    %1349 = vmatprep.subr.bf16.mxu0 %v676
    %1350 = vmatpush1.bf16.msra.mxu0 %v675
    %1351 = vmatprep.subr.bf16.mxu0 %v674
    %1352 = vmatpush1.bf16.msra.mxu0 %v673
    %1353 = vmatprep.subr.bf16.mxu0 %v672
    %1354 = vmatpush1.bf16.msra.mxu0 %v671
    %1355 = vmatprep.subr.bf16.mxu0 %v670
    %1356 = vmatpush1.bf16.msra.mxu0 %v669
    %1357 = vmatprep.subr.bf16.mxu0 0
    %1358 = vmatpush2.bf16.msra.mxu0 0
    %1359 = vmatprep.subr.bf16.mxu0 0
    %1360 = vmatpush2.bf16.msra.mxu0 0
    %1361 = vmatprep.subr.bf16.mxu0 0
    %1362 = vmatpush2.bf16.msra.mxu0 0
    %1363 = vmatprep.subr.bf16.mxu0 0
    %1364 = vmatpush2.bf16.msra.mxu0 0
    %1365 = vmatprep.subr.bf16.mxu0 0
    %1366 = vmatpush2.bf16.msra.mxu0 0
    %1367 = vmatprep.subr.bf16.mxu0 0
    %1368 = vmatpush2.bf16.msra.mxu0 0
    %1369 = vmatprep.subr.bf16.mxu0 0
    %1370 = vmatpush2.bf16.msra.mxu0 0
    %1371 = vmatprep.subr.bf16.mxu0 0
    %1372 = vmatpush2.bf16.msra.mxu0 0
    %1373 = vmatprep.mubr.bf16.mxu0 0
    %1374 = vmatmul.mubr.bf16.gmra.mxu0 %v1340
    %v1375 = vpop.f32.mrf.mxu0
    %v1376 = vadd.f32 0.0, %v1375
    %v1377 = vpop.f32.mrf.mxu0
    %v1378 = vadd.f32 0.0, %v1377
    %v1379 = vpop.f32.mrf.mxu0
    %v1380 = vpop.f32.mrf.mxu0
    %1381 = vdwg.mxu0
    %v1382 = vadd.f32 %v1338, %v1376
    %v1383 = vadd.f32 %v1339, %v1378
    %v1384 = vxor.u32 %v1382, 2147483648
    %v1385 = vmul.f32 %v1384, 1.442695
    %v1386 = vpow.pop %v1385
    %v1387 = vadd.f32 %v1386, 1.0
    %v1388 = vrcp.pop %v1387
    %v1389 = vmul.f32 1.0, %v1388
    %v1390 = vtanh.pop %v1383
    %v1391 = vsub.f32 %v1336, %v1390
    %v1392 = vmul.f32 %v1389, %v1391
    %v1393 = vadd.f32 %v1390, %v1392
    %1394 = vst [vmem:[#allocation4] sm:$0xff] %v1393
    %v1395 = vld [vmem:[%s755] sm:$0xff]
    %v1396 = vpack.c.bf16 %v1393, %v1393
    %v1397 = vpack.c.bf16 %v1395, %v1395
    %1398 = vmatprep.subr.bf16.mxu0 %v822
    %1399 = vmatpush1.bf16.msra.mxu0 %v821
    %1400 = vmatprep.subr.bf16.mxu0 %v820
    %1401 = vmatpush1.bf16.msra.mxu0 %v819
    %1402 = vmatprep.subr.bf16.mxu0 %v818
    %1403 = vmatpush1.bf16.msra.mxu0 %v817
    %1404 = vmatprep.subr.bf16.mxu0 %v816
    %1405 = vmatpush1.bf16.msra.mxu0 %v815
    %1406 = vmatprep.subr.bf16.mxu0 %v814
    %1407 = vmatpush1.bf16.msra.mxu0 %v813
    %1408 = vmatprep.subr.bf16.mxu0 %v812
    %1409 = vmatpush1.bf16.msra.mxu0 %v811
    %1410 = vmatprep.subr.bf16.mxu0 %v810
    %1411 = vmatpush1.bf16.msra.mxu0 %v809
    %1412 = vmatprep.subr.bf16.mxu0 %v808
    %1413 = vmatpush1.bf16.msra.mxu0 %v807
    %1414 = vmatprep.subr.bf16.mxu0 0
    %1415 = vmatpush2.bf16.msra.mxu0 0
    %1416 = vmatprep.subr.bf16.mxu0 0
    %1417 = vmatpush2.bf16.msra.mxu0 0
    %1418 = vmatprep.subr.bf16.mxu0 0
    %1419 = vmatpush2.bf16.msra.mxu0 0
    %1420 = vmatprep.subr.bf16.mxu0 0
    %1421 = vmatpush2.bf16.msra.mxu0 0
    %1422 = vmatprep.subr.bf16.mxu0 0
    %1423 = vmatpush2.bf16.msra.mxu0 0
    %1424 = vmatprep.subr.bf16.mxu0 0
    %1425 = vmatpush2.bf16.msra.mxu0 0
    %1426 = vmatprep.subr.bf16.mxu0 0
    %1427 = vmatpush2.bf16.msra.mxu0 0
    %1428 = vmatprep.subr.bf16.mxu0 0
    %1429 = vmatpush2.bf16.msra.mxu0 0
    %1430 = vmatprep.mubr.bf16.mxu0 0
    %1431 = vmatmul.mubr.bf16.gmra.mxu0 %v1397
    %v1432 = vpop.f32.mrf.mxu0
    %v1433 = vadd.f32 0.0, %v1432
    %v1434 = vpop.f32.mrf.mxu0
    %v1435 = vadd.f32 0.0, %v1434
    %v1436 = vpop.f32.mrf.mxu0
    %v1437 = vpop.f32.mrf.mxu0
    %1438 = vdwg.mxu0
    %1439 = vmatprep.subr.bf16.mxu0 %v943
    %1440 = vmatpush1.bf16.msra.mxu0 %v942
    %1441 = vmatprep.subr.bf16.mxu0 %v941
    %1442 = vmatpush1.bf16.msra.mxu0 %v940
    %1443 = vmatprep.subr.bf16.mxu0 %v939
    %1444 = vmatpush1.bf16.msra.mxu0 %v938
    %1445 = vmatprep.subr.bf16.mxu0 %v937
    %1446 = vmatpush1.bf16.msra.mxu0 %v936
    %1447 = vmatprep.subr.bf16.mxu0 %v935
    %1448 = vmatpush1.bf16.msra.mxu0 %v934
    %1449 = vmatprep.subr.bf16.mxu0 %v933
    %1450 = vmatpush1.bf16.msra.mxu0 %v932
    %1451 = vmatprep.subr.bf16.mxu0 %v931
    %1452 = vmatpush1.bf16.msra.mxu0 %v930
    %1453 = vmatprep.subr.bf16.mxu0 %v929
    %1454 = vmatpush1.bf16.msra.mxu0 %v928
    %1455 = vmatprep.subr.bf16.mxu0 0
    %1456 = vmatpush2.bf16.msra.mxu0 0
    %1457 = vmatprep.subr.bf16.mxu0 0
    %1458 = vmatpush2.bf16.msra.mxu0 0
    %1459 = vmatprep.subr.bf16.mxu0 0
    %1460 = vmatpush2.bf16.msra.mxu0 0
    %1461 = vmatprep.subr.bf16.mxu0 0
    %1462 = vmatpush2.bf16.msra.mxu0 0
    %1463 = vmatprep.subr.bf16.mxu0 0
    %1464 = vmatpush2.bf16.msra.mxu0 0
    %1465 = vmatprep.subr.bf16.mxu0 0
    %1466 = vmatpush2.bf16.msra.mxu0 0
    %1467 = vmatprep.subr.bf16.mxu0 0
    %1468 = vmatpush2.bf16.msra.mxu0 0
    %1469 = vmatprep.subr.bf16.mxu0 0
    %1470 = vmatpush2.bf16.msra.mxu0 0
    %1471 = vmatprep.mubr.bf16.mxu0 0
    %1472 = vmatmul.mubr.bf16.gmra.mxu0 %v1396
    %v1473 = vpop.f32.mrf.mxu0
    %v1474 = vadd.f32 %v1433, %v1473
    %v1475 = vpop.f32.mrf.mxu0
    %v1476 = vadd.f32 %v1435, %v1475
    %v1477 = vpop.f32.mrf.mxu0
    %v1478 = vpop.f32.mrf.mxu0
    %1479 = vdwg.mxu0
    %v1480 = vadd.f32 %v1474, %v610
    %v1481 = vadd.f32 %v1476, %v614
    %v1482 = vxor.u32 %v1480, 2147483648
    %v1483 = vmul.f32 %v1482, 1.442695
    %v1484 = vpow.pop %v1483
    %v1485 = vadd.f32 %v1484, 1.0
    %v1486 = vrcp.pop %v1485
    %v1487 = vmul.f32 1.0, %v1486
    %v1488 = vtanh.pop %v1481
    %v1489 = vsub.f32 %v1395, %v1488
    %v1490 = vmul.f32 %v1487, %v1489
    %v1491 = vadd.f32 %v1488, %v1490
    %1492 = vst [vmem:[%s755] sm:$0xff] %v1491
    %v1493 = vpack.c.bf16 %v1491, %v1491
    %s1494 = scalar_lea.vmem [#allocation3], 12
    %1495 = vst [vmem:[%s1494] sm:$0xf] %v1493
    %v1496 = vld [vmem:[#allocation4] sm:$0xff]
    %s1497 = scalar_lea.vmem [#allocation2], 64
    %v1498 = vld [vmem:[%s1497] sm:$0xff]
    %v1499 = vld [vmem:[%s1497 + $0x8] sm:$0xff]
    %v1500 = vpack.c.bf16 %v1496, %v1496
    %1501 = vmatprep.subr.bf16.mxu0 %v684
    %1502 = vmatpush1.bf16.msra.mxu0 %v683
    %1503 = vmatprep.subr.bf16.mxu0 %v682
    %1504 = vmatpush1.bf16.msra.mxu0 %v681
    %1505 = vmatprep.subr.bf16.mxu0 %v680
    %1506 = vmatpush1.bf16.msra.mxu0 %v679
    %1507 = vmatprep.subr.bf16.mxu0 %v678
    %1508 = vmatpush1.bf16.msra.mxu0 %v677
    %1509 = vmatprep.subr.bf16.mxu0 %v676
    %1510 = vmatpush1.bf16.msra.mxu0 %v675
    %1511 = vmatprep.subr.bf16.mxu0 %v674
    %1512 = vmatpush1.bf16.msra.mxu0 %v673
    %1513 = vmatprep.subr.bf16.mxu0 %v672
    %1514 = vmatpush1.bf16.msra.mxu0 %v671
    %1515 = vmatprep.subr.bf16.mxu0 %v670
    %1516 = vmatpush1.bf16.msra.mxu0 %v669
    %1517 = vmatprep.subr.bf16.mxu0 0
    %1518 = vmatpush2.bf16.msra.mxu0 0
    %1519 = vmatprep.subr.bf16.mxu0 0
    %1520 = vmatpush2.bf16.msra.mxu0 0
    %1521 = vmatprep.subr.bf16.mxu0 0
    %1522 = vmatpush2.bf16.msra.mxu0 0
    %1523 = vmatprep.subr.bf16.mxu0 0
    %1524 = vmatpush2.bf16.msra.mxu0 0
    %1525 = vmatprep.subr.bf16.mxu0 0
    %1526 = vmatpush2.bf16.msra.mxu0 0
    %1527 = vmatprep.subr.bf16.mxu0 0
    %1528 = vmatpush2.bf16.msra.mxu0 0
    %1529 = vmatprep.subr.bf16.mxu0 0
    %1530 = vmatpush2.bf16.msra.mxu0 0
    %1531 = vmatprep.subr.bf16.mxu0 0
    %1532 = vmatpush2.bf16.msra.mxu0 0
    %1533 = vmatprep.mubr.bf16.mxu0 0
    %1534 = vmatmul.mubr.bf16.gmra.mxu0 %v1500
    %v1535 = vpop.f32.mrf.mxu0
    %v1536 = vadd.f32 0.0, %v1535
    %v1537 = vpop.f32.mrf.mxu0
    %v1538 = vadd.f32 0.0, %v1537
    %v1539 = vpop.f32.mrf.mxu0
    %v1540 = vpop.f32.mrf.mxu0
    %1541 = vdwg.mxu0
    %v1542 = vadd.f32 %v1498, %v1536
    %v1543 = vadd.f32 %v1499, %v1538
    %v1544 = vxor.u32 %v1542, 2147483648
    %v1545 = vmul.f32 %v1544, 1.442695
    %v1546 = vpow.pop %v1545
    %v1547 = vadd.f32 %v1546, 1.0
    %v1548 = vrcp.pop %v1547
    %v1549 = vmul.f32 1.0, %v1548
    %v1550 = vtanh.pop %v1543
    %v1551 = vsub.f32 %v1496, %v1550
    %v1552 = vmul.f32 %v1549, %v1551
    %v1553 = vadd.f32 %v1550, %v1552
    %1554 = vst [vmem:[#allocation4] sm:$0xff] %v1553
    %v1555 = vld [vmem:[%s755] sm:$0xff]
    %v1556 = vpack.c.bf16 %v1553, %v1553
    %v1557 = vpack.c.bf16 %v1555, %v1555
    %1558 = vmatprep.subr.bf16.mxu0 %v822
    %1559 = vmatpush1.bf16.msra.mxu0 %v821
    %1560 = vmatprep.subr.bf16.mxu0 %v820
    %1561 = vmatpush1.bf16.msra.mxu0 %v819
    %1562 = vmatprep.subr.bf16.mxu0 %v818
    %1563 = vmatpush1.bf16.msra.mxu0 %v817
    %1564 = vmatprep.subr.bf16.mxu0 %v816
    %1565 = vmatpush1.bf16.msra.mxu0 %v815
    %1566 = vmatprep.subr.bf16.mxu0 %v814
    %1567 = vmatpush1.bf16.msra.mxu0 %v813
    %1568 = vmatprep.subr.bf16.mxu0 %v812
    %1569 = vmatpush1.bf16.msra.mxu0 %v811
    %1570 = vmatprep.subr.bf16.mxu0 %v810
    %1571 = vmatpush1.bf16.msra.mxu0 %v809
    %1572 = vmatprep.subr.bf16.mxu0 %v808
    %1573 = vmatpush1.bf16.msra.mxu0 %v807
    %1574 = vmatprep.subr.bf16.mxu0 0
    %1575 = vmatpush2.bf16.msra.mxu0 0
    %1576 = vmatprep.subr.bf16.mxu0 0
    %1577 = vmatpush2.bf16.msra.mxu0 0
    %1578 = vmatprep.subr.bf16.mxu0 0
    %1579 = vmatpush2.bf16.msra.mxu0 0
    %1580 = vmatprep.subr.bf16.mxu0 0
    %1581 = vmatpush2.bf16.msra.mxu0 0
    %1582 = vmatprep.subr.bf16.mxu0 0
    %1583 = vmatpush2.bf16.msra.mxu0 0
    %1584 = vmatprep.subr.bf16.mxu0 0
    %1585 = vmatpush2.bf16.msra.mxu0 0
    %1586 = vmatprep.subr.bf16.mxu0 0
    %1587 = vmatpush2.bf16.msra.mxu0 0
    %1588 = vmatprep.subr.bf16.mxu0 0
    %1589 = vmatpush2.bf16.msra.mxu0 0
    %1590 = vmatprep.mubr.bf16.mxu0 0
    %1591 = vmatmul.mubr.bf16.gmra.mxu0 %v1557
    %v1592 = vpop.f32.mrf.mxu0
    %v1593 = vadd.f32 0.0, %v1592
    %v1594 = vpop.f32.mrf.mxu0
    %v1595 = vadd.f32 0.0, %v1594
    %v1596 = vpop.f32.mrf.mxu0
    %v1597 = vpop.f32.mrf.mxu0
    %1598 = vdwg.mxu0
    %1599 = vmatprep.subr.bf16.mxu0 %v943
    %1600 = vmatpush1.bf16.msra.mxu0 %v942
    %1601 = vmatprep.subr.bf16.mxu0 %v941
    %1602 = vmatpush1.bf16.msra.mxu0 %v940
    %1603 = vmatprep.subr.bf16.mxu0 %v939
    %1604 = vmatpush1.bf16.msra.mxu0 %v938
    %1605 = vmatprep.subr.bf16.mxu0 %v937
    %1606 = vmatpush1.bf16.msra.mxu0 %v936
    %1607 = vmatprep.subr.bf16.mxu0 %v935
    %1608 = vmatpush1.bf16.msra.mxu0 %v934
    %1609 = vmatprep.subr.bf16.mxu0 %v933
    %1610 = vmatpush1.bf16.msra.mxu0 %v932
    %1611 = vmatprep.subr.bf16.mxu0 %v931
    %1612 = vmatpush1.bf16.msra.mxu0 %v930
    %1613 = vmatprep.subr.bf16.mxu0 %v929
    %1614 = vmatpush1.bf16.msra.mxu0 %v928
    %1615 = vmatprep.subr.bf16.mxu0 0
    %1616 = vmatpush2.bf16.msra.mxu0 0
    %1617 = vmatprep.subr.bf16.mxu0 0
    %1618 = vmatpush2.bf16.msra.mxu0 0
    %1619 = vmatprep.subr.bf16.mxu0 0
    %1620 = vmatpush2.bf16.msra.mxu0 0
    %1621 = vmatprep.subr.bf16.mxu0 0
    %1622 = vmatpush2.bf16.msra.mxu0 0
    %1623 = vmatprep.subr.bf16.mxu0 0
    %1624 = vmatpush2.bf16.msra.mxu0 0
    %1625 = vmatprep.subr.bf16.mxu0 0
    %1626 = vmatpush2.bf16.msra.mxu0 0
    %1627 = vmatprep.subr.bf16.mxu0 0
    %1628 = vmatpush2.bf16.msra.mxu0 0
    %1629 = vmatprep.subr.bf16.mxu0 0
    %1630 = vmatpush2.bf16.msra.mxu0 0
    %1631 = vmatprep.mubr.bf16.mxu0 0
    %1632 = vmatmul.mubr.bf16.gmra.mxu0 %v1556
    %v1633 = vpop.f32.mrf.mxu0
    %v1634 = vadd.f32 %v1593, %v1633
    %v1635 = vpop.f32.mrf.mxu0
    %v1636 = vadd.f32 %v1595, %v1635
    %v1637 = vpop.f32.mrf.mxu0
    %v1638 = vpop.f32.mrf.mxu0
    %1639 = vdwg.mxu0
    %v1640 = vadd.f32 %v1634, %v610
    %v1641 = vadd.f32 %v1636, %v614
    %v1642 = vxor.u32 %v1640, 2147483648
    %v1643 = vmul.f32 %v1642, 1.442695
    %v1644 = vpow.pop %v1643
    %v1645 = vadd.f32 %v1644, 1.0
    %v1646 = vrcp.pop %v1645
    %v1647 = vmul.f32 1.0, %v1646
    %v1648 = vtanh.pop %v1641
    %v1649 = vsub.f32 %v1555, %v1648
    %v1650 = vmul.f32 %v1647, %v1649
    %v1651 = vadd.f32 %v1648, %v1650
    %1652 = vst [vmem:[%s755] sm:$0xff] %v1651
    %v1653 = vpack.c.bf16 %v1651, %v1651
    %s1654 = scalar_lea.vmem [#allocation3], 16
    %1655 = vst [vmem:[%s1654] sm:$0xf] %v1653
    %v1656 = vld [vmem:[#allocation4] sm:$0xff]
    %s1657 = scalar_lea.vmem [#allocation2], 80
    %v1658 = vld [vmem:[%s1657] sm:$0xff]
    %v1659 = vld [vmem:[%s1657 + $0x8] sm:$0xff]
    %v1660 = vpack.c.bf16 %v1656, %v1656
    %1661 = vmatprep.subr.bf16.mxu0 %v684
    %1662 = vmatpush1.bf16.msra.mxu0 %v683
    %1663 = vmatprep.subr.bf16.mxu0 %v682
    %1664 = vmatpush1.bf16.msra.mxu0 %v681
    %1665 = vmatprep.subr.bf16.mxu0 %v680
    %1666 = vmatpush1.bf16.msra.mxu0 %v679
    %1667 = vmatprep.subr.bf16.mxu0 %v678
    %1668 = vmatpush1.bf16.msra.mxu0 %v677
    %1669 = vmatprep.subr.bf16.mxu0 %v676
    %1670 = vmatpush1.bf16.msra.mxu0 %v675
    %1671 = vmatprep.subr.bf16.mxu0 %v674
    %1672 = vmatpush1.bf16.msra.mxu0 %v673
    %1673 = vmatprep.subr.bf16.mxu0 %v672
    %1674 = vmatpush1.bf16.msra.mxu0 %v671
    %1675 = vmatprep.subr.bf16.mxu0 %v670
    %1676 = vmatpush1.bf16.msra.mxu0 %v669
    %1677 = vmatprep.subr.bf16.mxu0 0
    %1678 = vmatpush2.bf16.msra.mxu0 0
    %1679 = vmatprep.subr.bf16.mxu0 0
    %1680 = vmatpush2.bf16.msra.mxu0 0
    %1681 = vmatprep.subr.bf16.mxu0 0
    %1682 = vmatpush2.bf16.msra.mxu0 0
    %1683 = vmatprep.subr.bf16.mxu0 0
    %1684 = vmatpush2.bf16.msra.mxu0 0
    %1685 = vmatprep.subr.bf16.mxu0 0
    %1686 = vmatpush2.bf16.msra.mxu0 0
    %1687 = vmatprep.subr.bf16.mxu0 0
    %1688 = vmatpush2.bf16.msra.mxu0 0
    %1689 = vmatprep.subr.bf16.mxu0 0
    %1690 = vmatpush2.bf16.msra.mxu0 0
    %1691 = vmatprep.subr.bf16.mxu0 0
    %1692 = vmatpush2.bf16.msra.mxu0 0
    %1693 = vmatprep.mubr.bf16.mxu0 0
    %1694 = vmatmul.mubr.bf16.gmra.mxu0 %v1660
    %v1695 = vpop.f32.mrf.mxu0
    %v1696 = vadd.f32 0.0, %v1695
    %v1697 = vpop.f32.mrf.mxu0
    %v1698 = vadd.f32 0.0, %v1697
    %v1699 = vpop.f32.mrf.mxu0
    %v1700 = vpop.f32.mrf.mxu0
    %1701 = vdwg.mxu0
    %v1702 = vadd.f32 %v1658, %v1696
    %v1703 = vadd.f32 %v1659, %v1698
    %v1704 = vxor.u32 %v1702, 2147483648
    %v1705 = vmul.f32 %v1704, 1.442695
    %v1706 = vpow.pop %v1705
    %v1707 = vadd.f32 %v1706, 1.0
    %v1708 = vrcp.pop %v1707
    %v1709 = vmul.f32 1.0, %v1708
    %v1710 = vtanh.pop %v1703
    %v1711 = vsub.f32 %v1656, %v1710
    %v1712 = vmul.f32 %v1709, %v1711
    %v1713 = vadd.f32 %v1710, %v1712
    %1714 = vst [vmem:[#allocation4] sm:$0xff] %v1713
    %v1715 = vld [vmem:[%s755] sm:$0xff]
    %v1716 = vpack.c.bf16 %v1713, %v1713
    %v1717 = vpack.c.bf16 %v1715, %v1715
    %1718 = vmatprep.subr.bf16.mxu0 %v822
    %1719 = vmatpush1.bf16.msra.mxu0 %v821
    %1720 = vmatprep.subr.bf16.mxu0 %v820
    %1721 = vmatpush1.bf16.msra.mxu0 %v819
    %1722 = vmatprep.subr.bf16.mxu0 %v818
    %1723 = vmatpush1.bf16.msra.mxu0 %v817
    %1724 = vmatprep.subr.bf16.mxu0 %v816
    %1725 = vmatpush1.bf16.msra.mxu0 %v815
    %1726 = vmatprep.subr.bf16.mxu0 %v814
    %1727 = vmatpush1.bf16.msra.mxu0 %v813
    %1728 = vmatprep.subr.bf16.mxu0 %v812
    %1729 = vmatpush1.bf16.msra.mxu0 %v811
    %1730 = vmatprep.subr.bf16.mxu0 %v810
    %1731 = vmatpush1.bf16.msra.mxu0 %v809
    %1732 = vmatprep.subr.bf16.mxu0 %v808
    %1733 = vmatpush1.bf16.msra.mxu0 %v807
    %1734 = vmatprep.subr.bf16.mxu0 0
    %1735 = vmatpush2.bf16.msra.mxu0 0
    %1736 = vmatprep.subr.bf16.mxu0 0
    %1737 = vmatpush2.bf16.msra.mxu0 0
    %1738 = vmatprep.subr.bf16.mxu0 0
    %1739 = vmatpush2.bf16.msra.mxu0 0
    %1740 = vmatprep.subr.bf16.mxu0 0
    %1741 = vmatpush2.bf16.msra.mxu0 0
    %1742 = vmatprep.subr.bf16.mxu0 0
    %1743 = vmatpush2.bf16.msra.mxu0 0
    %1744 = vmatprep.subr.bf16.mxu0 0
    %1745 = vmatpush2.bf16.msra.mxu0 0
    %1746 = vmatprep.subr.bf16.mxu0 0
    %1747 = vmatpush2.bf16.msra.mxu0 0
    %1748 = vmatprep.subr.bf16.mxu0 0
    %1749 = vmatpush2.bf16.msra.mxu0 0
    %1750 = vmatprep.mubr.bf16.mxu0 0
    %1751 = vmatmul.mubr.bf16.gmra.mxu0 %v1717
    %v1752 = vpop.f32.mrf.mxu0
    %v1753 = vadd.f32 0.0, %v1752
    %v1754 = vpop.f32.mrf.mxu0
    %v1755 = vadd.f32 0.0, %v1754
    %v1756 = vpop.f32.mrf.mxu0
    %v1757 = vpop.f32.mrf.mxu0
    %1758 = vdwg.mxu0
    %1759 = vmatprep.subr.bf16.mxu0 %v943
    %1760 = vmatpush1.bf16.msra.mxu0 %v942
    %1761 = vmatprep.subr.bf16.mxu0 %v941
    %1762 = vmatpush1.bf16.msra.mxu0 %v940
    %1763 = vmatprep.subr.bf16.mxu0 %v939
    %1764 = vmatpush1.bf16.msra.mxu0 %v938
    %1765 = vmatprep.subr.bf16.mxu0 %v937
    %1766 = vmatpush1.bf16.msra.mxu0 %v936
    %1767 = vmatprep.subr.bf16.mxu0 %v935
    %1768 = vmatpush1.bf16.msra.mxu0 %v934
    %1769 = vmatprep.subr.bf16.mxu0 %v933
    %1770 = vmatpush1.bf16.msra.mxu0 %v932
    %1771 = vmatprep.subr.bf16.mxu0 %v931
    %1772 = vmatpush1.bf16.msra.mxu0 %v930
    %1773 = vmatprep.subr.bf16.mxu0 %v929
    %1774 = vmatpush1.bf16.msra.mxu0 %v928
    %1775 = vmatprep.subr.bf16.mxu0 0
    %1776 = vmatpush2.bf16.msra.mxu0 0
    %1777 = vmatprep.subr.bf16.mxu0 0
    %1778 = vmatpush2.bf16.msra.mxu0 0
    %1779 = vmatprep.subr.bf16.mxu0 0
    %1780 = vmatpush2.bf16.msra.mxu0 0
    %1781 = vmatprep.subr.bf16.mxu0 0
    %1782 = vmatpush2.bf16.msra.mxu0 0
    %1783 = vmatprep.subr.bf16.mxu0 0
    %1784 = vmatpush2.bf16.msra.mxu0 0
    %1785 = vmatprep.subr.bf16.mxu0 0
    %1786 = vmatpush2.bf16.msra.mxu0 0
    %1787 = vmatprep.subr.bf16.mxu0 0
    %1788 = vmatpush2.bf16.msra.mxu0 0
    %1789 = vmatprep.subr.bf16.mxu0 0
    %1790 = vmatpush2.bf16.msra.mxu0 0
    %1791 = vmatprep.mubr.bf16.mxu0 0
    %1792 = vmatmul.mubr.bf16.gmra.mxu0 %v1716
    %v1793 = vpop.f32.mrf.mxu0
    %v1794 = vadd.f32 %v1753, %v1793
    %v1795 = vpop.f32.mrf.mxu0
    %v1796 = vadd.f32 %v1755, %v1795
    %v1797 = vpop.f32.mrf.mxu0
    %v1798 = vpop.f32.mrf.mxu0
    %1799 = vdwg.mxu0
    %v1800 = vadd.f32 %v1794, %v610
    %v1801 = vadd.f32 %v1796, %v614
    %v1802 = vxor.u32 %v1800, 2147483648
    %v1803 = vmul.f32 %v1802, 1.442695
    %v1804 = vpow.pop %v1803
    %v1805 = vadd.f32 %v1804, 1.0
    %v1806 = vrcp.pop %v1805
    %v1807 = vmul.f32 1.0, %v1806
    %v1808 = vtanh.pop %v1801
    %v1809 = vsub.f32 %v1715, %v1808
    %v1810 = vmul.f32 %v1807, %v1809
    %v1811 = vadd.f32 %v1808, %v1810
    %1812 = vst [vmem:[%s755] sm:$0xff] %v1811
    %v1813 = vpack.c.bf16 %v1811, %v1811
    %s1814 = scalar_lea.vmem [#allocation3], 20
    %1815 = vst [vmem:[%s1814] sm:$0xf] %v1813
    %v1816 = vld [vmem:[#allocation4] sm:$0xff]
    %s1817 = scalar_lea.vmem [#allocation2], 96
    %v1818 = vld [vmem:[%s1817] sm:$0xff]
    %v1819 = vld [vmem:[%s1817 + $0x8] sm:$0xff]
    %v1820 = vpack.c.bf16 %v1816, %v1816
    %1821 = vmatprep.subr.bf16.mxu0 %v684
    %1822 = vmatpush1.bf16.msra.mxu0 %v683
    %1823 = vmatprep.subr.bf16.mxu0 %v682
    %1824 = vmatpush1.bf16.msra.mxu0 %v681
    %1825 = vmatprep.subr.bf16.mxu0 %v680
    %1826 = vmatpush1.bf16.msra.mxu0 %v679
    %1827 = vmatprep.subr.bf16.mxu0 %v678
    %1828 = vmatpush1.bf16.msra.mxu0 %v677
    %1829 = vmatprep.subr.bf16.mxu0 %v676
    %1830 = vmatpush1.bf16.msra.mxu0 %v675
    %1831 = vmatprep.subr.bf16.mxu0 %v674
    %1832 = vmatpush1.bf16.msra.mxu0 %v673
    %1833 = vmatprep.subr.bf16.mxu0 %v672
    %1834 = vmatpush1.bf16.msra.mxu0 %v671
    %1835 = vmatprep.subr.bf16.mxu0 %v670
    %1836 = vmatpush1.bf16.msra.mxu0 %v669
    %1837 = vmatprep.subr.bf16.mxu0 0
    %1838 = vmatpush2.bf16.msra.mxu0 0
    %1839 = vmatprep.subr.bf16.mxu0 0
    %1840 = vmatpush2.bf16.msra.mxu0 0
    %1841 = vmatprep.subr.bf16.mxu0 0
    %1842 = vmatpush2.bf16.msra.mxu0 0
    %1843 = vmatprep.subr.bf16.mxu0 0
    %1844 = vmatpush2.bf16.msra.mxu0 0
    %1845 = vmatprep.subr.bf16.mxu0 0
    %1846 = vmatpush2.bf16.msra.mxu0 0
    %1847 = vmatprep.subr.bf16.mxu0 0
    %1848 = vmatpush2.bf16.msra.mxu0 0
    %1849 = vmatprep.subr.bf16.mxu0 0
    %1850 = vmatpush2.bf16.msra.mxu0 0
    %1851 = vmatprep.subr.bf16.mxu0 0
    %1852 = vmatpush2.bf16.msra.mxu0 0
    %1853 = vmatprep.mubr.bf16.mxu0 0
    %1854 = vmatmul.mubr.bf16.gmra.mxu0 %v1820
    %v1855 = vpop.f32.mrf.mxu0
    %v1856 = vadd.f32 0.0, %v1855
    %v1857 = vpop.f32.mrf.mxu0
    %v1858 = vadd.f32 0.0, %v1857
    %v1859 = vpop.f32.mrf.mxu0
    %v1860 = vpop.f32.mrf.mxu0
    %1861 = vdwg.mxu0
    %v1862 = vadd.f32 %v1818, %v1856
    %v1863 = vadd.f32 %v1819, %v1858
    %v1864 = vxor.u32 %v1862, 2147483648
    %v1865 = vmul.f32 %v1864, 1.442695
    %v1866 = vpow.pop %v1865
    %v1867 = vadd.f32 %v1866, 1.0
    %v1868 = vrcp.pop %v1867
    %v1869 = vmul.f32 1.0, %v1868
    %v1870 = vtanh.pop %v1863
    %v1871 = vsub.f32 %v1816, %v1870
    %v1872 = vmul.f32 %v1869, %v1871
    %v1873 = vadd.f32 %v1870, %v1872
    %1874 = vst [vmem:[#allocation4] sm:$0xff] %v1873
    %v1875 = vld [vmem:[%s755] sm:$0xff]
    %v1876 = vpack.c.bf16 %v1873, %v1873
    %v1877 = vpack.c.bf16 %v1875, %v1875
    %1878 = vmatprep.subr.bf16.mxu0 %v822
    %1879 = vmatpush1.bf16.msra.mxu0 %v821
    %1880 = vmatprep.subr.bf16.mxu0 %v820
    %1881 = vmatpush1.bf16.msra.mxu0 %v819
    %1882 = vmatprep.subr.bf16.mxu0 %v818
    %1883 = vmatpush1.bf16.msra.mxu0 %v817
    %1884 = vmatprep.subr.bf16.mxu0 %v816
    %1885 = vmatpush1.bf16.msra.mxu0 %v815
    %1886 = vmatprep.subr.bf16.mxu0 %v814
    %1887 = vmatpush1.bf16.msra.mxu0 %v813
    %1888 = vmatprep.subr.bf16.mxu0 %v812
    %1889 = vmatpush1.bf16.msra.mxu0 %v811
    %1890 = vmatprep.subr.bf16.mxu0 %v810
    %1891 = vmatpush1.bf16.msra.mxu0 %v809
    %1892 = vmatprep.subr.bf16.mxu0 %v808
    %1893 = vmatpush1.bf16.msra.mxu0 %v807
    %1894 = vmatprep.subr.bf16.mxu0 0
    %1895 = vmatpush2.bf16.msra.mxu0 0
    %1896 = vmatprep.subr.bf16.mxu0 0
    %1897 = vmatpush2.bf16.msra.mxu0 0
    %1898 = vmatprep.subr.bf16.mxu0 0
    %1899 = vmatpush2.bf16.msra.mxu0 0
    %1900 = vmatprep.subr.bf16.mxu0 0
    %1901 = vmatpush2.bf16.msra.mxu0 0
    %1902 = vmatprep.subr.bf16.mxu0 0
    %1903 = vmatpush2.bf16.msra.mxu0 0
    %1904 = vmatprep.subr.bf16.mxu0 0
    %1905 = vmatpush2.bf16.msra.mxu0 0
    %1906 = vmatprep.subr.bf16.mxu0 0
    %1907 = vmatpush2.bf16.msra.mxu0 0
    %1908 = vmatprep.subr.bf16.mxu0 0
    %1909 = vmatpush2.bf16.msra.mxu0 0
    %1910 = vmatprep.mubr.bf16.mxu0 0
    %1911 = vmatmul.mubr.bf16.gmra.mxu0 %v1877
    %v1912 = vpop.f32.mrf.mxu0
    %v1913 = vadd.f32 0.0, %v1912
    %v1914 = vpop.f32.mrf.mxu0
    %v1915 = vadd.f32 0.0, %v1914
    %v1916 = vpop.f32.mrf.mxu0
    %v1917 = vpop.f32.mrf.mxu0
    %1918 = vdwg.mxu0
    %1919 = vmatprep.subr.bf16.mxu0 %v943
    %1920 = vmatpush1.bf16.msra.mxu0 %v942
    %1921 = vmatprep.subr.bf16.mxu0 %v941
    %1922 = vmatpush1.bf16.msra.mxu0 %v940
    %1923 = vmatprep.subr.bf16.mxu0 %v939
    %1924 = vmatpush1.bf16.msra.mxu0 %v938
    %1925 = vmatprep.subr.bf16.mxu0 %v937
    %1926 = vmatpush1.bf16.msra.mxu0 %v936
    %1927 = vmatprep.subr.bf16.mxu0 %v935
    %1928 = vmatpush1.bf16.msra.mxu0 %v934
    %1929 = vmatprep.subr.bf16.mxu0 %v933
    %1930 = vmatpush1.bf16.msra.mxu0 %v932
    %1931 = vmatprep.subr.bf16.mxu0 %v931
    %1932 = vmatpush1.bf16.msra.mxu0 %v930
    %1933 = vmatprep.subr.bf16.mxu0 %v929
    %1934 = vmatpush1.bf16.msra.mxu0 %v928
    %1935 = vmatprep.subr.bf16.mxu0 0
    %1936 = vmatpush2.bf16.msra.mxu0 0
    %1937 = vmatprep.subr.bf16.mxu0 0
    %1938 = vmatpush2.bf16.msra.mxu0 0
    %1939 = vmatprep.subr.bf16.mxu0 0
    %1940 = vmatpush2.bf16.msra.mxu0 0
    %1941 = vmatprep.subr.bf16.mxu0 0
    %1942 = vmatpush2.bf16.msra.mxu0 0
    %1943 = vmatprep.subr.bf16.mxu0 0
    %1944 = vmatpush2.bf16.msra.mxu0 0
    %1945 = vmatprep.subr.bf16.mxu0 0
    %1946 = vmatpush2.bf16.msra.mxu0 0
    %1947 = vmatprep.subr.bf16.mxu0 0
    %1948 = vmatpush2.bf16.msra.mxu0 0
    %1949 = vmatprep.subr.bf16.mxu0 0
    %1950 = vmatpush2.bf16.msra.mxu0 0
    %1951 = vmatprep.mubr.bf16.mxu0 0
    %1952 = vmatmul.mubr.bf16.gmra.mxu0 %v1876
    %v1953 = vpop.f32.mrf.mxu0
    %v1954 = vadd.f32 %v1913, %v1953
    %v1955 = vpop.f32.mrf.mxu0
    %v1956 = vadd.f32 %v1915, %v1955
    %v1957 = vpop.f32.mrf.mxu0
    %v1958 = vpop.f32.mrf.mxu0
    %1959 = vdwg.mxu0
    %v1960 = vadd.f32 %v1954, %v610
    %v1961 = vadd.f32 %v1956, %v614
    %v1962 = vxor.u32 %v1960, 2147483648
    %v1963 = vmul.f32 %v1962, 1.442695
    %v1964 = vpow.pop %v1963
    %v1965 = vadd.f32 %v1964, 1.0
    %v1966 = vrcp.pop %v1965
    %v1967 = vmul.f32 1.0, %v1966
    %v1968 = vtanh.pop %v1961
    %v1969 = vsub.f32 %v1875, %v1968
    %v1970 = vmul.f32 %v1967, %v1969
    %v1971 = vadd.f32 %v1968, %v1970
    %1972 = vst [vmem:[%s755] sm:$0xff] %v1971
    %v1973 = vpack.c.bf16 %v1971, %v1971
    %s1974 = scalar_lea.vmem [#allocation3], 24
    %1975 = vst [vmem:[%s1974] sm:$0xf] %v1973
    %v1976 = vld [vmem:[#allocation4] sm:$0xff]
    %s1977 = scalar_lea.vmem [#allocation2], 112
    %v1978 = vld [vmem:[%s1977] sm:$0xff]
    %v1979 = vld [vmem:[%s1977 + $0x8] sm:$0xff]
    %v1980 = vpack.c.bf16 %v1976, %v1976
    %1981 = vmatprep.subr.bf16.mxu0 %v684
    %1982 = vmatpush1.bf16.msra.mxu0 %v683
    %1983 = vmatprep.subr.bf16.mxu0 %v682
    %1984 = vmatpush1.bf16.msra.mxu0 %v681
    %1985 = vmatprep.subr.bf16.mxu0 %v680
    %1986 = vmatpush1.bf16.msra.mxu0 %v679
    %1987 = vmatprep.subr.bf16.mxu0 %v678
    %1988 = vmatpush1.bf16.msra.mxu0 %v677
    %1989 = vmatprep.subr.bf16.mxu0 %v676
    %1990 = vmatpush1.bf16.msra.mxu0 %v675
    %1991 = vmatprep.subr.bf16.mxu0 %v674
    %1992 = vmatpush1.bf16.msra.mxu0 %v673
    %1993 = vmatprep.subr.bf16.mxu0 %v672
    %1994 = vmatpush1.bf16.msra.mxu0 %v671
    %1995 = vmatprep.subr.bf16.mxu0 %v670
    %1996 = vmatpush1.bf16.msra.mxu0 %v669
    %1997 = vmatprep.subr.bf16.mxu0 0
    %1998 = vmatpush2.bf16.msra.mxu0 0
    %1999 = vmatprep.subr.bf16.mxu0 0
    %2000 = vmatpush2.bf16.msra.mxu0 0
    %2001 = vmatprep.subr.bf16.mxu0 0
    %2002 = vmatpush2.bf16.msra.mxu0 0
    %2003 = vmatprep.subr.bf16.mxu0 0
    %2004 = vmatpush2.bf16.msra.mxu0 0
    %2005 = vmatprep.subr.bf16.mxu0 0
    %2006 = vmatpush2.bf16.msra.mxu0 0
    %2007 = vmatprep.subr.bf16.mxu0 0
    %2008 = vmatpush2.bf16.msra.mxu0 0
    %2009 = vmatprep.subr.bf16.mxu0 0
    %2010 = vmatpush2.bf16.msra.mxu0 0
    %2011 = vmatprep.subr.bf16.mxu0 0
    %2012 = vmatpush2.bf16.msra.mxu0 0
    %2013 = vmatprep.mubr.bf16.mxu0 0
    %2014 = vmatmul.mubr.bf16.gmra.mxu0 %v1980
    %v2015 = vpop.f32.mrf.mxu0
    %v2016 = vadd.f32 0.0, %v2015
    %v2017 = vpop.f32.mrf.mxu0
    %v2018 = vadd.f32 0.0, %v2017
    %v2019 = vpop.f32.mrf.mxu0
    %v2020 = vpop.f32.mrf.mxu0
    %2021 = vdwg.mxu0
    %v2022 = vadd.f32 %v1978, %v2016
    %v2023 = vadd.f32 %v1979, %v2018
    %v2024 = vxor.u32 %v2022, 2147483648
    %v2025 = vmul.f32 %v2024, 1.442695
    %v2026 = vpow.pop %v2025
    %v2027 = vadd.f32 %v2026, 1.0
    %v2028 = vrcp.pop %v2027
    %v2029 = vmul.f32 1.0, %v2028
    %v2030 = vtanh.pop %v2023
    %v2031 = vsub.f32 %v1976, %v2030
    %v2032 = vmul.f32 %v2029, %v2031
    %v2033 = vadd.f32 %v2030, %v2032
    %2034 = vst [vmem:[#allocation4] sm:$0xff] %v2033
    %v2035 = vld [vmem:[%s755] sm:$0xff]
    %v2036 = vpack.c.bf16 %v2033, %v2033
    %v2037 = vpack.c.bf16 %v2035, %v2035
    %2038 = vmatprep.subr.bf16.mxu0 %v822
    %2039 = vmatpush1.bf16.msra.mxu0 %v821
    %2040 = vmatprep.subr.bf16.mxu0 %v820
    %2041 = vmatpush1.bf16.msra.mxu0 %v819
    %2042 = vmatprep.subr.bf16.mxu0 %v818
    %2043 = vmatpush1.bf16.msra.mxu0 %v817
    %2044 = vmatprep.subr.bf16.mxu0 %v816
    %2045 = vmatpush1.bf16.msra.mxu0 %v815
    %2046 = vmatprep.subr.bf16.mxu0 %v814
    %2047 = vmatpush1.bf16.msra.mxu0 %v813
    %2048 = vmatprep.subr.bf16.mxu0 %v812
    %2049 = vmatpush1.bf16.msra.mxu0 %v811
    %2050 = vmatprep.subr.bf16.mxu0 %v810
    %2051 = vmatpush1.bf16.msra.mxu0 %v809
    %2052 = vmatprep.subr.bf16.mxu0 %v808
    %2053 = vmatpush1.bf16.msra.mxu0 %v807
    %2054 = vmatprep.subr.bf16.mxu0 0
    %2055 = vmatpush2.bf16.msra.mxu0 0
    %2056 = vmatprep.subr.bf16.mxu0 0
    %2057 = vmatpush2.bf16.msra.mxu0 0
    %2058 = vmatprep.subr.bf16.mxu0 0
    %2059 = vmatpush2.bf16.msra.mxu0 0
    %2060 = vmatprep.subr.bf16.mxu0 0
    %2061 = vmatpush2.bf16.msra.mxu0 0
    %2062 = vmatprep.subr.bf16.mxu0 0
    %2063 = vmatpush2.bf16.msra.mxu0 0
    %2064 = vmatprep.subr.bf16.mxu0 0
    %2065 = vmatpush2.bf16.msra.mxu0 0
    %2066 = vmatprep.subr.bf16.mxu0 0
    %2067 = vmatpush2.bf16.msra.mxu0 0
    %2068 = vmatprep.subr.bf16.mxu0 0
    %2069 = vmatpush2.bf16.msra.mxu0 0
    %2070 = vmatprep.mubr.bf16.mxu0 0
    %2071 = vmatmul.mubr.bf16.gmra.mxu0 %v2037
    %v2072 = vpop.f32.mrf.mxu0
    %v2073 = vadd.f32 0.0, %v2072
    %v2074 = vpop.f32.mrf.mxu0
    %v2075 = vadd.f32 0.0, %v2074
    %v2076 = vpop.f32.mrf.mxu0
    %v2077 = vpop.f32.mrf.mxu0
    %2078 = vdwg.mxu0
    %2079 = vmatprep.subr.bf16.mxu0 %v943
    %2080 = vmatpush1.bf16.msra.mxu0 %v942
    %2081 = vmatprep.subr.bf16.mxu0 %v941
    %2082 = vmatpush1.bf16.msra.mxu0 %v940
    %2083 = vmatprep.subr.bf16.mxu0 %v939
    %2084 = vmatpush1.bf16.msra.mxu0 %v938
    %2085 = vmatprep.subr.bf16.mxu0 %v937
    %2086 = vmatpush1.bf16.msra.mxu0 %v936
    %2087 = vmatprep.subr.bf16.mxu0 %v935
    %2088 = vmatpush1.bf16.msra.mxu0 %v934
    %2089 = vmatprep.subr.bf16.mxu0 %v933
    %2090 = vmatpush1.bf16.msra.mxu0 %v932
    %2091 = vmatprep.subr.bf16.mxu0 %v931
    %2092 = vmatpush1.bf16.msra.mxu0 %v930
    %2093 = vmatprep.subr.bf16.mxu0 %v929
    %2094 = vmatpush1.bf16.msra.mxu0 %v928
    %2095 = vmatprep.subr.bf16.mxu0 0
    %2096 = vmatpush2.bf16.msra.mxu0 0
    %2097 = vmatprep.subr.bf16.mxu0 0
    %2098 = vmatpush2.bf16.msra.mxu0 0
    %2099 = vmatprep.subr.bf16.mxu0 0
    %2100 = vmatpush2.bf16.msra.mxu0 0
    %2101 = vmatprep.subr.bf16.mxu0 0
    %2102 = vmatpush2.bf16.msra.mxu0 0
    %2103 = vmatprep.subr.bf16.mxu0 0
    %2104 = vmatpush2.bf16.msra.mxu0 0
    %2105 = vmatprep.subr.bf16.mxu0 0
    %2106 = vmatpush2.bf16.msra.mxu0 0
    %2107 = vmatprep.subr.bf16.mxu0 0
    %2108 = vmatpush2.bf16.msra.mxu0 0
    %2109 = vmatprep.subr.bf16.mxu0 0
    %2110 = vmatpush2.bf16.msra.mxu0 0
    %2111 = vmatprep.mubr.bf16.mxu0 0
    %2112 = vmatmul.mubr.bf16.gmra.mxu0 %v2036
    %v2113 = vpop.f32.mrf.mxu0
    %v2114 = vadd.f32 %v2073, %v2113
    %v2115 = vpop.f32.mrf.mxu0
    %v2116 = vadd.f32 %v2075, %v2115
    %v2117 = vpop.f32.mrf.mxu0
    %v2118 = vpop.f32.mrf.mxu0
    %2119 = vdwg.mxu0
    %v2120 = vadd.f32 %v2114, %v610
    %v2121 = vadd.f32 %v2116, %v614
    %v2122 = vxor.u32 %v2120, 2147483648
    %v2123 = vmul.f32 %v2122, 1.442695
    %v2124 = vpow.pop %v2123
    %v2125 = vadd.f32 %v2124, 1.0
    %v2126 = vrcp.pop %v2125
    %v2127 = vmul.f32 1.0, %v2126
    %v2128 = vtanh.pop %v2121
    %v2129 = vsub.f32 %v2035, %v2128
    %v2130 = vmul.f32 %v2127, %v2129
    %v2131 = vadd.f32 %v2128, %v2130
    %2132 = vst [vmem:[%s755] sm:$0xff] %v2131
    %v2133 = vpack.c.bf16 %v2131, %v2131
    %s2134 = scalar_lea.vmem [#allocation3], 28
    %2135 = vst [vmem:[%s2134] sm:$0xf] %v2133
    // Predicated region
    $region70: #{net_forward_seq.1} parent=1 // pred_check
      %p2136 = pneg %p122
    $region71: #{net_forward_seq.1} parent=1 // pred_check_branch
      %2138 = sbr.rel (%p2136) target = $region73
    $region72: #{net_forward_seq.1} parent=1 // pred_region
      %v2139 = vld [vmem:[#allocation4] sm:$0xff]
      %v2140 = vld [vmem:[#allocation4 + $0x8] sm:$0xff]
      %2141 = vst [vmem:[#allocation17] sm:$0xff] %v2139
      %2142 = vst [vmem:[#allocation17 + $0x8] sm:$0xff] %v2140
    $region73: #{net_forward_seq.1} parent=1 // pred_fallthru
      _
    %v2143 = vld [vmem:[#allocation3] sm:$0xf]
    %v2144 = vld [vmem:[#allocation3 + $0x4] sm:$0xf]
    %v2145 = vld [vmem:[#allocation3 + $0x8] sm:$0xf]
    %v2146 = vld [vmem:[#allocation3 + $0xc] sm:$0xf]
    %v2147 = vld [vmem:[#allocation3 + $0x10] sm:$0xf]
    %v2148 = vld [vmem:[#allocation3 + $0x14] sm:$0xf]
    %v2149 = vld [vmem:[#allocation3 + $0x18] sm:$0xf]
    %v2150 = vld [vmem:[#allocation3 + $0x1c] sm:$0xf]
    %v2151 = vld [vmem:[#allocation13] sm:$0xf]
    %v2152 = vld [vmem:[#allocation13 + $0x4] sm:$0xf]
    %v2153 = vld [vmem:[#allocation13 + $0x8] sm:$0xf]
    %v2154 = vld [vmem:[#allocation13 + $0xc] sm:$0xf]
    %v2155 = vld [vmem:[#allocation13 + $0x10] sm:$0xf]
    %v2156 = vld [vmem:[#allocation13 + $0x14] sm:$0xf]
    %v2157 = vld [vmem:[#allocation13 + $0x18] sm:$0xf]
    %v2158 = vld [vmem:[#allocation13 + $0x1c] sm:$0xf]
    %v2159 = vld [vmem:[#allocation13 + $0x20] sm:$0xf]
    %v2160 = vld [vmem:[#allocation13 + $0x24] sm:$0xf]
    %v2161 = vld [vmem:[#allocation13 + $0x28] sm:$0xf]
    %v2162 = vld [vmem:[#allocation13 + $0x2c] sm:$0xf]
    %v2163 = vld [vmem:[#allocation13 + $0x30] sm:$0xf]
    %v2164 = vld [vmem:[#allocation13 + $0x34] sm:$0xf]
    %v2165 = vld [vmem:[#allocation13 + $0x38] sm:$0xf]
    %v2166 = vld [vmem:[#allocation13 + $0x3c] sm:$0xf]
    %v2167 = vld [vmem:[%s7] sm:$0x1]
    %v2169 = vlaneseq
    %v2170 = vshrl.u32 %v2169, 7
    %v2171 = vsub.s32 0, %v2170
    %v2172 = vrot.slane %v2167, %v2171
    %v2182 = vunpack.c.l.b16 %v2143
    %v2183 = vunpack.c.l.b16 %v2144
    %v2184 = vunpack.c.l.b16 %v2145
    %v2185 = vunpack.c.l.b16 %v2146
    %v2186 = vunpack.c.l.b16 %v2147
    %v2187 = vunpack.c.l.b16 %v2148
    %v2188 = vunpack.c.l.b16 %v2149
    %v2189 = vunpack.c.l.b16 %v2150
    %v2190 = vpack.c.b16 %v2183, %v2182
    %v2191 = vpack.c.b16 %v2185, %v2184
    %v2192 = vpack.c.b16 %v2187, %v2186
    %v2193 = vpack.c.b16 %v2189, %v2188
    %v2214 = vunpack.c.l.b16 %v2151
    %v2215 = vunpack.c.l.b16 %v2152
    %v2216 = vunpack.c.l.b16 %v2153
    %v2217 = vunpack.c.l.b16 %v2154
    %v2218 = vunpack.c.l.b16 %v2155
    %v2219 = vunpack.c.l.b16 %v2156
    %v2220 = vunpack.c.l.b16 %v2157
    %v2221 = vunpack.c.l.b16 %v2158
    %v2222 = vunpack.c.l.b16 %v2159
    %v2223 = vunpack.c.l.b16 %v2160
    %v2224 = vunpack.c.l.b16 %v2161
    %v2225 = vunpack.c.l.b16 %v2162
    %v2226 = vunpack.c.l.b16 %v2163
    %v2227 = vunpack.c.l.b16 %v2164
    %v2228 = vunpack.c.l.b16 %v2165
    %v2229 = vunpack.c.l.b16 %v2166
    %v2230 = vpack.c.b16 %v2215, %v2214
    %v2231 = vpack.c.b16 %v2217, %v2216
    %v2232 = vpack.c.b16 %v2219, %v2218
    %v2233 = vpack.c.b16 %v2221, %v2220
    %v2234 = vpack.c.b16 %v2223, %v2222
    %v2235 = vpack.c.b16 %v2225, %v2224
    %v2236 = vpack.c.b16 %v2227, %v2226
    %v2237 = vpack.c.b16 %v2229, %v2228
    %2246 = vmatprep.subr.bf16.mxu0 0
    %2247 = vmatpush1.bf16.msra.mxu0 %v2237
    %2248 = vmatprep.subr.bf16.mxu0 0
    %2249 = vmatpush1.bf16.msra.mxu0 %v2236
    %2250 = vmatprep.subr.bf16.mxu0 0
    %2251 = vmatpush1.bf16.msra.mxu0 %v2235
    %2252 = vmatprep.subr.bf16.mxu0 0
    %2253 = vmatpush1.bf16.msra.mxu0 %v2234
    %2254 = vmatprep.subr.bf16.mxu0 0
    %2255 = vmatpush1.bf16.msra.mxu0 %v2233
    %2256 = vmatprep.subr.bf16.mxu0 0
    %2257 = vmatpush1.bf16.msra.mxu0 %v2232
    %2258 = vmatprep.subr.bf16.mxu0 0
    %2259 = vmatpush1.bf16.msra.mxu0 %v2231
    %2260 = vmatprep.subr.bf16.mxu0 0
    %2261 = vmatpush1.bf16.msra.mxu0 %v2230
    %2262 = vmatprep.subr.bf16.mxu0 0
    %2263 = vmatpush2.bf16.msra.mxu0 0
    %2264 = vmatprep.subr.bf16.mxu0 0
    %2265 = vmatpush2.bf16.msra.mxu0 0
    %2266 = vmatprep.subr.bf16.mxu0 0
    %2267 = vmatpush2.bf16.msra.mxu0 0
    %2268 = vmatprep.subr.bf16.mxu0 0
    %2269 = vmatpush2.bf16.msra.mxu0 0
    %2270 = vmatprep.subr.bf16.mxu0 0
    %2271 = vmatpush2.bf16.msra.mxu0 0
    %2272 = vmatprep.subr.bf16.mxu0 0
    %2273 = vmatpush2.bf16.msra.mxu0 0
    %2274 = vmatprep.subr.bf16.mxu0 0
    %2275 = vmatpush2.bf16.msra.mxu0 0
    %2276 = vmatprep.subr.bf16.mxu0 0
    %2277 = vmatpush2.bf16.msra.mxu0 0
    %2278 = vmatprep.mubr.bf16.mxu0 0
    %2279 = vmatmul.mubr.bf16.gmra.mxu0 %v2190
    %v2280 = vpop.f32.mrf.mxu0
    %v2281 = vadd.f32 %v2172, %v2280
    %v2282 = vpop.f32.mrf.mxu0
    %v2283 = vpop.f32.mrf.mxu0
    %v2284 = vadd.f32 %v2172, %v2283
    %v2285 = vpop.f32.mrf.mxu0
    %2286 = vmatprep.mubr.bf16.mxu0 0
    %2287 = vmatmul.mubr.bf16.gmra.mxu0 %v2191
    %v2288 = vpop.f32.mrf.mxu0
    %v2289 = vadd.f32 %v2172, %v2288
    %v2290 = vpop.f32.mrf.mxu0
    %v2291 = vpop.f32.mrf.mxu0
    %v2292 = vadd.f32 %v2172, %v2291
    %v2293 = vpop.f32.mrf.mxu0
    %2294 = vmatprep.mubr.bf16.mxu0 0
    %2295 = vmatmul.mubr.bf16.gmra.mxu0 %v2192
    %v2296 = vpop.f32.mrf.mxu0
    %v2297 = vadd.f32 %v2172, %v2296
    %v2298 = vpop.f32.mrf.mxu0
    %v2299 = vpop.f32.mrf.mxu0
    %v2300 = vadd.f32 %v2172, %v2299
    %v2301 = vpop.f32.mrf.mxu0
    %2302 = vmatprep.mubr.bf16.mxu0 0
    %2303 = vmatmul.mubr.bf16.gmra.mxu0 %v2193
    %v2304 = vpop.f32.mrf.mxu0
    %v2305 = vadd.f32 %v2172, %v2304
    %v2306 = vpop.f32.mrf.mxu0
    %v2307 = vpop.f32.mrf.mxu0
    %v2308 = vadd.f32 %v2172, %v2307
    %v2309 = vpop.f32.mrf.mxu0
    %2310 = vdwg.mxu0
    %v2311 = vtanh.pop %v2281
    %v2312 = vtanh.pop %v2284
    %v2313 = vtanh.pop %v2289
    %v2314 = vtanh.pop %v2292
    %v2315 = vtanh.pop %v2297
    %v2316 = vtanh.pop %v2300
    %v2317 = vtanh.pop %v2305
    %v2318 = vtanh.pop %v2308
    %v2319 = vpack.c.bf16 %v2312, %v2311
    %v2320 = vpack.c.bf16 %v2314, %v2313
    %v2321 = vpack.c.bf16 %v2316, %v2315
    %v2322 = vpack.c.bf16 %v2318, %v2317
    %v2323 = vld [vmem:[#allocation14] sm:$0xff]
    %v2324 = vld [vmem:[#allocation14 + $0x8] sm:$0xff]
    %v2325 = vld [vmem:[#allocation14 + $0x10] sm:$0xff]
    %v2326 = vld [vmem:[#allocation14 + $0x18] sm:$0xff]
    %v2327 = vld [vmem:[#allocation14 + $0x20] sm:$0xff]
    %v2328 = vld [vmem:[#allocation14 + $0x28] sm:$0xff]
    %v2329 = vld [vmem:[#allocation14 + $0x30] sm:$0xff]
    %v2330 = vld [vmem:[#allocation14 + $0x38] sm:$0xff]
    %v2331 = vld [vmem:[#allocation14 + $0x40] sm:$0xff]
    %v2332 = vld [vmem:[#allocation14 + $0x48] sm:$0xff]
    %v2333 = vld [vmem:[#allocation14 + $0x50] sm:$0xff]
    %v2334 = vld [vmem:[#allocation14 + $0x58] sm:$0xff]
    %v2335 = vld [vmem:[#allocation14 + $0x60] sm:$0xff]
    %v2336 = vld [vmem:[#allocation14 + $0x68] sm:$0xff]
    %v2337 = vld [vmem:[#allocation14 + $0x70] sm:$0xff]
    %v2338 = vld [vmem:[#allocation14 + $0x78] sm:$0xff]
    %v2339 = vld [vmem:[%s9] sm:$0x3]
    %v2341 = vlaneseq
    %v2342 = vshrl.u32 %v2341, 7
    %v2343 = vsub.s32 0, %v2342
    %v2344 = vrot.slane %v2339, %v2343
    %v2345 = vlaneseq
    %v2346 = vshrl.u32 %v2345, 7
    %v2347 = vsub.s32 1, %v2346
    %v2348 = vrot.slane %v2339, %v2347
    %v2367 = vunpack.c.l.b16 %v2323
    %v2368 = vunpack.c.h.b16 %v2323
    %v2369 = vunpack.c.l.b16 %v2324
    %v2370 = vunpack.c.h.b16 %v2324
    %v2371 = vunpack.c.l.b16 %v2325
    %v2372 = vunpack.c.h.b16 %v2325
    %v2373 = vunpack.c.l.b16 %v2326
    %v2374 = vunpack.c.h.b16 %v2326
    %v2375 = vunpack.c.l.b16 %v2327
    %v2376 = vunpack.c.h.b16 %v2327
    %v2377 = vunpack.c.l.b16 %v2328
    %v2378 = vunpack.c.h.b16 %v2328
    %v2379 = vunpack.c.l.b16 %v2329
    %v2380 = vunpack.c.h.b16 %v2329
    %v2381 = vunpack.c.l.b16 %v2330
    %v2382 = vunpack.c.h.b16 %v2330
    %v2383 = vunpack.c.l.b16 %v2331
    %v2384 = vunpack.c.h.b16 %v2331
    %v2385 = vunpack.c.l.b16 %v2332
    %v2386 = vunpack.c.h.b16 %v2332
    %v2387 = vunpack.c.l.b16 %v2333
    %v2388 = vunpack.c.h.b16 %v2333
    %v2389 = vunpack.c.l.b16 %v2334
    %v2390 = vunpack.c.h.b16 %v2334
    %v2391 = vunpack.c.l.b16 %v2335
    %v2392 = vunpack.c.h.b16 %v2335
    %v2393 = vunpack.c.l.b16 %v2336
    %v2394 = vunpack.c.h.b16 %v2336
    %v2395 = vunpack.c.l.b16 %v2337
    %v2396 = vunpack.c.h.b16 %v2337
    %v2397 = vunpack.c.l.b16 %v2338
    %v2398 = vunpack.c.h.b16 %v2338
    %v2399 = vpack.c.b16 %v2369, %v2367
    %v2400 = vpack.c.b16 %v2370, %v2368
    %v2401 = vpack.c.b16 %v2373, %v2371
    %v2402 = vpack.c.b16 %v2374, %v2372
    %v2403 = vpack.c.b16 %v2377, %v2375
    %v2404 = vpack.c.b16 %v2378, %v2376
    %v2405 = vpack.c.b16 %v2381, %v2379
    %v2406 = vpack.c.b16 %v2382, %v2380
    %v2407 = vpack.c.b16 %v2385, %v2383
    %v2408 = vpack.c.b16 %v2386, %v2384
    %v2409 = vpack.c.b16 %v2389, %v2387
    %v2410 = vpack.c.b16 %v2390, %v2388
    %v2411 = vpack.c.b16 %v2393, %v2391
    %v2412 = vpack.c.b16 %v2394, %v2392
    %v2413 = vpack.c.b16 %v2397, %v2395
    %v2414 = vpack.c.b16 %v2398, %v2396
    %2431 = vmatprep.subr.bf16.mxu0 %v2414
    %2432 = vmatpush1.bf16.msra.mxu0 %v2413
    %2433 = vmatprep.subr.bf16.mxu0 %v2412
    %2434 = vmatpush1.bf16.msra.mxu0 %v2411
    %2435 = vmatprep.subr.bf16.mxu0 %v2410
    %2436 = vmatpush1.bf16.msra.mxu0 %v2409
    %2437 = vmatprep.subr.bf16.mxu0 %v2408
    %2438 = vmatpush1.bf16.msra.mxu0 %v2407
    %2439 = vmatprep.subr.bf16.mxu0 %v2406
    %2440 = vmatpush1.bf16.msra.mxu0 %v2405
    %2441 = vmatprep.subr.bf16.mxu0 %v2404
    %2442 = vmatpush1.bf16.msra.mxu0 %v2403
    %2443 = vmatprep.subr.bf16.mxu0 %v2402
    %2444 = vmatpush1.bf16.msra.mxu0 %v2401
    %2445 = vmatprep.subr.bf16.mxu0 %v2400
    %2446 = vmatpush1.bf16.msra.mxu0 %v2399
    %2447 = vmatprep.subr.bf16.mxu0 0
    %2448 = vmatpush2.bf16.msra.mxu0 0
    %2449 = vmatprep.subr.bf16.mxu0 0
    %2450 = vmatpush2.bf16.msra.mxu0 0
    %2451 = vmatprep.subr.bf16.mxu0 0
    %2452 = vmatpush2.bf16.msra.mxu0 0
    %2453 = vmatprep.subr.bf16.mxu0 0
    %2454 = vmatpush2.bf16.msra.mxu0 0
    %2455 = vmatprep.subr.bf16.mxu0 0
    %2456 = vmatpush2.bf16.msra.mxu0 0
    %2457 = vmatprep.subr.bf16.mxu0 0
    %2458 = vmatpush2.bf16.msra.mxu0 0
    %2459 = vmatprep.subr.bf16.mxu0 0
    %2460 = vmatpush2.bf16.msra.mxu0 0
    %2461 = vmatprep.subr.bf16.mxu0 0
    %2462 = vmatpush2.bf16.msra.mxu0 0
    %2463 = vmatprep.mubr.bf16.mxu0 0
    %2464 = vmatmul.mubr.bf16.gmra.mxu0 %v2319
    %v2465 = vpop.f32.mrf.mxu0
    %v2466 = vadd.f32 %v2344, %v2465
    %v2467 = vpop.f32.mrf.mxu0
    %v2468 = vadd.f32 %v2348, %v2467
    %v2469 = vpop.f32.mrf.mxu0
    %v2470 = vadd.f32 %v2344, %v2469
    %v2471 = vpop.f32.mrf.mxu0
    %v2472 = vadd.f32 %v2348, %v2471
    %2473 = vmatprep.mubr.bf16.mxu0 0
    %2474 = vmatmul.mubr.bf16.gmra.mxu0 %v2320
    %v2475 = vpop.f32.mrf.mxu0
    %v2476 = vadd.f32 %v2344, %v2475
    %v2477 = vpop.f32.mrf.mxu0
    %v2478 = vadd.f32 %v2348, %v2477
    %v2479 = vpop.f32.mrf.mxu0
    %v2480 = vadd.f32 %v2344, %v2479
    %v2481 = vpop.f32.mrf.mxu0
    %v2482 = vadd.f32 %v2348, %v2481
    %2483 = vmatprep.mubr.bf16.mxu0 0
    %2484 = vmatmul.mubr.bf16.gmra.mxu0 %v2321
    %v2485 = vpop.f32.mrf.mxu0
    %v2486 = vadd.f32 %v2344, %v2485
    %v2487 = vpop.f32.mrf.mxu0
    %v2488 = vadd.f32 %v2348, %v2487
    %v2489 = vpop.f32.mrf.mxu0
    %v2490 = vadd.f32 %v2344, %v2489
    %v2491 = vpop.f32.mrf.mxu0
    %v2492 = vadd.f32 %v2348, %v2491
    %2493 = vmatprep.mubr.bf16.mxu0 0
    %2494 = vmatmul.mubr.bf16.gmra.mxu0 %v2322
    %v2495 = vpop.f32.mrf.mxu0
    %v2496 = vadd.f32 %v2344, %v2495
    %v2497 = vpop.f32.mrf.mxu0
    %v2498 = vadd.f32 %v2348, %v2497
    %v2499 = vpop.f32.mrf.mxu0
    %v2500 = vadd.f32 %v2344, %v2499
    %v2501 = vpop.f32.mrf.mxu0
    %v2502 = vadd.f32 %v2348, %v2501
    %2503 = vdwg.mxu0
    %2504 = vst [vmem:[#allocation16] sm:$0xff] %v2466
    %2505 = vst [vmem:[#allocation16 + $0x8] sm:$0xff] %v2468
    %2506 = vst [vmem:[#allocation16 + $0x10] sm:$0xff] %v2470
    %2507 = vst [vmem:[#allocation16 + $0x18] sm:$0xff] %v2472
    %2508 = vst [vmem:[#allocation16 + $0x20] sm:$0xff] %v2476
    %2509 = vst [vmem:[#allocation16 + $0x28] sm:$0xff] %v2478
    %2510 = vst [vmem:[#allocation16 + $0x30] sm:$0xff] %v2480
    %2511 = vst [vmem:[#allocation16 + $0x38] sm:$0xff] %v2482
    %2512 = vst [vmem:[#allocation16 + $0x40] sm:$0xff] %v2486
    %2513 = vst [vmem:[#allocation16 + $0x48] sm:$0xff] %v2488
    %2514 = vst [vmem:[#allocation16 + $0x50] sm:$0xff] %v2490
    %2515 = vst [vmem:[#allocation16 + $0x58] sm:$0xff] %v2492
    %2516 = vst [vmem:[#allocation16 + $0x60] sm:$0xff] %v2496
    %2517 = vst [vmem:[#allocation16 + $0x68] sm:$0xff] %v2498
    %2518 = vst [vmem:[#allocation16 + $0x70] sm:$0xff] %v2500
    %2519 = vst [vmem:[#allocation16 + $0x78] sm:$0xff] %v2502
    // Predicated region
    $region74: #{net_forward_seq.1} parent=1 // pred_check
      _
    $region75: #{net_forward_seq.1} parent=1 // pred_check_branch
      %2521 = sbr.rel (0) target = $region77
    $region76: #{net_forward_seq.1} parent=1 // pred_region
      %s2523 = ssub.s32 2048, 2048
      %2524 = vsyncadd [#allocation7], %s2523
      %s2525 = sshll.u32 [#allocation16], 4
      %s2526 = int_to_ptr.vmem [resolvable:$true] %s2525
      %2531 = dma.vmem_to_hbm [thread:$0]  %s2526, 2048, %s10, [#allocation7], 256, 256, 16
    $region77: #{net_forward_seq.1} parent=1 // pred_fallthru
      _
    // Predicated region
    $region78: #{net_forward_seq.1} parent=1 // pred_check
      _
    $region79: #{net_forward_seq.1} parent=1 // pred_check_branch
      %2533 = sbr.rel (0) target = $region81
    $region80: #{net_forward_seq.1} parent=1 // pred_region
      %s2535 = ssub.s32 256, 256
      %2536 = vsyncadd [#allocation18], %s2535
      %s2537 = sshll.u32 [#allocation17], 4
      %s2538 = int_to_ptr.vmem [resolvable:$true] %s2537
      %2543 = dma.vmem_to_hbm [thread:$0]  %s2538, 256, %s11, [#allocation18], 128, 128, 8
    $region81: #{net_forward_seq.1} parent=1 // pred_fallthru
      _
    // Predicated region
    $region82: #{net_forward_seq.1} parent=1 // pred_check
      _
    $region83: #{net_forward_seq.1} parent=1 // pred_check_branch
      %2545 = sbr.rel (0) target = $region85
    $region84: #{net_forward_seq.1} parent=1 // pred_region
      %2546 = dma.done [#allocation7], 2048
    $region85: #{net_forward_seq.1} parent=1 // pred_fallthru
      _
    // Predicated region
    $region86: #{net_forward_seq.1} parent=1 // pred_check
      _
    $region87: #{net_forward_seq.1} parent=1 // pred_check_branch
      %2548 = sbr.rel (0) target = $region89
    $region88: #{net_forward_seq.1} parent=1 // pred_region
      %2549 = dma.done [#allocation18], 256
    $region89: #{net_forward_seq.1} parent=1 // pred_fallthru
      _
    %2550 = vsyncpa [#allocation6], 1
    %2551 = vsyncpa [#allocation9], 1
    %2552 = vsyncpa [#allocation12], 1
    %2553 = vsyncpa [#allocation15], 1
    %2554 = vsyncpa [#allocation7], 1
    %2555 = vsyncpa [#allocation18], 1

</llo_original>
